<compile_context>
chip_gen: v7x
topology: tpu7x:2x2x1
jax: 0.10.0
libtpu: 0.0.40
codegen_flags: <defaults>
</compile_context>

<pallas_src>
import functools

import jax
import jax.numpy as jnp
from jax.experimental import pallas as pl
from jax.experimental.pallas import tpu as pltpu


def _round_up(x, m):
    return ((x + m - 1) // m) * m


# -----------------------------------------------------------------------------
# Kernel 1: implicit-GEMM convolution + fused (row-masked) BatchNorm statistics.
#   grid = (M tiles,)  ["parallel"]
# -----------------------------------------------------------------------------
def _conv_stats_kernel(x_ref, xh_ref, w_ref, mask_ref, y_ref, stats_ref,
                       xwin_ref, *, taps, tile_m, halo_p):
    # Stage the M tile and its small halo contiguously: tap (i,j) of the conv is
    # the same row stream shifted by d = i*Wp + j.
    xwin_ref[pl.ds(0, tile_m), :] = x_ref[...]
    xwin_ref[pl.ds(tile_m, halo_p), :] = xh_ref[...]

    # 9 MXU dots (bf16 operands, f32 accumulation) summed into one value; the
    # conv tile is written exactly once (no accumulator RMW per tap).
    acc = None
    for t, d in enumerate(taps):
        part = jnp.dot(xwin_ref[pl.ds(d, tile_m), :], w_ref[t],
                       preferred_element_type=jnp.float32)
        acc = part if acc is None else acc + part

    y_ref[...] = acc.astype(y_ref.dtype)

    # Row-masked per-channel partial sums for the batch statistics (padded /
    # out-of-frame rows contribute 0).  Padded Cout lanes are exactly 0 because
    # the padded weight columns are 0, so no column mask is needed.
    yv = acc * mask_ref[...]
    s1 = jnp.sum(yv, axis=0, keepdims=True)          # [1, Cout_p]
    s2 = jnp.sum(yv * yv, axis=0, keepdims=True)     # [1, Cout_p]
    rows = jax.lax.broadcasted_iota(jnp.int32, stats_ref.shape, 0)
    stats_ref[...] = jnp.where(rows == 0, s1, jnp.where(rows == 1, s2, 0.0))


# -----------------------------------------------------------------------------
# Kernel 2: tiled  y * scale + bias  (+ ReLU), pre-folded BN affine, lane-dense.
# -----------------------------------------------------------------------------
def _scale_bias_relu_kernel(y_ref, scale_ref, bias_ref, o_ref, *, relu):
    out = y_ref[...].astype(jnp.float32) * scale_ref[...] + bias_ref[...]
    if relu:
        out = jnp.maximum(out, 0.0)
    o_ref[...] = out


# -----------------------------------------------------------------------------
# Full BasicConv2d forward
# -----------------------------------------------------------------------------
def basic_conv2d_forward(x_nchw, weight, gamma, beta, *, stride=1, padding=1,
                         eps=1e-5, relu=True, tile_m=1024,
                         compute_dtype=jnp.bfloat16):
    """Conv2d(bias=False) -> BatchNorm2d(training batch stats) -> ReLU."""
    # TODO(synk): stride > 1, dilation and groups are not supported by the
    # implicit-GEMM row-shift formulation used here (stride=1 only).
    assert stride == 1, "only stride=1 is implemented"

    N, Cin, H, W = x_nchw.shape
    Cout, Cin_w, KH, KW = weight.shape
    assert Cin_w == Cin

    # ---- layout prep (cheap, O(input) HBM traffic) ---------------------------
    x_nhwc = jnp.transpose(x_nchw, (0, 2, 3, 1))
    x_pad = jnp.pad(x_nhwc,
                    ((0, 0), (padding, padding), (padding, padding), (0, 0)))
    Hp, Wp = H + 2 * padding, W + 2 * padding
    OH, OW = Hp - KH + 1, Wp - KW + 1

    # Flatten padded spatial dims: row r = n*Hp*Wp + h*Wp + w.  Tap (i, j) is the
    # same row stream shifted by d = i*Wp + j -> implicit GEMM.
    M_real = N * Hp * Wp
    taps = tuple(i * Wp + j for i in range(KH) for j in range(KW))
    halo = taps[-1]

    # Small halo block: multiple of 16 (bf16 sublane pack) that divides tile_m.
    halo_p = _round_up(max(halo, 16), 16)
    tile_m = _round_up(max(tile_m, halo_p), halo_p)     # auto-handles wide images
    halo_blk = tile_m // halo_p

    num_tiles = -(-M_real // tile_m)
    if num_tiles % 2:            # even tile count -> clean 2-TensorCore split on v7x
        num_tiles += 1
    M_pad = num_tiles * tile_m

    x2 = x_pad.reshape(M_real, Cin)
    # +halo_p extra zero rows so the last tile's halo block never reads OOB.
    x2 = jnp.pad(x2, ((0, M_pad + halo_p - M_real), (0, 0))).astype(compute_dtype)

    # Row-validity mask (1.0 iff the row corresponds to a real output pixel).
    # Fetched once per M tile (no K axis any more), so its cost is negligible.
    q = jnp.arange(Hp * Wp, dtype=jnp.int32)
    valid = ((q // Wp) < OH) & ((q % Wp) < OW)
    mask = jnp.tile(valid, (N,))
    mask = jnp.pad(mask, (0, M_pad - M_real)).astype(jnp.float32)[:, None]

    # Lane-dense output channels: pad Cout up to a multiple of 128.
    Cout_p = _round_up(Cout, 128)
    w_k = jnp.transpose(weight, (2, 3, 1, 0)).reshape(KH * KW, Cin, Cout)
    w_k = jnp.pad(w_k, ((0, 0), (0, 0), (0, Cout_p - Cout))).astype(compute_dtype)
    # TODO(synk): for Cin beyond ~1-2K a Cin-reduction grid axis should be
    # reintroduced; the whole weight slab is kept VMEM-resident here.

    # ---- VMEM budget (actual working set + headroom, capped below v7x's 64MiB) --
    bpe = jnp.dtype(compute_dtype).itemsize
    Cin_l = _round_up(Cin, 128)
    est = (2 * tile_m * Cin_l * bpe                      # x main (double-buffered)
           + 2 * halo_p * Cin_l * bpe                    # x halo
           + 2 * KH * KW * _round_up(Cin, 16) * Cout_p * bpe   # resident weights
           + 2 * tile_m * 128 * 4                        # mask (1 lane -> padded)
           + 2 * tile_m * Cout_p * bpe                   # conv tile out
           + 2 * 8 * Cout_p * 4                          # stats tile out
           + (tile_m + halo_p) * Cin_l * bpe)            # staging scratch
    vmem_limit = int(min(max(2 * est + (8 << 20), 32 << 20), 48 << 20))

    conv_out, stats = pl.pallas_call(
        functools.partial(_conv_stats_kernel, taps=taps, tile_m=tile_m,
                          halo_p=halo_p),
        out_shape=(jax.ShapeDtypeStruct((M_pad, Cout_p), compute_dtype),
                   jax.ShapeDtypeStruct((num_tiles * 8, Cout_p), jnp.float32)),
        grid_spec=pltpu.PrefetchScalarGridSpec(
            num_scalar_prefetch=0,
            grid=(num_tiles,),
            in_specs=[
                pl.BlockSpec((tile_m, Cin), lambda m: (m, 0)),              # main
                pl.BlockSpec((halo_p, Cin),
                             lambda m: ((m + 1) * halo_blk, 0)),            # halo
                pl.BlockSpec((KH * KW, Cin, Cout_p), lambda m: (0, 0, 0)),  # weights
                pl.BlockSpec((tile_m, 1), lambda m: (m, 0)),                # mask
            ],
            out_specs=[
                pl.BlockSpec((tile_m, Cout_p), lambda m: (m, 0)),           # conv
                pl.BlockSpec((8, Cout_p), lambda m: (m, 0)),                # stats
            ],
            scratch_shapes=[
                pltpu.VMEM((tile_m + halo_p, Cin), compute_dtype),          # window
            ],
        ),
        compiler_params=pltpu.CompilerParams(
            dimension_semantics=("parallel",),
            vmem_limit_bytes=vmem_limit),
    )(x2, x2, w_k, mask)

    # ---- per-channel BN fold (tiny, plain JAX) -------------------------------
    stats = stats.reshape(num_tiles, 8, Cout_p)
    count = float(N * OH * OW)
    s1 = jnp.sum(stats[:, 0, :], axis=0)
    s2 = jnp.sum(stats[:, 1, :], axis=0)
    mean = s1 / count
    var = jnp.maximum(s2 / count - mean * mean, 0.0)   # biased var (train-mode BN)
    gamma_p = jnp.pad(gamma.astype(jnp.float32), (0, Cout_p - Cout))
    beta_p = jnp.pad(beta.astype(jnp.float32), (0, Cout_p - Cout))
    scale = gamma_p * jax.lax.rsqrt(var + eps)
    bias = beta_p - mean * scale

    # ---- Kernel 2: tiled normalize + ReLU (real-row tiles only) --------------
    num_tiles2 = -(-M_real // tile_m)          # <= num_tiles (skip padding tail)
    M2 = num_tiles2 * tile_m

    y_norm = pl.pallas_call(
        functools.partial(_scale_bias_relu_kernel, relu=relu),
        out_shape=jax.ShapeDtypeStruct((M2, Cout_p), jnp.float32),
        grid_spec=pltpu.PrefetchScalarGridSpec(
            num_scalar_prefetch=0,
            grid=(num_tiles2,),
            in_specs=[
                pl.BlockSpec((tile_m, Cout_p), lambda m: (m, 0)),
                pl.BlockSpec((1, Cout_p), lambda m: (0, 0)),
                pl.BlockSpec((1, Cout_p), lambda m: (0, 0)),
            ],
            out_specs=pl.BlockSpec((tile_m, Cout_p), lambda m: (m, 0)),
        ),
        compiler_params=pltpu.CompilerParams(
            dimension_semantics=("parallel",),
            vmem_limit_bytes=32 * 1024 * 1024),
    )(conv_out, scale.reshape(1, Cout_p), bias.reshape(1, Cout_p))

    # ---- un-flatten, drop padding / garbage columns, back to NCHW ------------
    y = y_norm[:M_real].reshape(N, Hp, Wp, Cout_p)[:, :OH, :OW, :Cout]
    return jnp.transpose(y, (0, 3, 1, 2))


# -----------------------------------------------------------------------------
# Plain-JAX f32 reference (correctness check only)
# -----------------------------------------------------------------------------
def _reference(x, w, gamma, beta, eps=1e-5):
    conv = jax.lax.conv_general_dilated(
        x, w, window_strides=(1, 1), padding=((1, 1), (1, 1)),
        dimension_numbers=("NCHW", "OIHW", "NCHW"))
    mean = conv.mean(axis=(0, 2, 3), keepdims=True)
    var = conv.var(axis=(0, 2, 3), keepdims=True)
    out = (conv - mean) / jnp.sqrt(var + eps) * gamma.reshape(1, -1, 1, 1) \
        + beta.reshape(1, -1, 1, 1)
    return jnp.maximum(out, 0.0)


if __name__ == "__main__":
    # BasicConv2d(4, 8, kernel_size=3, padding=1) at small deterministic shapes.
    N, Cin, H, W = 2, 4, 16, 16
    Cout, KH, KW = 8, 3, 3

    key = jax.random.PRNGKey(0)
    kx, kw, kg, kb = jax.random.split(key, 4)

    x = jax.random.normal(kx, (N, Cin, H, W), dtype=jnp.float32)
    weight = jax.random.normal(kw, (Cout, Cin, KH, KW), dtype=jnp.float32) * 0.1
    gamma = 1.0 + 0.1 * jax.random.normal(kg, (Cout,), dtype=jnp.float32)
    beta = 0.1 * jax.random.normal(kb, (Cout,), dtype=jnp.float32)

    # M is tiny here, so use a smaller M tile than the 1024-row default.
    out = basic_conv2d_forward(x, weight, gamma, beta, tile_m=256)
    out = jax.block_until_ready(out)

    ref = _reference(x, weight, gamma, beta)
    assert out.shape == (N, Cout, H, W), out.shape
    max_err = float(jnp.max(jnp.abs(out - ref)))
    # bf16 MXU operands + bf16 conv intermediate -> looser-than-f32 tolerance.
    assert jnp.allclose(out, ref, rtol=5e-2, atol=5e-2), max_err

    print("KERNEL_OK")
</pallas_src>

<mosaic_0001>
module attributes {stable_mosaic.version = 11 : i64} {
  func.func @_conv_stats_kernel(%arg0: i32, %arg1: memref<288x4xbf16, #tpu.memory_space<vmem>>, %arg2: memref<48x4xbf16, #tpu.memory_space<vmem>>, %arg3: memref<9x4x128xbf16, #tpu.memory_space<vmem>>, %arg4: memref<288x1xf32, #tpu.memory_space<vmem>>, %arg5: memref<288x128xbf16, #tpu.memory_space<vmem>>, %arg6: memref<8x128xf32, #tpu.memory_space<vmem>>, %arg7: memref<336x4xbf16, #tpu.memory_space<vmem>>) attributes {dimension_semantics = [#tpu.dimension_semantics<parallel>], iteration_bounds = array<i64: 4>, scalar_prefetch = 0 : i64, scratch_operands = 1 : i64, tpu.core_type = #tpu.core_type<tc>, window_params = [{transform_indices = @transform_0, window_bounds = array<i64: 288, 4>}, {transform_indices = @transform_1, window_bounds = array<i64: 48, 4>}, {pipeline_mode = #tpu.pipeline_mode<synchronous>, transform_indices = @transform_2, window_bounds = array<i64: 9, 4, 128>}, {transform_indices = @transform_3, window_bounds = array<i64: 288, 1>}, {transform_indices = @transform_4, window_bounds = array<i64: 288, 128>}, {transform_indices = @transform_5, window_bounds = array<i64: 8, 128>}]} {
    %c0 = arith.constant 0 : index
    %c0_0 = arith.constant 0 : index
    %0 = vector.load %arg1[%c0, %c0_0] : memref<288x4xbf16, #tpu.memory_space<vmem>>, vector<288x4xbf16>
    %c0_1 = arith.constant 0 : index
    %c0_2 = arith.constant 0 : index
    %1 = vector.load %arg7[%c0_1, %c0_2] : memref<336x4xbf16, #tpu.memory_space<vmem>>, vector<288x4xbf16>
    tpu.vector_store %arg7[%c0_1, %c0_2], %0 {strides = array<i32>} : memref<336x4xbf16, #tpu.memory_space<vmem>>, vector<288x4xbf16>,
    %c0_3 = arith.constant 0 : index
    %c0_4 = arith.constant 0 : index
    %2 = vector.load %arg2[%c0_3, %c0_4] : memref<48x4xbf16, #tpu.memory_space<vmem>>, vector<48x4xbf16>
    %c288 = arith.constant 288 : index
    %c0_5 = arith.constant 0 : index
    %3 = vector.load %arg7[%c288, %c0_5] : memref<336x4xbf16, #tpu.memory_space<vmem>>, vector<48x4xbf16>
    tpu.vector_store %arg7[%c288, %c0_5], %2 {strides = array<i32>} : memref<336x4xbf16, #tpu.memory_space<vmem>>, vector<48x4xbf16>,
    %c0_6 = arith.constant 0 : index
    %c0_7 = arith.constant 0 : index
    %4 = vector.load %arg7[%c0_6, %c0_7] : memref<336x4xbf16, #tpu.memory_space<vmem>>, vector<288x4xbf16>
    %c0_8 = arith.constant 0 : index
    %c0_9 = arith.constant 0 : index
    %c0_10 = arith.constant 0 : index
    %5 = vector.load %arg3[%c0_8, %c0_9, %c0_10] : memref<9x4x128xbf16, #tpu.memory_space<vmem>>, vector<1x4x128xbf16>
    %6 = vector.shape_cast %5 : vector<1x4x128xbf16> to vector<4x128xbf16>
    %cst = arith.constant dense<0.000000e+00> : vector<288x128xf32>
    %7 = tpu.matmul %4, %6, %cst {dimension_numbers = #tpu.dot_dimension_numbers<[1], [0], [0], [1], [0, 0, 1, 1], [], []>} : vector<288x4xbf16>, vector<4x128xbf16>, vector<288x128xf32> -> vector<288x128xf32>
    %c1 = arith.constant 1 : index
    %c0_11 = arith.constant 0 : index
    %8 = vector.load %arg7[%c1, %c0_11] : memref<336x4xbf16, #tpu.memory_space<vmem>>, vector<288x4xbf16>
    %c1_12 = arith.constant 1 : index
    %c0_13 = arith.constant 0 : index
    %c0_14 = arith.constant 0 : index
    %9 = vector.load %arg3[%c1_12, %c0_13, %c0_14] : memref<9x4x128xbf16, #tpu.memory_space<vmem>>, vector<1x4x128xbf16>
    %10 = vector.shape_cast %9 : vector<1x4x128xbf16> to vector<4x128xbf16>
    %cst_15 = arith.constant dense<0.000000e+00> : vector<288x128xf32>
    %11 = tpu.matmul %8, %10, %cst_15 {dimension_numbers = #tpu.dot_dimension_numbers<[1], [0], [0], [1], [0, 0, 1, 1], [], []>} : vector<288x4xbf16>, vector<4x128xbf16>, vector<288x128xf32> -> vector<288x128xf32>
    %12 = arith.addf %7, %11 : vector<288x128xf32>
    %c2 = arith.constant 2 : index
    %c0_16 = arith.constant 0 : index
    %13 = vector.load %arg7[%c2, %c0_16] : memref<336x4xbf16, #tpu.memory_space<vmem>>, vector<288x4xbf16>
    %c2_17 = arith.constant 2 : index
    %c0_18 = arith.constant 0 : index
    %c0_19 = arith.constant 0 : index
    %14 = vector.load %arg3[%c2_17, %c0_18, %c0_19] : memref<9x4x128xbf16, #tpu.memory_space<vmem>>, vector<1x4x128xbf16>
    %15 = vector.shape_cast %14 : vector<1x4x128xbf16> to vector<4x128xbf16>
    %cst_20 = arith.constant dense<0.000000e+00> : vector<288x128xf32>
    %16 = tpu.matmul %13, %15, %cst_20 {dimension_numbers = #tpu.dot_dimension_numbers<[1], [0], [0], [1], [0, 0, 1, 1], [], []>} : vector<288x4xbf16>, vector<4x128xbf16>, vector<288x128xf32> -> vector<288x128xf32>
    %17 = arith.addf %12, %16 : vector<288x128xf32>
    %c18 = arith.constant 18 : index
    %c0_21 = arith.constant 0 : index
    %18 = vector.load %arg7[%c18, %c0_21] : memref<336x4xbf16, #tpu.memory_space<vmem>>, vector<288x4xbf16>
    %c3 = arith.constant 3 : index
    %c0_22 = arith.constant 0 : index
    %c0_23 = arith.constant 0 : index
    %19 = vector.load %arg3[%c3, %c0_22, %c0_23] : memref<9x4x128xbf16, #tpu.memory_space<vmem>>, vector<1x4x128xbf16>
    %20 = vector.shape_cast %19 : vector<1x4x128xbf16> to vector<4x128xbf16>
    %cst_24 = arith.constant dense<0.000000e+00> : vector<288x128xf32>
    %21 = tpu.matmul %18, %20, %cst_24 {dimension_numbers = #tpu.dot_dimension_numbers<[1], [0], [0], [1], [0, 0, 1, 1], [], []>} : vector<288x4xbf16>, vector<4x128xbf16>, vector<288x128xf32> -> vector<288x128xf32>
    %22 = arith.addf %17, %21 : vector<288x128xf32>
    %c19 = arith.constant 19 : index
    %c0_25 = arith.constant 0 : index
    %23 = vector.load %arg7[%c19, %c0_25] : memref<336x4xbf16, #tpu.memory_space<vmem>>, vector<288x4xbf16>
    %c4 = arith.constant 4 : index
    %c0_26 = arith.constant 0 : index
    %c0_27 = arith.constant 0 : index
    %24 = vector.load %arg3[%c4, %c0_26, %c0_27] : memref<9x4x128xbf16, #tpu.memory_space<vmem>>, vector<1x4x128xbf16>
    %25 = vector.shape_cast %24 : vector<1x4x128xbf16> to vector<4x128xbf16>
    %cst_28 = arith.constant dense<0.000000e+00> : vector<288x128xf32>
    %26 = tpu.matmul %23, %25, %cst_28 {dimension_numbers = #tpu.dot_dimension_numbers<[1], [0], [0], [1], [0, 0, 1, 1], [], []>} : vector<288x4xbf16>, vector<4x128xbf16>, vector<288x128xf32> -> vector<288x128xf32>
    %27 = arith.addf %22, %26 : vector<288x128xf32>
    %c20 = arith.constant 20 : index
    %c0_29 = arith.constant 0 : index
    %28 = vector.load %arg7[%c20, %c0_29] : memref<336x4xbf16, #tpu.memory_space<vmem>>, vector<288x4xbf16>
    %c5 = arith.constant 5 : index
    %c0_30 = arith.constant 0 : index
    %c0_31 = arith.constant 0 : index
    %29 = vector.load %arg3[%c5, %c0_30, %c0_31] : memref<9x4x128xbf16, #tpu.memory_space<vmem>>, vector<1x4x128xbf16>
    %30 = vector.shape_cast %29 : vector<1x4x128xbf16> to vector<4x128xbf16>
    %cst_32 = arith.constant dense<0.000000e+00> : vector<288x128xf32>
    %31 = tpu.matmul %28, %30, %cst_32 {dimension_numbers = #tpu.dot_dimension_numbers<[1], [0], [0], [1], [0, 0, 1, 1], [], []>} : vector<288x4xbf16>, vector<4x128xbf16>, vector<288x128xf32> -> vector<288x128xf32>
    %32 = arith.addf %27, %31 : vector<288x128xf32>
    %c36 = arith.constant 36 : index
    %c0_33 = arith.constant 0 : index
    %33 = vector.load %arg7[%c36, %c0_33] : memref<336x4xbf16, #tpu.memory_space<vmem>>, vector<288x4xbf16>
    %c6 = arith.constant 6 : index
    %c0_34 = arith.constant 0 : index
    %c0_35 = arith.constant 0 : index
    %34 = vector.load %arg3[%c6, %c0_34, %c0_35] : memref<9x4x128xbf16, #tpu.memory_space<vmem>>, vector<1x4x128xbf16>
    %35 = vector.shape_cast %34 : vector<1x4x128xbf16> to vector<4x128xbf16>
    %cst_36 = arith.constant dense<0.000000e+00> : vector<288x128xf32>
    %36 = tpu.matmul %33, %35, %cst_36 {dimension_numbers = #tpu.dot_dimension_numbers<[1], [0], [0], [1], [0, 0, 1, 1], [], []>} : vector<288x4xbf16>, vector<4x128xbf16>, vector<288x128xf32> -> vector<288x128xf32>
    %37 = arith.addf %32, %36 : vector<288x128xf32>
    %c37 = arith.constant 37 : index
    %c0_37 = arith.constant 0 : index
    %38 = vector.load %arg7[%c37, %c0_37] : memref<336x4xbf16, #tpu.memory_space<vmem>>, vector<288x4xbf16>
    %c7 = arith.constant 7 : index
    %c0_38 = arith.constant 0 : index
    %c0_39 = arith.constant 0 : index
    %39 = vector.load %arg3[%c7, %c0_38, %c0_39] : memref<9x4x128xbf16, #tpu.memory_space<vmem>>, vector<1x4x128xbf16>
    %40 = vector.shape_cast %39 : vector<1x4x128xbf16> to vector<4x128xbf16>
    %cst_40 = arith.constant dense<0.000000e+00> : vector<288x128xf32>
    %41 = tpu.matmul %38, %40, %cst_40 {dimension_numbers = #tpu.dot_dimension_numbers<[1], [0], [0], [1], [0, 0, 1, 1], [], []>} : vector<288x4xbf16>, vector<4x128xbf16>, vector<288x128xf32> -> vector<288x128xf32>
    %42 = arith.addf %37, %41 : vector<288x128xf32>
    %c38 = arith.constant 38 : index
    %c0_41 = arith.constant 0 : index
    %43 = vector.load %arg7[%c38, %c0_41] : memref<336x4xbf16, #tpu.memory_space<vmem>>, vector<288x4xbf16>
    %c8 = arith.constant 8 : index
    %c0_42 = arith.constant 0 : index
    %c0_43 = arith.constant 0 : index
    %44 = vector.load %arg3[%c8, %c0_42, %c0_43] : memref<9x4x128xbf16, #tpu.memory_space<vmem>>, vector<1x4x128xbf16>
    %45 = vector.shape_cast %44 : vector<1x4x128xbf16> to vector<4x128xbf16>
    %cst_44 = arith.constant dense<0.000000e+00> : vector<288x128xf32>
    %46 = tpu.matmul %43, %45, %cst_44 {dimension_numbers = #tpu.dot_dimension_numbers<[1], [0], [0], [1], [0, 0, 1, 1], [], []>} : vector<288x4xbf16>, vector<4x128xbf16>, vector<288x128xf32> -> vector<288x128xf32>
    %47 = arith.addf %42, %46 : vector<288x128xf32>
    %48 = arith.truncf %47 : vector<288x128xf32> to vector<288x128xbf16>
    %c0_45 = arith.constant 0 : index
    %c0_46 = arith.constant 0 : index
    %49 = vector.load %arg5[%c0_45, %c0_46] : memref<288x128xbf16, #tpu.memory_space<vmem>>, vector<288x128xbf16>
    tpu.vector_store %arg5[%c0_45, %c0_46], %48 {strides = array<i32>} : memref<288x128xbf16, #tpu.memory_space<vmem>>, vector<288x128xbf16>,
    %c0_47 = arith.constant 0 : index
    %c0_48 = arith.constant 0 : index
    %50 = vector.load %arg4[%c0_47, %c0_48] : memref<288x1xf32, #tpu.memory_space<vmem>>, vector<288x1xf32>
    %51 = vector.broadcast %50 : vector<288x1xf32> to vector<288x128xf32>
    %52 = arith.mulf %47, %51 : vector<288x128xf32>
    %cst_49 = arith.constant dense<0.000000e+00> : vector<128xf32>
    %53 = vector.multi_reduction <add>, %52, %cst_49 [0] : vector<288x128xf32> to vector<128xf32>
    %54 = vector.shape_cast %53 : vector<128xf32> to vector<1x128xf32>
    %55 = arith.mulf %52, %52 : vector<288x128xf32>
    %cst_50 = arith.constant dense<0.000000e+00> : vector<128xf32>
    %56 = vector.multi_reduction <add>, %55, %cst_50 [0] : vector<288x128xf32> to vector<128xf32>
    %57 = vector.shape_cast %56 : vector<128xf32> to vector<1x128xf32>
    %58 = tpu.iota {dimensions = array<i32: 0>} : vector<8x128xi32>
    %c0_i32 = arith.constant 0 : i32
    %59 = vector.broadcast %c0_i32 : i32 to vector<8x128xi32>
    %60 = arith.cmpi eq, %58, %59 : vector<8x128xi32>
    %c1_i32 = arith.constant 1 : i32
    %61 = vector.broadcast %c1_i32 : i32 to vector<8x128xi32>
    %62 = arith.cmpi eq, %58, %61 : vector<8x128xi32>
    %cst_51 = arith.constant 0.000000e+00 : f32
    %63 = vector.shape_cast %57 : vector<1x128xf32> to vector<1x128xf32>
    %64 = vector.broadcast %63 : vector<1x128xf32> to vector<8x128xf32>
    %65 = vector.broadcast %cst_51 : f32 to vector<8x128xf32>
    %66 = arith.select %62, %64, %65 : vector<8x128xi1>, vector<8x128xf32>
    %67 = vector.shape_cast %54 : vector<1x128xf32> to vector<1x128xf32>
    %68 = vector.broadcast %67 : vector<1x128xf32> to vector<8x128xf32>
    %69 = arith.select %60, %68, %66 : vector<8x128xi1>, vector<8x128xf32>
    %c0_52 = arith.constant 0 : index
    %c0_53 = arith.constant 0 : index
    %70 = vector.load %arg6[%c0_52, %c0_53] : memref<8x128xf32, #tpu.memory_space<vmem>>, vector<8x128xf32>
    tpu.vector_store %arg6[%c0_52, %c0_53], %69 {strides = array<i32>} : memref<8x128xf32, #tpu.memory_space<vmem>>, vector<8x128xf32>,
    return
  }
  func.func @transform_0(%arg0: i32) -> (i32, i32) {
    %c0_i32 = arith.constant 0 : i32
    %c0_i32_0 = arith.constant 0 : i32
    return %arg0, %c0_i32 : i32, i32
  }
  func.func @transform_1(%arg0: i32) -> (i32, i32) {
    %c1_i32 = arith.constant 1 : i32
    %0 = arith.addi %arg0, %c1_i32 : i32
    %c6_i32 = arith.constant 6 : i32
    %1 = arith.muli %0, %c6_i32 : i32
    %c0_i32 = arith.constant 0 : i32
    %c0_i32_0 = arith.constant 0 : i32
    return %1, %c0_i32 : i32, i32
  }
  func.func @transform_2(%arg0: i32) -> (i32, i32, i32) {
    %c0_i32 = arith.constant 0 : i32
    %c0_i32_0 = arith.constant 0 : i32
    %c0_i32_1 = arith.constant 0 : i32
    %c0_i32_2 = arith.constant 0 : i32
    return %c0_i32, %c0_i32_0, %c0_i32_1 : i32, i32, i32
  }
  func.func @transform_3(%arg0: i32) -> (i32, i32) {
    %c0_i32 = arith.constant 0 : i32
    %c0_i32_0 = arith.constant 0 : i32
    return %arg0, %c0_i32 : i32, i32
  }
  func.func @transform_4(%arg0: i32) -> (i32, i32) {
    %c0_i32 = arith.constant 0 : i32
    %c0_i32_0 = arith.constant 0 : i32
    return %arg0, %c0_i32 : i32, i32
  }
  func.func @transform_5(%arg0: i32) -> (i32, i32) {
    %c0_i32 = arith.constant 0 : i32
    %c0_i32_0 = arith.constant 0 : i32
    return %arg0, %c0_i32 : i32, i32
  }
}

</mosaic_0001>

<llo_original>
// kernel: tpu_custom_call.1
$region0: #{tpu_custom_call.1}
  #allocation0 [shape = 'u32[]', space=smem, size = 0x4, offset = 0x4, fixed_abs, tag = 'smem constant byte address 0x4 - core index']
  #allocation1 [shape = 'u32[144,128]{1,0:T(1,128)}', space=vmem, size = 0x12000, scoped, tag = 'internal scratch']
  #allocation2 [shape = 'bf16[336,4]{1,0:T(16,128)(2,1)}', space=vmem, size = 0x15000, scoped, tag = 'scratch operand']
  %s0 = inlined_call_operand.vmem [shape: bf16[1200,4], index: 0, kind: input, shape index: {}]
  %s1 = inlined_call_operand.vmem [shape: bf16[1200,4], index: 1, kind: input, shape index: {}]
  %s2 = inlined_call_operand.vmem [shape: bf16[9,4,128], index: 2, kind: input, shape index: {}]
  %s3 = inlined_call_operand.vmem [shape: f32[1152,1], index: 3, kind: input, shape index: {}]
  %s4 = inlined_call_operand.hbm [shape: bf16[1152,128], index: 4, kind: output, shape index: {0}]
  %s5 = inlined_call_operand.hbm [shape: f32[32,128], index: 5, kind: output, shape index: {1}]
  %6 = xla_tuple %s4, %s5
  %s7 = sld [smem:[#allocation0]]
  $region57: #{tpu_custom_call.1} parent=0
    _
  %s9 = ssub.s32 1, %s7
  %s10 = scalar_select 0, %s9, %s7
  $region1: #{tpu_custom_call.1} parent=0
    #allocation3 [shape = 'u8[147456]{0}', space=vmem, size = 0x24000, scoped, tag = 'output window, operand 0']
    #allocation4 [shape = 's32[2]{0}', space=sflag, size = 0x8, scoped, tag = 'scoped memory for tpu_custom_call.1']
    #allocation5 [shape = 'u8[8192]{0}', space=vmem, size = 0x2000, scoped, tag = 'output window, operand 1']
    #allocation6 [shape = 's32[2]{0}', space=sflag, size = 0x8, scoped, tag = 'scoped memory for tpu_custom_call.1']
    %11 = vsyncpa [#allocation4], 0
    %s12 = scalar_lea.sflag [#allocation4], 1
    %13 = vsyncpa %s12, 0
    %14 = vsyncpa [#allocation6], 0
    %s15 = scalar_lea.sflag [#allocation6], 1
    %16 = vsyncpa %s15, 0
    loop: start=0, step=1, limit=6
    $region2: #{tpu_custom_call.1} parent=1 // loop_pre_header
      _
    $region3: #{tpu_custom_call.1} parent=1 // loop_header
      %s18 = sphi 0, %s22
      %p19 = scmp.ge.s32.totalorder %s18, 6
      %s28 = sphi 0, %s30
      %s31 = sphi 0, %s28
      %s32 = sphi 0, %s31
      %s48 = sphi 0, %s32
      %s58 = sphi 0, %s60
      %s61 = sphi 0, %s58
      %s62 = sphi 0, %s61
      %s78 = sphi 0, %s62
      %s82 = sphi 0, %s82
      %s84 = sphi 0, %s82
      %s85 = sphi 0, %s84
      %s99 = sphi 0, %s85
      %s105 = sphi 0, %s107
      %s108 = sphi 0, %s105
      %s109 = sphi 0, %s108
      %s125 = sphi 0, %s109
      %s131 = sphi 0, %s133
      %s134 = sphi 0, %s131
      %s135 = sphi 0, %s134
      %s151 = sphi 0, %s135
      %s157 = sphi 0, %s159
      %s160 = sphi 0, %s157
      %s161 = sphi 0, %s160
      %s177 = sphi 0, %s161
    $region4: #{tpu_custom_call.1} parent=1 // loop_header_branch
      %21 = sbr.rel (%p19) target = $region8
    $region5: #{tpu_custom_call.1} parent=1 // loop_body
      %s23 = ssub.s32 %s18, 1
      %s24 = ssub.s32 %s18, 2
      %s25 = sadd.s32 %s18, 1
      %s26 = ssub.s32 %s18, %s25
      %p27 = scmp.eq.s32.totalorder %s26, 0
      %s29 = sadd.s32 %s28, 1
      %s30 = scalar_select %p27, %s28, %s29
      %p33 = pneg %p27
      %p34 = scmp.eq.s32.totalorder %s18, 3
      %p35 = por %p33, %p34
      %p36 = scmp.ne.s32.totalorder %s28, %s31
      %p37 = scmp.eq.s32.totalorder %s18, 0
      %p38 = por %p36, %p37
      %p39 = scmp.ne.s32.totalorder %s28, %s31
      %p40 = scmp.eq.s32.totalorder %s23, 3
      %p41 = por %p39, %p40
      %p42 = scmp.ne.s32.totalorder %s31, %s32
      %p43 = scmp.eq.s32.totalorder %s23, 0
      %p44 = por %p42, %p43
      %p45 = scmp.ne.s32.totalorder %s31, %s32
      %p46 = scmp.eq.s32.totalorder %s24, 3
      %p47 = por %p45, %p46
      %p49 = scmp.ne.s32.totalorder %s32, %s48
      %p50 = scmp.eq.s32.totalorder %s24, 0
      %p51 = por %p49, %p50
      %s52 = sadd.s32 %s18, 1
      %s53 = smul.u32 %s52, 6
      %s54 = sadd.s32 %s25, 1
      %s55 = smul.u32 %s54, 6
      %s56 = ssub.s32 %s53, %s55
      %p57 = scmp.eq.s32.totalorder %s56, 0
      %s59 = sadd.s32 %s58, 1
      %s60 = scalar_select %p57, %s58, %s59
      %p63 = pneg %p57
      %p64 = scmp.eq.s32.totalorder %s18, 3
      %p65 = por %p63, %p64
      %p66 = scmp.ne.s32.totalorder %s58, %s61
      %p67 = scmp.eq.s32.totalorder %s18, 0
      %p68 = por %p66, %p67
      %p69 = scmp.ne.s32.totalorder %s58, %s61
      %p70 = scmp.eq.s32.totalorder %s23, 3
      %p71 = por %p69, %p70
      %p72 = scmp.ne.s32.totalorder %s61, %s62
      %p73 = scmp.eq.s32.totalorder %s23, 0
      %p74 = por %p72, %p73
      %p75 = scmp.ne.s32.totalorder %s61, %s62
      %p76 = scmp.eq.s32.totalorder %s24, 3
      %p77 = por %p75, %p76
      %p79 = scmp.ne.s32.totalorder %s62, %s78
      %p80 = scmp.eq.s32.totalorder %s24, 0
      %p81 = por %p79, %p80
      %s83 = sadd.s32 %s82, 1
      %p86 = scmp.eq.s32.totalorder %s18, 3
      %p87 = scmp.ne.s32.totalorder %s82, %s84
      %p88 = scmp.eq.s32.totalorder %s18, 0
      %p89 = por %p87, %p88
      %p90 = scmp.ne.s32.totalorder %s82, %s84
      %p91 = scmp.eq.s32.totalorder %s23, 3
      %p92 = por %p90, %p91
      %p93 = scmp.ne.s32.totalorder %s84, %s85
      %p94 = scmp.eq.s32.totalorder %s23, 0
      %p95 = por %p93, %p94
      %p96 = scmp.ne.s32.totalorder %s84, %s85
      %p97 = scmp.eq.s32.totalorder %s24, 3
      %p98 = por %p96, %p97
      %p100 = scmp.ne.s32.totalorder %s85, %s99
      %p101 = scmp.eq.s32.totalorder %s24, 0
      %p102 = por %p100, %p101
      %s103 = ssub.s32 %s18, %s25
      %p104 = scmp.eq.s32.totalorder %s103, 0
      %s106 = sadd.s32 %s105, 1
      %s107 = scalar_select %p104, %s105, %s106
      %p110 = pneg %p104
      %p111 = scmp.eq.s32.totalorder %s18, 3
      %p112 = por %p110, %p111
      %p113 = scmp.ne.s32.totalorder %s105, %s108
      %p114 = scmp.eq.s32.totalorder %s18, 0
      %p115 = por %p113, %p114
      %p116 = scmp.ne.s32.totalorder %s105, %s108
      %p117 = scmp.eq.s32.totalorder %s23, 3
      %p118 = por %p116, %p117
      %p119 = scmp.ne.s32.totalorder %s108, %s109
      %p120 = scmp.eq.s32.totalorder %s23, 0
      %p121 = por %p119, %p120
      %p122 = scmp.ne.s32.totalorder %s108, %s109
      %p123 = scmp.eq.s32.totalorder %s24, 3
      %p124 = por %p122, %p123
      %p126 = scmp.ne.s32.totalorder %s109, %s125
      %p127 = scmp.eq.s32.totalorder %s24, 0
      %p128 = por %p126, %p127
      %s129 = ssub.s32 %s18, %s25
      %p130 = scmp.eq.s32.totalorder %s129, 0
      %s132 = sadd.s32 %s131, 1
      %s133 = scalar_select %p130, %s131, %s132
      %p136 = pneg %p130
      %p137 = scmp.eq.s32.totalorder %s18, 3
      %p138 = por %p136, %p137
      %p139 = scmp.ne.s32.totalorder %s131, %s134
      %p140 = scmp.eq.s32.totalorder %s18, 0
      %p141 = por %p139, %p140
      %p142 = scmp.ne.s32.totalorder %s131, %s134
      %p143 = scmp.eq.s32.totalorder %s23, 3
      %p144 = por %p142, %p143
      %p145 = scmp.ne.s32.totalorder %s134, %s135
      %p146 = scmp.eq.s32.totalorder %s23, 0
      %p147 = por %p145, %p146
      %p148 = scmp.ne.s32.totalorder %s134, %s135
      %p149 = scmp.eq.s32.totalorder %s24, 3
      %p150 = por %p148, %p149
      %p152 = scmp.ne.s32.totalorder %s135, %s151
      %p153 = scmp.eq.s32.totalorder %s24, 0
      %p154 = por %p152, %p153
      %s155 = ssub.s32 %s18, %s25
      %p156 = scmp.eq.s32.totalorder %s155, 0
      %s158 = sadd.s32 %s157, 1
      %s159 = scalar_select %p156, %s157, %s158
      %p162 = pneg %p156
      %p163 = scmp.eq.s32.totalorder %s18, 3
      %p164 = por %p162, %p163
      %p165 = scmp.ne.s32.totalorder %s157, %s160
      %p166 = scmp.eq.s32.totalorder %s18, 0
      %p167 = por %p165, %p166
      %p168 = scmp.ne.s32.totalorder %s157, %s160
      %p169 = scmp.eq.s32.totalorder %s23, 3
      %p170 = por %p168, %p169
      %p171 = scmp.ne.s32.totalorder %s160, %s161
      %p172 = scmp.eq.s32.totalorder %s23, 0
      %p173 = por %p171, %p172
      %p174 = scmp.ne.s32.totalorder %s160, %s161
      %p175 = scmp.eq.s32.totalorder %s24, 3
      %p176 = por %p174, %p175
      %p178 = scmp.ne.s32.totalorder %s161, %s177
      %p179 = scmp.eq.s32.totalorder %s24, 0
      %p180 = por %p178, %p179
      %p181 = scmp.le.s32.totalorder 1, %s18
      %p182 = scmp.lt.s32.totalorder %s18, 5
      %p183 = pnand %p181, %p182
      %p184 = pneg %p183
      // Predicated region
      $region9: #{tpu_custom_call.1} parent=5 // pred_check
        _
      $region10: #{tpu_custom_call.1} parent=5 // pred_check_branch
        %186 = sbr.rel (%p183) target = $region12
      $region11: #{tpu_custom_call.1} parent=5 // pred_region
        %s187 = ssub.s32 %s18, 1
        // Predicated region
        $region13: #{tpu_custom_call.1} parent=11 // pred_check
          %p188 = pneg %p95
        $region14: #{tpu_custom_call.1} parent=11 // pred_check_branch
          %190 = sbr.rel (%p188) target = $region16
        $region15: #{tpu_custom_call.1} parent=11 // pred_region
          _
        $region16: #{tpu_custom_call.1} parent=11 // pred_fallthru
          _
      $region12: #{tpu_custom_call.1} parent=5 // pred_fallthru
        _
      %p191 = scmp.lt.s32.totalorder %s18, 4
      // Predicated region
      $region17: #{tpu_custom_call.1} parent=5 // pred_check
        %p192 = pneg %p191
      $region18: #{tpu_custom_call.1} parent=5 // pred_check_branch
        %194 = sbr.rel (%p192) target = $region20
      $region19: #{tpu_custom_call.1} parent=5 // pred_region
        // Predicated region
        $region21: #{tpu_custom_call.1} parent=19 // pred_check
          %p195 = pneg %p38
        $region22: #{tpu_custom_call.1} parent=19 // pred_check_branch
          %197 = sbr.rel (%p195) target = $region24
        $region23: #{tpu_custom_call.1} parent=19 // pred_region
          %s198 = smul.u32 36, %s18
          %s199 = ssub.s32 150, %s198
          %p200 = scmp.lt.s32.totalorder %s199, 36
          %s201 = scalar_select %p200, %s199, 36
          %s202 = smul.u32 64, %s201
          %p203 = scmp.lt.s32.totalorder %s198, 149
          %s204 = scalar_select %p203, %s198, 149
          %s205 = smul.addr %s204, 4
          %s206 = scalar_lea.vmem %s0, %s205
          %s207 = smul.u32 36, %s18
          %s208 = ssub.s32 150, %s207
          %p209 = scmp.lt.s32.totalorder %s208, 36
          %s210 = scalar_select %p209, %s208, 36
          %s211 = smul.u32 64, %s210
        $region24: #{tpu_custom_call.1} parent=19 // pred_fallthru
          _
        // Predicated region
        $region25: #{tpu_custom_call.1} parent=19 // pred_check
          %p212 = pneg %p68
        $region26: #{tpu_custom_call.1} parent=19 // pred_check_branch
          %214 = sbr.rel (%p212) target = $region28
        $region27: #{tpu_custom_call.1} parent=19 // pred_region
          %s215 = sadd.s32 %s18, 1
          %s216 = smul.u32 %s215, 6
          %s217 = smul.u32 6, %s216
          %p218 = scmp.lt.s32.totalorder %s217, 149
          %s219 = scalar_select %p218, %s217, 149
          %s220 = smul.addr %s219, 4
          %s221 = scalar_lea.vmem %s1, %s220
          %s222 = sadd.s32 %s18, 1
          %s223 = smul.u32 %s222, 6
          %s224 = smul.u32 6, %s223
        $region28: #{tpu_custom_call.1} parent=19 // pred_fallthru
          _
        // Predicated region
        $region29: #{tpu_custom_call.1} parent=19 // pred_check
          %p225 = pneg %p115
        $region30: #{tpu_custom_call.1} parent=19 // pred_check_branch
          %227 = sbr.rel (%p225) target = $region32
        $region31: #{tpu_custom_call.1} parent=19 // pred_region
          %s228 = smul.u32 36, %s18
          %p229 = scmp.lt.s32.totalorder %s228, 143
          %s230 = scalar_select %p229, %s228, 143
          %s231 = smul.addr %s230, 8
          %s232 = scalar_lea.vmem %s3, %s231
          %s233 = smul.u32 36, %s18
        $region32: #{tpu_custom_call.1} parent=19 // pred_fallthru
          _
      $region20: #{tpu_custom_call.1} parent=5 // pred_fallthru
        _
      %p234 = scmp.le.s32.totalorder 1, %s18
      %p235 = scmp.lt.s32.totalorder %s18, 5
      %p236 = pnand %p234, %p235
      %p237 = pneg %p236
      // Predicated region
      $region33: #{tpu_custom_call.1} parent=5 // pred_check
        _
      $region34: #{tpu_custom_call.1} parent=5 // pred_check_branch
        %239 = sbr.rel (%p236) target = $region36
      $region35: #{tpu_custom_call.1} parent=5 // pred_region
        %s240 = ssub.s32 %s18, 1
        %s241 = smul.u32 36, %s23
        %s242 = ssub.s32 150, %s241
        %p243 = scmp.lt.s32.totalorder %s242, 36
        %s244 = scalar_select %p243, %s242, 36
        %s245 = smul.u32 64, %s244
        %p246 = scmp.lt.s32.totalorder %s241, 149
        %s247 = scalar_select %p246, %s241, 149
        %s248 = smul.addr %s247, 4
        %s249 = scalar_lea.vmem %s0, %s248
        %p250 = pneg %p44
        %p251 = pneg %p41
        %s252 = sadd.s32 %s23, 1
        %s253 = smul.u32 %s252, 6
        %s254 = smul.u32 6, %s253
        %p255 = scmp.lt.s32.totalorder %s254, 149
        %s256 = scalar_select %p255, %s254, 149
        %s257 = smul.addr %s256, 4
        %s258 = scalar_lea.vmem %s1, %s257
        %p259 = pneg %p74
        %p260 = pneg %p71
        %p261 = pneg %p95
        %p262 = pneg %p92
        %s263 = smul.u32 36, %s23
        %p264 = scmp.lt.s32.totalorder %s263, 143
        %s265 = scalar_select %p264, %s263, 143
        %s266 = smul.addr %s265, 8
        %s267 = scalar_lea.vmem %s3, %s266
        %p268 = pneg %p121
        %p269 = pneg %p118
        %p270 = pneg %p147
        %p271 = pneg %p144
        %s272 = sand.u32 %s134, 1
        %s273 = scalar_lea.sflag [#allocation4], %s272
        %s274 = sand.u32 %s134, 1
        %s275 = smul.addr %s274, 144
        %s276 = scalar_lea.vmem [#allocation3], %s275
        %p277 = pneg %p173
        %p278 = pneg %p170
        %s279 = sand.u32 %s160, 1
        %s280 = scalar_lea.sflag [#allocation6], %s279
        %s281 = sand.u32 %s160, 1
        %s282 = smul.addr %s281, 8
        %s283 = scalar_lea.vmem [#allocation5], %s282
        %s284 = smul.u32 36, %s23
        %s285 = ssub.s32 150, %s284
        %p286 = scmp.lt.s32.totalorder %s285, 36
        %s287 = scalar_select %p286, %s285, 36
        %s288 = smul.u32 64, %s287
        %p289 = scmp.lt.s32.totalorder %s284, 149
        %s290 = scalar_select %p289, %s284, 149
        %s291 = smul.addr %s290, 4
        %s292 = scalar_lea.vmem %s0, %s291
        %s293 = smul.u32 36, %s23
        %s294 = ssub.s32 150, %s293
        %p295 = scmp.lt.s32.totalorder %s294, 36
        %s296 = scalar_select %p295, %s294, 36
        %s297 = smul.u32 64, %s296
        %s298 = sadd.s32 %s23, 1
        %s299 = smul.u32 %s298, 6
        %s300 = smul.u32 6, %s299
        %p301 = scmp.lt.s32.totalorder %s300, 149
        %s302 = scalar_select %p301, %s300, 149
        %s303 = smul.addr %s302, 4
        %s304 = scalar_lea.vmem %s1, %s303
        %s305 = sadd.s32 %s23, 1
        %s306 = smul.u32 %s305, 6
        %s307 = smul.u32 6, %s306
        %s308 = smul.u32 36, %s23
        %p309 = scmp.lt.s32.totalorder %s308, 143
        %s310 = scalar_select %p309, %s308, 143
        %s311 = smul.addr %s310, 8
        %s312 = scalar_lea.vmem %s3, %s311
        %s313 = smul.u32 36, %s23
        %s314 = smul.u32 36, %s23
        %v316 = vld [vmem:[%s292] sm:$0xf]
        %v317 = vld [vmem:[%s292 + $0x4] sm:$0xf]
        %v318 = vld [vmem:[%s292 + $0x8] sm:$0xf]
        %v319 = vld [vmem:[%s292 + $0xc] sm:$0xf]
        %v320 = vld [vmem:[%s292 + $0x10] sm:$0xf]
        %v321 = vld [vmem:[%s292 + $0x14] sm:$0xf]
        %v322 = vld [vmem:[%s292 + $0x18] sm:$0xf]
        %v323 = vld [vmem:[%s292 + $0x1c] sm:$0xf]
        %v324 = vld [vmem:[%s292 + $0x20] sm:$0xf]
        %v325 = vld [vmem:[%s292 + $0x24] sm:$0xf]
        %v326 = vld [vmem:[%s292 + $0x28] sm:$0xf]
        %v327 = vld [vmem:[%s292 + $0x2c] sm:$0xf]
        %v328 = vld [vmem:[%s292 + $0x30] sm:$0xf]
        %v329 = vld [vmem:[%s292 + $0x34] sm:$0xf]
        %v330 = vld [vmem:[%s292 + $0x38] sm:$0xf]
        %v331 = vld [vmem:[%s292 + $0x3c] sm:$0xf]
        %v332 = vld [vmem:[%s292 + $0x40] sm:$0xf]
        %v333 = vld [vmem:[%s292 + $0x44] sm:$0xf]
        %v334 = vld [vmem:[%s292 + $0x48] sm:$0xf]
        %v335 = vld [vmem:[%s292 + $0x4c] sm:$0xf]
        %v336 = vld [vmem:[%s292 + $0x50] sm:$0xf]
        %v337 = vld [vmem:[%s292 + $0x54] sm:$0xf]
        %v338 = vld [vmem:[%s292 + $0x58] sm:$0xf]
        %v339 = vld [vmem:[%s292 + $0x5c] sm:$0xf]
        %v340 = vld [vmem:[%s292 + $0x60] sm:$0xf]
        %v341 = vld [vmem:[%s292 + $0x64] sm:$0xf]
        %v342 = vld [vmem:[%s292 + $0x68] sm:$0xf]
        %v343 = vld [vmem:[%s292 + $0x6c] sm:$0xf]
        %v344 = vld [vmem:[%s292 + $0x70] sm:$0xf]
        %v345 = vld [vmem:[%s292 + $0x74] sm:$0xf]
        %v346 = vld [vmem:[%s292 + $0x78] sm:$0xf]
        %v347 = vld [vmem:[%s292 + $0x7c] sm:$0xf]
        %v348 = vld [vmem:[%s292 + $0x80] sm:$0xf]
        %v349 = vld [vmem:[%s292 + $0x84] sm:$0xf]
        %v350 = vld [vmem:[%s292 + $0x88] sm:$0xf]
        %v351 = vld [vmem:[%s292 + $0x8c] sm:$0xf]
        %v388 = vunpack.c.l.b16 %v316
        %v389 = vunpack.c.l.b16 %v317
        %v390 = vunpack.c.l.b16 %v318
        %v391 = vunpack.c.l.b16 %v319
        %v392 = vunpack.c.l.b16 %v320
        %v393 = vunpack.c.l.b16 %v321
        %v394 = vunpack.c.l.b16 %v322
        %v395 = vunpack.c.l.b16 %v323
        %v396 = vunpack.c.l.b16 %v324
        %v397 = vunpack.c.l.b16 %v325
        %v398 = vunpack.c.l.b16 %v326
        %v399 = vunpack.c.l.b16 %v327
        %v400 = vunpack.c.l.b16 %v328
        %v401 = vunpack.c.l.b16 %v329
        %v402 = vunpack.c.l.b16 %v330
        %v403 = vunpack.c.l.b16 %v331
        %v404 = vunpack.c.l.b16 %v332
        %v405 = vunpack.c.l.b16 %v333
        %v406 = vunpack.c.l.b16 %v334
        %v407 = vunpack.c.l.b16 %v335
        %v408 = vunpack.c.l.b16 %v336
        %v409 = vunpack.c.l.b16 %v337
        %v410 = vunpack.c.l.b16 %v338
        %v411 = vunpack.c.l.b16 %v339
        %v412 = vunpack.c.l.b16 %v340
        %v413 = vunpack.c.l.b16 %v341
        %v414 = vunpack.c.l.b16 %v342
        %v415 = vunpack.c.l.b16 %v343
        %v416 = vunpack.c.l.b16 %v344
        %v417 = vunpack.c.l.b16 %v345
        %v418 = vunpack.c.l.b16 %v346
        %v419 = vunpack.c.l.b16 %v347
        %v420 = vunpack.c.l.b16 %v348
        %v421 = vunpack.c.l.b16 %v349
        %v422 = vunpack.c.l.b16 %v350
        %v423 = vunpack.c.l.b16 %v351
        %v424 = vpack.c.b16 %v389, %v388
        %v425 = vpack.c.b16 %v391, %v390
        %v426 = vpack.c.b16 %v393, %v392
        %v427 = vpack.c.b16 %v395, %v394
        %v428 = vpack.c.b16 %v397, %v396
        %v429 = vpack.c.b16 %v399, %v398
        %v430 = vpack.c.b16 %v401, %v400
        %v431 = vpack.c.b16 %v403, %v402
        %v432 = vpack.c.b16 %v405, %v404
        %v433 = vpack.c.b16 %v407, %v406
        %v434 = vpack.c.b16 %v409, %v408
        %v435 = vpack.c.b16 %v411, %v410
        %v436 = vpack.c.b16 %v413, %v412
        %v437 = vpack.c.b16 %v415, %v414
        %v438 = vpack.c.b16 %v417, %v416
        %v439 = vpack.c.b16 %v419, %v418
        %v440 = vpack.c.b16 %v421, %v420
        %v441 = vpack.c.b16 %v423, %v422
        %vm460 = vcmask 31744
        %461 = vst.msk [vmem:[#allocation2] sm:$0xff] %vm460, %v424
        %462 = vst.msk [vmem:[#allocation2 + $0x8] sm:$0xff] %vm460, %v425
        %463 = vst.msk [vmem:[#allocation2 + $0x10] sm:$0xff] %vm460, %v426
        %464 = vst.msk [vmem:[#allocation2 + $0x18] sm:$0xff] %vm460, %v427
        %465 = vst.msk [vmem:[#allocation2 + $0x20] sm:$0xff] %vm460, %v428
        %466 = vst.msk [vmem:[#allocation2 + $0x28] sm:$0xff] %vm460, %v429
        %467 = vst.msk [vmem:[#allocation2 + $0x30] sm:$0xff] %vm460, %v430
        %468 = vst.msk [vmem:[#allocation2 + $0x38] sm:$0xff] %vm460, %v431
        %469 = vst.msk [vmem:[#allocation2 + $0x40] sm:$0xff] %vm460, %v432
        %470 = vst.msk [vmem:[#allocation2 + $0x48] sm:$0xff] %vm460, %v433
        %471 = vst.msk [vmem:[#allocation2 + $0x50] sm:$0xff] %vm460, %v434
        %472 = vst.msk [vmem:[#allocation2 + $0x58] sm:$0xff] %vm460, %v435
        %473 = vst.msk [vmem:[#allocation2 + $0x60] sm:$0xff] %vm460, %v436
        %474 = vst.msk [vmem:[#allocation2 + $0x68] sm:$0xff] %vm460, %v437
        %475 = vst.msk [vmem:[#allocation2 + $0x70] sm:$0xff] %vm460, %v438
        %476 = vst.msk [vmem:[#allocation2 + $0x78] sm:$0xff] %vm460, %v439
        %477 = vst.msk [vmem:[#allocation2 + $0x80] sm:$0xff] %vm460, %v440
        %478 = vst.msk [vmem:[#allocation2 + $0x88] sm:$0xff] %vm460, %v441
        %v479 = vld [vmem:[%s304] sm:$0xf]
        %v480 = vld [vmem:[%s304 + $0x4] sm:$0xf]
        %v481 = vld [vmem:[%s304 + $0x8] sm:$0xf]
        %v482 = vld [vmem:[%s304 + $0xc] sm:$0xf]
        %v483 = vld [vmem:[%s304 + $0x10] sm:$0xf]
        %v484 = vld [vmem:[%s304 + $0x14] sm:$0xf]
        %v491 = vunpack.c.l.b16 %v479
        %v492 = vunpack.c.l.b16 %v480
        %v493 = vunpack.c.l.b16 %v481
        %v494 = vunpack.c.l.b16 %v482
        %v495 = vunpack.c.l.b16 %v483
        %v496 = vunpack.c.l.b16 %v484
        %v497 = vpack.c.b16 %v492, %v491
        %v498 = vpack.c.b16 %v494, %v493
        %v499 = vpack.c.b16 %v496, %v495
        %503 = vst.msk [vmem:[#allocation2 + $0x90] sm:$0xff] %vm460, %v497
        %504 = vst.msk [vmem:[#allocation2 + $0x98] sm:$0xff] %vm460, %v498
        %505 = vst.msk [vmem:[#allocation2 + $0xa0] sm:$0xff] %vm460, %v499
        %v506 = vld [vmem:[#allocation2] sm:$0xff]
        %v507 = vld [vmem:[#allocation2 + $0x8] sm:$0xff]
        %v508 = vld [vmem:[#allocation2 + $0x10] sm:$0xff]
        %v509 = vld [vmem:[#allocation2 + $0x18] sm:$0xff]
        %v510 = vld [vmem:[#allocation2 + $0x20] sm:$0xff]
        %v511 = vld [vmem:[#allocation2 + $0x28] sm:$0xff]
        %v512 = vld [vmem:[#allocation2 + $0x30] sm:$0xff]
        %v513 = vld [vmem:[#allocation2 + $0x38] sm:$0xff]
        %v514 = vld [vmem:[#allocation2 + $0x40] sm:$0xff]
        %v515 = vld [vmem:[#allocation2 + $0x48] sm:$0xff]
        %v516 = vld [vmem:[#allocation2 + $0x50] sm:$0xff]
        %v517 = vld [vmem:[#allocation2 + $0x58] sm:$0xff]
        %v518 = vld [vmem:[#allocation2 + $0x60] sm:$0xff]
        %v519 = vld [vmem:[#allocation2 + $0x68] sm:$0xff]
        %v520 = vld [vmem:[#allocation2 + $0x70] sm:$0xff]
        %v521 = vld [vmem:[#allocation2 + $0x78] sm:$0xff]
        %v522 = vld [vmem:[#allocation2 + $0x80] sm:$0xff]
        %v523 = vld [vmem:[#allocation2 + $0x88] sm:$0xff]
        %v524 = vld [vmem:[%s2] sm:$0x3]
        %v525 = vld [vmem:[#allocation2 + $0x90] sm:$0x1]
        %s526 = scalar_lea.vmem %s2, 2
        %v527 = vld [vmem:[%s526] sm:$0x3]
        %vm528 = vsmask.f32 7424
        %v530 = vshrl.u32 %v506, 16
        %v532 = vshll.u32 %v506, 16
        %v534 = vrot.slane %v532, 1
        %v535 = vor.u32 %v530, %v534
        %v537 = vshll.u32 %v507, 16
        %v539 = vrot.slane %v537, 1
        %v540 = vsel %vm528, %v535, %v539
        %v541 = vshrl.u32 %v507, 16
        %v543 = vor.u32 %v541, %v539
        %v545 = vshll.u32 %v508, 16
        %v547 = vrot.slane %v545, 1
        %v548 = vsel %vm528, %v543, %v547
        %v549 = vshrl.u32 %v508, 16
        %v551 = vor.u32 %v549, %v547
        %v553 = vshll.u32 %v509, 16
        %v555 = vrot.slane %v553, 1
        %v556 = vsel %vm528, %v551, %v555
        %v557 = vshrl.u32 %v509, 16
        %v559 = vor.u32 %v557, %v555
        %v561 = vshll.u32 %v510, 16
        %v563 = vrot.slane %v561, 1
        %v564 = vsel %vm528, %v559, %v563
        %v565 = vshrl.u32 %v510, 16
        %v567 = vor.u32 %v565, %v563
        %v569 = vshll.u32 %v511, 16
        %v571 = vrot.slane %v569, 1
        %v572 = vsel %vm528, %v567, %v571
        %v573 = vshrl.u32 %v511, 16
        %v575 = vor.u32 %v573, %v571
        %v577 = vshll.u32 %v512, 16
        %v579 = vrot.slane %v577, 1
        %v580 = vsel %vm528, %v575, %v579
        %v581 = vshrl.u32 %v512, 16
        %v583 = vor.u32 %v581, %v579
        %v585 = vshll.u32 %v513, 16
        %v587 = vrot.slane %v585, 1
        %v588 = vsel %vm528, %v583, %v587
        %v589 = vshrl.u32 %v513, 16
        %v591 = vor.u32 %v589, %v587
        %v593 = vshll.u32 %v514, 16
        %v595 = vrot.slane %v593, 1
        %v596 = vsel %vm528, %v591, %v595
        %v597 = vshrl.u32 %v514, 16
        %v599 = vor.u32 %v597, %v595
        %v601 = vshll.u32 %v515, 16
        %v603 = vrot.slane %v601, 1
        %v604 = vsel %vm528, %v599, %v603
        %v605 = vshrl.u32 %v515, 16
        %v607 = vor.u32 %v605, %v603
        %v609 = vshll.u32 %v516, 16
        %v611 = vrot.slane %v609, 1
        %v612 = vsel %vm528, %v607, %v611
        %v613 = vshrl.u32 %v516, 16
        %v615 = vor.u32 %v613, %v611
        %v617 = vshll.u32 %v517, 16
        %v619 = vrot.slane %v617, 1
        %v620 = vsel %vm528, %v615, %v619
        %v621 = vshrl.u32 %v517, 16
        %v623 = vor.u32 %v621, %v619
        %v625 = vshll.u32 %v518, 16
        %v627 = vrot.slane %v625, 1
        %v628 = vsel %vm528, %v623, %v627
        %v629 = vshrl.u32 %v518, 16
        %v631 = vor.u32 %v629, %v627
        %v633 = vshll.u32 %v519, 16
        %v635 = vrot.slane %v633, 1
        %v636 = vsel %vm528, %v631, %v635
        %v637 = vshrl.u32 %v519, 16
        %v639 = vor.u32 %v637, %v635
        %v641 = vshll.u32 %v520, 16
        %v643 = vrot.slane %v641, 1
        %v644 = vsel %vm528, %v639, %v643
        %v645 = vshrl.u32 %v520, 16
        %v647 = vor.u32 %v645, %v643
        %v649 = vshll.u32 %v521, 16
        %v651 = vrot.slane %v649, 1
        %v652 = vsel %vm528, %v647, %v651
        %v653 = vshrl.u32 %v521, 16
        %v655 = vor.u32 %v653, %v651
        %v657 = vshll.u32 %v522, 16
        %v659 = vrot.slane %v657, 1
        %v660 = vsel %vm528, %v655, %v659
        %v661 = vshrl.u32 %v522, 16
        %v663 = vor.u32 %v661, %v659
        %v665 = vshll.u32 %v523, 16
        %v667 = vrot.slane %v665, 1
        %v668 = vsel %vm528, %v663, %v667
        %v669 = vshrl.u32 %v523, 16
        %v671 = vor.u32 %v669, %v667
        %v673 = vshll.u32 %v525, 16
        %v675 = vrot.slane %v673, 1
        %v676 = vsel %vm528, %v671, %v675
        %v678 = vsel %vm460, %v540, 0
        %v681 = vsel %vm460, %v548, 0
        %v684 = vsel %vm460, %v556, 0
        %v687 = vsel %vm460, %v564, 0
        %v690 = vsel %vm460, %v572, 0
        %v693 = vsel %vm460, %v580, 0
        %v696 = vsel %vm460, %v588, 0
        %v699 = vsel %vm460, %v596, 0
        %v702 = vsel %vm460, %v604, 0
        %v705 = vsel %vm460, %v612, 0
        %v708 = vsel %vm460, %v620, 0
        %v711 = vsel %vm460, %v628, 0
        %v714 = vsel %vm460, %v636, 0
        %v717 = vsel %vm460, %v644, 0
        %v720 = vsel %vm460, %v652, 0
        %v723 = vsel %vm460, %v660, 0
        %v726 = vsel %vm460, %v668, 0
        %v729 = vsel %vm460, %v676, 0
        %vm731 = vcmask 1041408
        %v733 = vsel %vm731, %v527, 0
        %735 = vmatprep.subr.bf16.mxu0 0
        %736 = vmatpush1.bf16.msra.mxu0 %v733
        %737 = vmatprep.subr.bf16.mxu0 0
        %738 = vmatpush1.bf16.msra.mxu0 0
        %739 = vmatprep.subr.bf16.mxu0 0
        %740 = vmatpush1.bf16.msra.mxu0 0
        %741 = vmatprep.subr.bf16.mxu0 0
        %742 = vmatpush1.bf16.msra.mxu0 0
        %743 = vmatprep.subr.bf16.mxu0 0
        %744 = vmatpush1.bf16.msra.mxu0 0
        %745 = vmatprep.subr.bf16.mxu0 0
        %746 = vmatpush1.bf16.msra.mxu0 0
        %747 = vmatprep.subr.bf16.mxu0 0
        %748 = vmatpush1.bf16.msra.mxu0 0
        %749 = vmatprep.subr.bf16.mxu0 0
        %750 = vmatpush1.bf16.msra.mxu0 0
        %751 = vmatprep.subr.bf16.mxu0 0
        %752 = vmatpush1.bf16.msra.mxu0 0
        %753 = vmatprep.subr.bf16.mxu0 0
        %754 = vmatpush1.bf16.msra.mxu0 0
        %755 = vmatprep.subr.bf16.mxu0 0
        %756 = vmatpush1.bf16.msra.mxu0 0
        %757 = vmatprep.subr.bf16.mxu0 0
        %758 = vmatpush1.bf16.msra.mxu0 0
        %759 = vmatprep.subr.bf16.mxu0 0
        %760 = vmatpush1.bf16.msra.mxu0 0
        %761 = vmatprep.subr.bf16.mxu0 0
        %762 = vmatpush1.bf16.msra.mxu0 0
        %763 = vmatprep.subr.bf16.mxu0 0
        %764 = vmatpush1.bf16.msra.mxu0 0
        %765 = vmatprep.subr.bf16.mxu0 0
        %766 = vmatpush1.bf16.msra.mxu0 0
        %767 = vmatprep.mubr.bf16.mxu0 0
        %768 = vmatmul.mubr.bf16.gmra.mrb[0].mxu0 %v678
        %v769 = vpop.f32.mrb[0].mxu0
        %v770 = vadd.f32 0.0, %v769
        %v771 = vpop.f32.mrb[0].mxu0
        %v772 = vpop.f32.mrb[0].mxu0
        %v773 = vadd.f32 0.0, %v772
        %v774 = vpop.f32.mrb[0].mxu0
        %775 = vmatprep.mubr.bf16.mxu0 0
        %776 = vmatmul.mubr.bf16.gmra.mrb[0].mxu0 %v681
        %v777 = vpop.f32.mrb[0].mxu0
        %v778 = vadd.f32 0.0, %v777
        %v779 = vpop.f32.mrb[0].mxu0
        %v780 = vpop.f32.mrb[0].mxu0
        %v781 = vadd.f32 0.0, %v780
        %v782 = vpop.f32.mrb[0].mxu0
        %783 = vmatprep.mubr.bf16.mxu0 0
        %784 = vmatmul.mubr.bf16.gmra.mrb[0].mxu0 %v684
        %v785 = vpop.f32.mrb[0].mxu0
        %v786 = vadd.f32 0.0, %v785
        %v787 = vpop.f32.mrb[0].mxu0
        %v788 = vpop.f32.mrb[0].mxu0
        %v789 = vadd.f32 0.0, %v788
        %v790 = vpop.f32.mrb[0].mxu0
        %791 = vmatprep.mubr.bf16.mxu0 0
        %792 = vmatmul.mubr.bf16.gmra.mrb[0].mxu0 %v687
        %v793 = vpop.f32.mrb[0].mxu0
        %v794 = vadd.f32 0.0, %v793
        %v795 = vpop.f32.mrb[0].mxu0
        %v796 = vpop.f32.mrb[0].mxu0
        %v797 = vadd.f32 0.0, %v796
        %v798 = vpop.f32.mrb[0].mxu0
        %799 = vmatprep.mubr.bf16.mxu0 0
        %800 = vmatmul.mubr.bf16.gmra.mrb[0].mxu0 %v690
        %v801 = vpop.f32.mrb[0].mxu0
        %v802 = vadd.f32 0.0, %v801
        %v803 = vpop.f32.mrb[0].mxu0
        %v804 = vpop.f32.mrb[0].mxu0
        %v805 = vadd.f32 0.0, %v804
        %v806 = vpop.f32.mrb[0].mxu0
        %807 = vmatprep.mubr.bf16.mxu0 0
        %808 = vmatmul.mubr.bf16.gmra.mrb[0].mxu0 %v693
        %v809 = vpop.f32.mrb[0].mxu0
        %v810 = vadd.f32 0.0, %v809
        %v811 = vpop.f32.mrb[0].mxu0
        %v812 = vpop.f32.mrb[0].mxu0
        %v813 = vadd.f32 0.0, %v812
        %v814 = vpop.f32.mrb[0].mxu0
        %815 = vmatprep.mubr.bf16.mxu0 0
        %816 = vmatmul.mubr.bf16.gmra.mrb[0].mxu0 %v696
        %v817 = vpop.f32.mrb[0].mxu0
        %v818 = vadd.f32 0.0, %v817
        %v819 = vpop.f32.mrb[0].mxu0
        %v820 = vpop.f32.mrb[0].mxu0
        %v821 = vadd.f32 0.0, %v820
        %v822 = vpop.f32.mrb[0].mxu0
        %823 = vmatprep.mubr.bf16.mxu0 0
        %824 = vmatmul.mubr.bf16.gmra.mrb[0].mxu0 %v699
        %v825 = vpop.f32.mrb[0].mxu0
        %v826 = vadd.f32 0.0, %v825
        %v827 = vpop.f32.mrb[0].mxu0
        %v828 = vpop.f32.mrb[0].mxu0
        %v829 = vadd.f32 0.0, %v828
        %v830 = vpop.f32.mrb[0].mxu0
        %831 = vmatprep.mubr.bf16.mxu0 0
        %832 = vmatmul.mubr.bf16.gmra.mrb[0].mxu0 %v702
        %v833 = vpop.f32.mrb[0].mxu0
        %v834 = vadd.f32 0.0, %v833
        %v835 = vpop.f32.mrb[0].mxu0
        %v836 = vpop.f32.mrb[0].mxu0
        %v837 = vadd.f32 0.0, %v836
        %v838 = vpop.f32.mrb[0].mxu0
        %839 = vmatprep.mubr.bf16.mxu0 0
        %840 = vmatmul.mubr.bf16.gmra.mrb[0].mxu0 %v705
        %v841 = vpop.f32.mrb[0].mxu0
        %v842 = vadd.f32 0.0, %v841
        %v843 = vpop.f32.mrb[0].mxu0
        %v844 = vpop.f32.mrb[0].mxu0
        %v845 = vadd.f32 0.0, %v844
        %v846 = vpop.f32.mrb[0].mxu0
        %847 = vmatprep.mubr.bf16.mxu0 0
        %848 = vmatmul.mubr.bf16.gmra.mrb[0].mxu0 %v708
        %v849 = vpop.f32.mrb[0].mxu0
        %v850 = vadd.f32 0.0, %v849
        %v851 = vpop.f32.mrb[0].mxu0
        %v852 = vpop.f32.mrb[0].mxu0
        %v853 = vadd.f32 0.0, %v852
        %v854 = vpop.f32.mrb[0].mxu0
        %855 = vmatprep.mubr.bf16.mxu0 0
        %856 = vmatmul.mubr.bf16.gmra.mrb[0].mxu0 %v711
        %v857 = vpop.f32.mrb[0].mxu0
        %v858 = vadd.f32 0.0, %v857
        %v859 = vpop.f32.mrb[0].mxu0
        %v860 = vpop.f32.mrb[0].mxu0
        %v861 = vadd.f32 0.0, %v860
        %v862 = vpop.f32.mrb[0].mxu0
        %863 = vmatprep.mubr.bf16.mxu0 0
        %864 = vmatmul.mubr.bf16.gmra.mrb[0].mxu0 %v714
        %v865 = vpop.f32.mrb[0].mxu0
        %v866 = vadd.f32 0.0, %v865
        %v867 = vpop.f32.mrb[0].mxu0
        %v868 = vpop.f32.mrb[0].mxu0
        %v869 = vadd.f32 0.0, %v868
        %v870 = vpop.f32.mrb[0].mxu0
        %871 = vmatprep.mubr.bf16.mxu0 0
        %872 = vmatmul.mubr.bf16.gmra.mrb[0].mxu0 %v717
        %v873 = vpop.f32.mrb[0].mxu0
        %v874 = vadd.f32 0.0, %v873
        %v875 = vpop.f32.mrb[0].mxu0
        %v876 = vpop.f32.mrb[0].mxu0
        %v877 = vadd.f32 0.0, %v876
        %v878 = vpop.f32.mrb[0].mxu0
        %879 = vmatprep.mubr.bf16.mxu0 0
        %880 = vmatmul.mubr.bf16.gmra.mrb[0].mxu0 %v720
        %v881 = vpop.f32.mrb[0].mxu0
        %v882 = vadd.f32 0.0, %v881
        %v883 = vpop.f32.mrb[0].mxu0
        %v884 = vpop.f32.mrb[0].mxu0
        %v885 = vadd.f32 0.0, %v884
        %v886 = vpop.f32.mrb[0].mxu0
        %887 = vmatprep.mubr.bf16.mxu0 0
        %888 = vmatmul.mubr.bf16.gmra.mrb[0].mxu0 %v723
        %v889 = vpop.f32.mrb[0].mxu0
        %v890 = vadd.f32 0.0, %v889
        %v891 = vpop.f32.mrb[0].mxu0
        %v892 = vpop.f32.mrb[0].mxu0
        %v893 = vadd.f32 0.0, %v892
        %v894 = vpop.f32.mrb[0].mxu0
        %895 = vmatprep.mubr.bf16.mxu0 0
        %896 = vmatmul.mubr.bf16.gmra.mrb[0].mxu0 %v726
        %v897 = vpop.f32.mrb[0].mxu0
        %v898 = vadd.f32 0.0, %v897
        %v899 = vpop.f32.mrb[0].mxu0
        %v900 = vpop.f32.mrb[0].mxu0
        %v901 = vadd.f32 0.0, %v900
        %v902 = vpop.f32.mrb[0].mxu0
        %903 = vmatprep.mubr.bf16.mxu0 0
        %904 = vmatmul.mubr.bf16.gmra.mrb[0].mxu0 %v729
        %v905 = vpop.f32.mrb[0].mxu0
        %v906 = vadd.f32 0.0, %v905
        %v907 = vpop.f32.mrb[0].mxu0
        %v908 = vpop.f32.mrb[0].mxu0
        %v909 = vadd.f32 0.0, %v908
        %v910 = vpop.f32.mrb[0].mxu0
        %911 = vdwg.mxu0
        %v912 = vsel %vm460, %v506, 0
        %v914 = vsel %vm460, %v507, 0
        %v916 = vsel %vm460, %v508, 0
        %v918 = vsel %vm460, %v509, 0
        %v920 = vsel %vm460, %v510, 0
        %v922 = vsel %vm460, %v511, 0
        %v924 = vsel %vm460, %v512, 0
        %v926 = vsel %vm460, %v513, 0
        %v928 = vsel %vm460, %v514, 0
        %v930 = vsel %vm460, %v515, 0
        %v932 = vsel %vm460, %v516, 0
        %v934 = vsel %vm460, %v517, 0
        %v936 = vsel %vm460, %v518, 0
        %v938 = vsel %vm460, %v519, 0
        %v940 = vsel %vm460, %v520, 0
        %v942 = vsel %vm460, %v521, 0
        %v944 = vsel %vm460, %v522, 0
        %v946 = vsel %vm460, %v523, 0
        %v949 = vsel %vm731, %v524, 0
        %951 = vmatprep.subr.bf16.mxu0 0
        %952 = vmatpush1.bf16.msra.mxu0 %v949
        %953 = vmatprep.subr.bf16.mxu0 0
        %954 = vmatpush1.bf16.msra.mxu0 0
        %955 = vmatprep.subr.bf16.mxu0 0
        %956 = vmatpush1.bf16.msra.mxu0 0
        %957 = vmatprep.subr.bf16.mxu0 0
        %958 = vmatpush1.bf16.msra.mxu0 0
        %959 = vmatprep.subr.bf16.mxu0 0
        %960 = vmatpush1.bf16.msra.mxu0 0
        %961 = vmatprep.subr.bf16.mxu0 0
        %962 = vmatpush1.bf16.msra.mxu0 0
        %963 = vmatprep.subr.bf16.mxu0 0
        %964 = vmatpush1.bf16.msra.mxu0 0
        %965 = vmatprep.subr.bf16.mxu0 0
        %966 = vmatpush1.bf16.msra.mxu0 0
        %967 = vmatprep.subr.bf16.mxu0 0
        %968 = vmatpush1.bf16.msra.mxu0 0
        %969 = vmatprep.subr.bf16.mxu0 0
        %970 = vmatpush1.bf16.msra.mxu0 0
        %971 = vmatprep.subr.bf16.mxu0 0
        %972 = vmatpush1.bf16.msra.mxu0 0
        %973 = vmatprep.subr.bf16.mxu0 0
        %974 = vmatpush1.bf16.msra.mxu0 0
        %975 = vmatprep.subr.bf16.mxu0 0
        %976 = vmatpush1.bf16.msra.mxu0 0
        %977 = vmatprep.subr.bf16.mxu0 0
        %978 = vmatpush1.bf16.msra.mxu0 0
        %979 = vmatprep.subr.bf16.mxu0 0
        %980 = vmatpush1.bf16.msra.mxu0 0
        %981 = vmatprep.subr.bf16.mxu0 0
        %982 = vmatpush1.bf16.msra.mxu0 0
        %983 = vmatprep.mubr.bf16.mxu0 0
        %984 = vmatmul.mubr.bf16.gmra.mrb[0].mxu0 %v912
        %v985 = vpop.f32.mrb[0].mxu0
        %v986 = vadd.f32 %v770, %v985
        %v987 = vpop.f32.mrb[0].mxu0
        %v988 = vpop.f32.mrb[0].mxu0
        %v989 = vadd.f32 %v773, %v988
        %v990 = vpop.f32.mrb[0].mxu0
        %991 = vmatprep.mubr.bf16.mxu0 0
        %992 = vmatmul.mubr.bf16.gmra.mrb[0].mxu0 %v914
        %v993 = vpop.f32.mrb[0].mxu0
        %v994 = vadd.f32 %v778, %v993
        %v995 = vpop.f32.mrb[0].mxu0
        %v996 = vpop.f32.mrb[0].mxu0
        %v997 = vadd.f32 %v781, %v996
        %v998 = vpop.f32.mrb[0].mxu0
        %999 = vmatprep.mubr.bf16.mxu0 0
        %1000 = vmatmul.mubr.bf16.gmra.mrb[0].mxu0 %v916
        %v1001 = vpop.f32.mrb[0].mxu0
        %v1002 = vadd.f32 %v786, %v1001
        %v1003 = vpop.f32.mrb[0].mxu0
        %v1004 = vpop.f32.mrb[0].mxu0
        %v1005 = vadd.f32 %v789, %v1004
        %v1006 = vpop.f32.mrb[0].mxu0
        %1007 = vmatprep.mubr.bf16.mxu0 0
        %1008 = vmatmul.mubr.bf16.gmra.mrb[0].mxu0 %v918
        %v1009 = vpop.f32.mrb[0].mxu0
        %v1010 = vadd.f32 %v794, %v1009
        %v1011 = vpop.f32.mrb[0].mxu0
        %v1012 = vpop.f32.mrb[0].mxu0
        %v1013 = vadd.f32 %v797, %v1012
        %v1014 = vpop.f32.mrb[0].mxu0
        %1015 = vmatprep.mubr.bf16.mxu0 0
        %1016 = vmatmul.mubr.bf16.gmra.mrb[0].mxu0 %v920
        %v1017 = vpop.f32.mrb[0].mxu0
        %v1018 = vadd.f32 %v802, %v1017
        %v1019 = vpop.f32.mrb[0].mxu0
        %v1020 = vpop.f32.mrb[0].mxu0
        %v1021 = vadd.f32 %v805, %v1020
        %v1022 = vpop.f32.mrb[0].mxu0
        %1023 = vmatprep.mubr.bf16.mxu0 0
        %1024 = vmatmul.mubr.bf16.gmra.mrb[0].mxu0 %v922
        %v1025 = vpop.f32.mrb[0].mxu0
        %v1026 = vadd.f32 %v810, %v1025
        %v1027 = vpop.f32.mrb[0].mxu0
        %v1028 = vpop.f32.mrb[0].mxu0
        %v1029 = vadd.f32 %v813, %v1028
        %v1030 = vpop.f32.mrb[0].mxu0
        %1031 = vmatprep.mubr.bf16.mxu0 0
        %1032 = vmatmul.mubr.bf16.gmra.mrb[0].mxu0 %v924
        %v1033 = vpop.f32.mrb[0].mxu0
        %v1034 = vadd.f32 %v818, %v1033
        %v1035 = vpop.f32.mrb[0].mxu0
        %v1036 = vpop.f32.mrb[0].mxu0
        %v1037 = vadd.f32 %v821, %v1036
        %v1038 = vpop.f32.mrb[0].mxu0
        %1039 = vmatprep.mubr.bf16.mxu0 0
        %1040 = vmatmul.mubr.bf16.gmra.mrb[0].mxu0 %v926
        %v1041 = vpop.f32.mrb[0].mxu0
        %v1042 = vadd.f32 %v826, %v1041
        %v1043 = vpop.f32.mrb[0].mxu0
        %v1044 = vpop.f32.mrb[0].mxu0
        %v1045 = vadd.f32 %v829, %v1044
        %v1046 = vpop.f32.mrb[0].mxu0
        %1047 = vmatprep.mubr.bf16.mxu0 0
        %1048 = vmatmul.mubr.bf16.gmra.mrb[0].mxu0 %v928
        %v1049 = vpop.f32.mrb[0].mxu0
        %v1050 = vadd.f32 %v834, %v1049
        %v1051 = vpop.f32.mrb[0].mxu0
        %v1052 = vpop.f32.mrb[0].mxu0
        %v1053 = vadd.f32 %v837, %v1052
        %v1054 = vpop.f32.mrb[0].mxu0
        %1055 = vmatprep.mubr.bf16.mxu0 0
        %1056 = vmatmul.mubr.bf16.gmra.mrb[0].mxu0 %v930
        %v1057 = vpop.f32.mrb[0].mxu0
        %v1058 = vadd.f32 %v842, %v1057
        %v1059 = vpop.f32.mrb[0].mxu0
        %v1060 = vpop.f32.mrb[0].mxu0
        %v1061 = vadd.f32 %v845, %v1060
        %v1062 = vpop.f32.mrb[0].mxu0
        %1063 = vmatprep.mubr.bf16.mxu0 0
        %1064 = vmatmul.mubr.bf16.gmra.mrb[0].mxu0 %v932
        %v1065 = vpop.f32.mrb[0].mxu0
        %v1066 = vadd.f32 %v850, %v1065
        %v1067 = vpop.f32.mrb[0].mxu0
        %v1068 = vpop.f32.mrb[0].mxu0
        %v1069 = vadd.f32 %v853, %v1068
        %v1070 = vpop.f32.mrb[0].mxu0
        %1071 = vmatprep.mubr.bf16.mxu0 0
        %1072 = vmatmul.mubr.bf16.gmra.mrb[0].mxu0 %v934
        %v1073 = vpop.f32.mrb[0].mxu0
        %v1074 = vadd.f32 %v858, %v1073
        %v1075 = vpop.f32.mrb[0].mxu0
        %v1076 = vpop.f32.mrb[0].mxu0
        %v1077 = vadd.f32 %v861, %v1076
        %v1078 = vpop.f32.mrb[0].mxu0
        %1079 = vmatprep.mubr.bf16.mxu0 0
        %1080 = vmatmul.mubr.bf16.gmra.mrb[0].mxu0 %v936
        %v1081 = vpop.f32.mrb[0].mxu0
        %v1082 = vadd.f32 %v866, %v1081
        %v1083 = vpop.f32.mrb[0].mxu0
        %v1084 = vpop.f32.mrb[0].mxu0
        %v1085 = vadd.f32 %v869, %v1084
        %v1086 = vpop.f32.mrb[0].mxu0
        %1087 = vmatprep.mubr.bf16.mxu0 0
        %1088 = vmatmul.mubr.bf16.gmra.mrb[0].mxu0 %v938
        %v1089 = vpop.f32.mrb[0].mxu0
        %v1090 = vadd.f32 %v874, %v1089
        %v1091 = vpop.f32.mrb[0].mxu0
        %v1092 = vpop.f32.mrb[0].mxu0
        %v1093 = vadd.f32 %v877, %v1092
        %v1094 = vpop.f32.mrb[0].mxu0
        %1095 = vmatprep.mubr.bf16.mxu0 0
        %1096 = vmatmul.mubr.bf16.gmra.mrb[0].mxu0 %v940
        %v1097 = vpop.f32.mrb[0].mxu0
        %v1098 = vadd.f32 %v882, %v1097
        %v1099 = vpop.f32.mrb[0].mxu0
        %v1100 = vpop.f32.mrb[0].mxu0
        %v1101 = vadd.f32 %v885, %v1100
        %v1102 = vpop.f32.mrb[0].mxu0
        %1103 = vmatprep.mubr.bf16.mxu0 0
        %1104 = vmatmul.mubr.bf16.gmra.mrb[0].mxu0 %v942
        %v1105 = vpop.f32.mrb[0].mxu0
        %v1106 = vadd.f32 %v890, %v1105
        %v1107 = vpop.f32.mrb[0].mxu0
        %v1108 = vpop.f32.mrb[0].mxu0
        %v1109 = vadd.f32 %v893, %v1108
        %v1110 = vpop.f32.mrb[0].mxu0
        %1111 = vmatprep.mubr.bf16.mxu0 0
        %1112 = vmatmul.mubr.bf16.gmra.mrb[0].mxu0 %v944
        %v1113 = vpop.f32.mrb[0].mxu0
        %v1114 = vadd.f32 %v898, %v1113
        %v1115 = vpop.f32.mrb[0].mxu0
        %v1116 = vpop.f32.mrb[0].mxu0
        %v1117 = vadd.f32 %v901, %v1116
        %v1118 = vpop.f32.mrb[0].mxu0
        %1119 = vmatprep.mubr.bf16.mxu0 0
        %1120 = vmatmul.mubr.bf16.gmra.mrb[0].mxu0 %v946
        %v1121 = vpop.f32.mrb[0].mxu0
        %v1122 = vadd.f32 %v906, %v1121
        %v1123 = vpop.f32.mrb[0].mxu0
        %v1124 = vpop.f32.mrb[0].mxu0
        %v1125 = vadd.f32 %v909, %v1124
        %v1126 = vpop.f32.mrb[0].mxu0
        %1127 = vdwg.mxu0
        %v1128 = vld [vmem:[#allocation2] sm:$0xfe]
        %s1129 = scalar_lea.vmem %s2, 4
        %v1130 = vld [vmem:[%s1129] sm:$0x3]
        %vm1150 = vcmask 1046528
        %v1151 = vrot.slane %v1128, 1
        %v1152 = vrot.slane %v507, 1
        %v1153 = vsel %vm1150, %v1151, %v1152
        %v1154 = vrot.slane %v508, 1
        %v1155 = vsel %vm1150, %v1152, %v1154
        %v1156 = vrot.slane %v509, 1
        %v1157 = vsel %vm1150, %v1154, %v1156
        %v1158 = vrot.slane %v510, 1
        %v1159 = vsel %vm1150, %v1156, %v1158
        %v1160 = vrot.slane %v511, 1
        %v1161 = vsel %vm1150, %v1158, %v1160
        %v1162 = vrot.slane %v512, 1
        %v1163 = vsel %vm1150, %v1160, %v1162
        %v1164 = vrot.slane %v513, 1
        %v1165 = vsel %vm1150, %v1162, %v1164
        %v1166 = vrot.slane %v514, 1
        %v1167 = vsel %vm1150, %v1164, %v1166
        %v1168 = vrot.slane %v515, 1
        %v1169 = vsel %vm1150, %v1166, %v1168
        %v1170 = vrot.slane %v516, 1
        %v1171 = vsel %vm1150, %v1168, %v1170
        %v1172 = vrot.slane %v517, 1
        %v1173 = vsel %vm1150, %v1170, %v1172
        %v1174 = vrot.slane %v518, 1
        %v1175 = vsel %vm1150, %v1172, %v1174
        %v1176 = vrot.slane %v519, 1
        %v1177 = vsel %vm1150, %v1174, %v1176
        %v1178 = vrot.slane %v520, 1
        %v1179 = vsel %vm1150, %v1176, %v1178
        %v1180 = vrot.slane %v521, 1
        %v1181 = vsel %vm1150, %v1178, %v1180
        %v1182 = vrot.slane %v522, 1
        %v1183 = vsel %vm1150, %v1180, %v1182
        %v1184 = vrot.slane %v523, 1
        %v1185 = vsel %vm1150, %v1182, %v1184
        %v1186 = vrot.slane %v525, 1
        %v1187 = vsel %vm1150, %v1184, %v1186
        %v1189 = vsel %vm460, %v1153, 0
        %v1192 = vsel %vm460, %v1155, 0
        %v1195 = vsel %vm460, %v1157, 0
        %v1198 = vsel %vm460, %v1159, 0
        %v1201 = vsel %vm460, %v1161, 0
        %v1204 = vsel %vm460, %v1163, 0
        %v1207 = vsel %vm460, %v1165, 0
        %v1210 = vsel %vm460, %v1167, 0
        %v1213 = vsel %vm460, %v1169, 0
        %v1216 = vsel %vm460, %v1171, 0
        %v1219 = vsel %vm460, %v1173, 0
        %v1222 = vsel %vm460, %v1175, 0
        %v1225 = vsel %vm460, %v1177, 0
        %v1228 = vsel %vm460, %v1179, 0
        %v1231 = vsel %vm460, %v1181, 0
        %v1234 = vsel %vm460, %v1183, 0
        %v1237 = vsel %vm460, %v1185, 0
        %v1240 = vsel %vm460, %v1187, 0
        %v1243 = vsel %vm731, %v1130, 0
        %1245 = vmatprep.subr.bf16.mxu0 0
        %1246 = vmatpush1.bf16.msra.mxu0 %v1243
        %1247 = vmatprep.subr.bf16.mxu0 0
        %1248 = vmatpush1.bf16.msra.mxu0 0
        %1249 = vmatprep.subr.bf16.mxu0 0
        %1250 = vmatpush1.bf16.msra.mxu0 0
        %1251 = vmatprep.subr.bf16.mxu0 0
        %1252 = vmatpush1.bf16.msra.mxu0 0
        %1253 = vmatprep.subr.bf16.mxu0 0
        %1254 = vmatpush1.bf16.msra.mxu0 0
        %1255 = vmatprep.subr.bf16.mxu0 0
        %1256 = vmatpush1.bf16.msra.mxu0 0
        %1257 = vmatprep.subr.bf16.mxu0 0
        %1258 = vmatpush1.bf16.msra.mxu0 0
        %1259 = vmatprep.subr.bf16.mxu0 0
        %1260 = vmatpush1.bf16.msra.mxu0 0
        %1261 = vmatprep.subr.bf16.mxu0 0
        %1262 = vmatpush1.bf16.msra.mxu0 0
        %1263 = vmatprep.subr.bf16.mxu0 0
        %1264 = vmatpush1.bf16.msra.mxu0 0
        %1265 = vmatprep.subr.bf16.mxu0 0
        %1266 = vmatpush1.bf16.msra.mxu0 0
        %1267 = vmatprep.subr.bf16.mxu0 0
        %1268 = vmatpush1.bf16.msra.mxu0 0
        %1269 = vmatprep.subr.bf16.mxu0 0
        %1270 = vmatpush1.bf16.msra.mxu0 0
        %1271 = vmatprep.subr.bf16.mxu0 0
        %1272 = vmatpush1.bf16.msra.mxu0 0
        %1273 = vmatprep.subr.bf16.mxu0 0
        %1274 = vmatpush1.bf16.msra.mxu0 0
        %1275 = vmatprep.subr.bf16.mxu0 0
        %1276 = vmatpush1.bf16.msra.mxu0 0
        %1277 = vmatprep.mubr.bf16.mxu0 0
        %1278 = vmatmul.mubr.bf16.gmra.mrb[0].mxu0 %v1189
        %v1279 = vpop.f32.mrb[0].mxu0
        %v1280 = vadd.f32 0.0, %v1279
        %v1281 = vpop.f32.mrb[0].mxu0
        %v1282 = vpop.f32.mrb[0].mxu0
        %v1283 = vadd.f32 0.0, %v1282
        %v1284 = vpop.f32.mrb[0].mxu0
        %1285 = vmatprep.mubr.bf16.mxu0 0
        %1286 = vmatmul.mubr.bf16.gmra.mrb[0].mxu0 %v1192
        %v1287 = vpop.f32.mrb[0].mxu0
        %v1288 = vadd.f32 0.0, %v1287
        %v1289 = vpop.f32.mrb[0].mxu0
        %v1290 = vpop.f32.mrb[0].mxu0
        %v1291 = vadd.f32 0.0, %v1290
        %v1292 = vpop.f32.mrb[0].mxu0
        %1293 = vmatprep.mubr.bf16.mxu0 0
        %1294 = vmatmul.mubr.bf16.gmra.mrb[0].mxu0 %v1195
        %v1295 = vpop.f32.mrb[0].mxu0
        %v1296 = vadd.f32 0.0, %v1295
        %v1297 = vpop.f32.mrb[0].mxu0
        %v1298 = vpop.f32.mrb[0].mxu0
        %v1299 = vadd.f32 0.0, %v1298
        %v1300 = vpop.f32.mrb[0].mxu0
        %1301 = vmatprep.mubr.bf16.mxu0 0
        %1302 = vmatmul.mubr.bf16.gmra.mrb[0].mxu0 %v1198
        %v1303 = vpop.f32.mrb[0].mxu0
        %v1304 = vadd.f32 0.0, %v1303
        %v1305 = vpop.f32.mrb[0].mxu0
        %v1306 = vpop.f32.mrb[0].mxu0
        %v1307 = vadd.f32 0.0, %v1306
        %v1308 = vpop.f32.mrb[0].mxu0
        %1309 = vmatprep.mubr.bf16.mxu0 0
        %1310 = vmatmul.mubr.bf16.gmra.mrb[0].mxu0 %v1201
        %v1311 = vpop.f32.mrb[0].mxu0
        %v1312 = vadd.f32 0.0, %v1311
        %v1313 = vpop.f32.mrb[0].mxu0
        %v1314 = vpop.f32.mrb[0].mxu0
        %v1315 = vadd.f32 0.0, %v1314
        %v1316 = vpop.f32.mrb[0].mxu0
        %1317 = vmatprep.mubr.bf16.mxu0 0
        %1318 = vmatmul.mubr.bf16.gmra.mrb[0].mxu0 %v1204
        %v1319 = vpop.f32.mrb[0].mxu0
        %v1320 = vadd.f32 0.0, %v1319
        %v1321 = vpop.f32.mrb[0].mxu0
        %v1322 = vpop.f32.mrb[0].mxu0
        %v1323 = vadd.f32 0.0, %v1322
        %v1324 = vpop.f32.mrb[0].mxu0
        %1325 = vmatprep.mubr.bf16.mxu0 0
        %1326 = vmatmul.mubr.bf16.gmra.mrb[0].mxu0 %v1207
        %v1327 = vpop.f32.mrb[0].mxu0
        %v1328 = vadd.f32 0.0, %v1327
        %v1329 = vpop.f32.mrb[0].mxu0
        %v1330 = vpop.f32.mrb[0].mxu0
        %v1331 = vadd.f32 0.0, %v1330
        %v1332 = vpop.f32.mrb[0].mxu0
        %1333 = vmatprep.mubr.bf16.mxu0 0
        %1334 = vmatmul.mubr.bf16.gmra.mrb[0].mxu0 %v1210
        %v1335 = vpop.f32.mrb[0].mxu0
        %v1336 = vadd.f32 0.0, %v1335
        %v1337 = vpop.f32.mrb[0].mxu0
        %v1338 = vpop.f32.mrb[0].mxu0
        %v1339 = vadd.f32 0.0, %v1338
        %v1340 = vpop.f32.mrb[0].mxu0
        %1341 = vmatprep.mubr.bf16.mxu0 0
        %1342 = vmatmul.mubr.bf16.gmra.mrb[0].mxu0 %v1213
        %v1343 = vpop.f32.mrb[0].mxu0
        %v1344 = vadd.f32 0.0, %v1343
        %v1345 = vpop.f32.mrb[0].mxu0
        %v1346 = vpop.f32.mrb[0].mxu0
        %v1347 = vadd.f32 0.0, %v1346
        %v1348 = vpop.f32.mrb[0].mxu0
        %1349 = vmatprep.mubr.bf16.mxu0 0
        %1350 = vmatmul.mubr.bf16.gmra.mrb[0].mxu0 %v1216
        %v1351 = vpop.f32.mrb[0].mxu0
        %v1352 = vadd.f32 0.0, %v1351
        %v1353 = vpop.f32.mrb[0].mxu0
        %v1354 = vpop.f32.mrb[0].mxu0
        %v1355 = vadd.f32 0.0, %v1354
        %v1356 = vpop.f32.mrb[0].mxu0
        %1357 = vmatprep.mubr.bf16.mxu0 0
        %1358 = vmatmul.mubr.bf16.gmra.mrb[0].mxu0 %v1219
        %v1359 = vpop.f32.mrb[0].mxu0
        %v1360 = vadd.f32 0.0, %v1359
        %v1361 = vpop.f32.mrb[0].mxu0
        %v1362 = vpop.f32.mrb[0].mxu0
        %v1363 = vadd.f32 0.0, %v1362
        %v1364 = vpop.f32.mrb[0].mxu0
        %1365 = vmatprep.mubr.bf16.mxu0 0
        %1366 = vmatmul.mubr.bf16.gmra.mrb[0].mxu0 %v1222
        %v1367 = vpop.f32.mrb[0].mxu0
        %v1368 = vadd.f32 0.0, %v1367
        %v1369 = vpop.f32.mrb[0].mxu0
        %v1370 = vpop.f32.mrb[0].mxu0
        %v1371 = vadd.f32 0.0, %v1370
        %v1372 = vpop.f32.mrb[0].mxu0
        %1373 = vmatprep.mubr.bf16.mxu0 0
        %1374 = vmatmul.mubr.bf16.gmra.mrb[0].mxu0 %v1225
        %v1375 = vpop.f32.mrb[0].mxu0
        %v1376 = vadd.f32 0.0, %v1375
        %v1377 = vpop.f32.mrb[0].mxu0
        %v1378 = vpop.f32.mrb[0].mxu0
        %v1379 = vadd.f32 0.0, %v1378
        %v1380 = vpop.f32.mrb[0].mxu0
        %1381 = vmatprep.mubr.bf16.mxu0 0
        %1382 = vmatmul.mubr.bf16.gmra.mrb[0].mxu0 %v1228
        %v1383 = vpop.f32.mrb[0].mxu0
        %v1384 = vadd.f32 0.0, %v1383
        %v1385 = vpop.f32.mrb[0].mxu0
        %v1386 = vpop.f32.mrb[0].mxu0
        %v1387 = vadd.f32 0.0, %v1386
        %v1388 = vpop.f32.mrb[0].mxu0
        %1389 = vmatprep.mubr.bf16.mxu0 0
        %1390 = vmatmul.mubr.bf16.gmra.mrb[0].mxu0 %v1231
        %v1391 = vpop.f32.mrb[0].mxu0
        %v1392 = vadd.f32 0.0, %v1391
        %v1393 = vpop.f32.mrb[0].mxu0
        %v1394 = vpop.f32.mrb[0].mxu0
        %v1395 = vadd.f32 0.0, %v1394
        %v1396 = vpop.f32.mrb[0].mxu0
        %1397 = vmatprep.mubr.bf16.mxu0 0
        %1398 = vmatmul.mubr.bf16.gmra.mrb[0].mxu0 %v1234
        %v1399 = vpop.f32.mrb[0].mxu0
        %v1400 = vadd.f32 0.0, %v1399
        %v1401 = vpop.f32.mrb[0].mxu0
        %v1402 = vpop.f32.mrb[0].mxu0
        %v1403 = vadd.f32 0.0, %v1402
        %v1404 = vpop.f32.mrb[0].mxu0
        %1405 = vmatprep.mubr.bf16.mxu0 0
        %1406 = vmatmul.mubr.bf16.gmra.mrb[0].mxu0 %v1237
        %v1407 = vpop.f32.mrb[0].mxu0
        %v1408 = vadd.f32 0.0, %v1407
        %v1409 = vpop.f32.mrb[0].mxu0
        %v1410 = vpop.f32.mrb[0].mxu0
        %v1411 = vadd.f32 0.0, %v1410
        %v1412 = vpop.f32.mrb[0].mxu0
        %1413 = vmatprep.mubr.bf16.mxu0 0
        %1414 = vmatmul.mubr.bf16.gmra.mrb[0].mxu0 %v1240
        %v1415 = vpop.f32.mrb[0].mxu0
        %v1416 = vadd.f32 0.0, %v1415
        %v1417 = vpop.f32.mrb[0].mxu0
        %v1418 = vpop.f32.mrb[0].mxu0
        %v1419 = vadd.f32 0.0, %v1418
        %v1420 = vpop.f32.mrb[0].mxu0
        %1421 = vdwg.mxu0
        %v1422 = vadd.f32 %v986, %v1280
        %v1423 = vadd.f32 %v989, %v1283
        %v1424 = vadd.f32 %v994, %v1288
        %v1425 = vadd.f32 %v997, %v1291
        %v1426 = vadd.f32 %v1002, %v1296
        %v1427 = vadd.f32 %v1005, %v1299
        %v1428 = vadd.f32 %v1010, %v1304
        %v1429 = vadd.f32 %v1013, %v1307
        %v1430 = vadd.f32 %v1018, %v1312
        %v1431 = vadd.f32 %v1021, %v1315
        %v1432 = vadd.f32 %v1026, %v1320
        %v1433 = vadd.f32 %v1029, %v1323
        %v1434 = vadd.f32 %v1034, %v1328
        %v1435 = vadd.f32 %v1037, %v1331
        %v1436 = vadd.f32 %v1042, %v1336
        %v1437 = vadd.f32 %v1045, %v1339
        %v1438 = vadd.f32 %v1050, %v1344
        %v1439 = vadd.f32 %v1053, %v1347
        %v1440 = vadd.f32 %v1058, %v1352
        %v1441 = vadd.f32 %v1061, %v1355
        %v1442 = vadd.f32 %v1066, %v1360
        %v1443 = vadd.f32 %v1069, %v1363
        %v1444 = vadd.f32 %v1074, %v1368
        %v1445 = vadd.f32 %v1077, %v1371
        %v1446 = vadd.f32 %v1082, %v1376
        %v1447 = vadd.f32 %v1085, %v1379
        %v1448 = vadd.f32 %v1090, %v1384
        %v1449 = vadd.f32 %v1093, %v1387
        %v1450 = vadd.f32 %v1098, %v1392
        %v1451 = vadd.f32 %v1101, %v1395
        %v1452 = vadd.f32 %v1106, %v1400
        %v1453 = vadd.f32 %v1109, %v1403
        %v1454 = vadd.f32 %v1114, %v1408
        %v1455 = vadd.f32 %v1117, %v1411
        %v1456 = vadd.f32 %v1122, %v1416
        %v1457 = vadd.f32 %v1125, %v1419
        %v1458 = vld [vmem:[#allocation2 + $0x8] sm:$0xfe]
        %v1459 = vld [vmem:[#allocation2 + $0x10] sm:$0xff]
        %v1460 = vld [vmem:[#allocation2 + $0x18] sm:$0xff]
        %v1461 = vld [vmem:[#allocation2 + $0x20] sm:$0xff]
        %v1462 = vld [vmem:[#allocation2 + $0x28] sm:$0xff]
        %v1463 = vld [vmem:[#allocation2 + $0x30] sm:$0xff]
        %v1464 = vld [vmem:[#allocation2 + $0x38] sm:$0xff]
        %v1465 = vld [vmem:[#allocation2 + $0x40] sm:$0xff]
        %v1466 = vld [vmem:[#allocation2 + $0x48] sm:$0xff]
        %v1467 = vld [vmem:[#allocation2 + $0x50] sm:$0xff]
        %v1468 = vld [vmem:[#allocation2 + $0x58] sm:$0xff]
        %v1469 = vld [vmem:[#allocation2 + $0x60] sm:$0xff]
        %v1470 = vld [vmem:[#allocation2 + $0x68] sm:$0xff]
        %v1471 = vld [vmem:[#allocation2 + $0x70] sm:$0xff]
        %v1472 = vld [vmem:[#allocation2 + $0x78] sm:$0xff]
        %v1473 = vld [vmem:[#allocation2 + $0x80] sm:$0xff]
        %v1474 = vld [vmem:[#allocation2 + $0x88] sm:$0xff]
        %v1475 = vld [vmem:[#allocation2 + $0x90] sm:$0xff]
        %v1476 = vld [vmem:[#allocation2 + $0x98] sm:$0x1]
        %s1477 = scalar_lea.vmem %s2, 6
        %v1478 = vld [vmem:[%s1477] sm:$0x3]
        %v1498 = vrot.slane %v1458, 1
        %v1499 = vrot.slane %v1459, 1
        %v1500 = vsel %vm1150, %v1498, %v1499
        %v1501 = vrot.slane %v1460, 1
        %v1502 = vsel %vm1150, %v1499, %v1501
        %v1503 = vrot.slane %v1461, 1
        %v1504 = vsel %vm1150, %v1501, %v1503
        %v1505 = vrot.slane %v1462, 1
        %v1506 = vsel %vm1150, %v1503, %v1505
        %v1507 = vrot.slane %v1463, 1
        %v1508 = vsel %vm1150, %v1505, %v1507
        %v1509 = vrot.slane %v1464, 1
        %v1510 = vsel %vm1150, %v1507, %v1509
        %v1511 = vrot.slane %v1465, 1
        %v1512 = vsel %vm1150, %v1509, %v1511
        %v1513 = vrot.slane %v1466, 1
        %v1514 = vsel %vm1150, %v1511, %v1513
        %v1515 = vrot.slane %v1467, 1
        %v1516 = vsel %vm1150, %v1513, %v1515
        %v1517 = vrot.slane %v1468, 1
        %v1518 = vsel %vm1150, %v1515, %v1517
        %v1519 = vrot.slane %v1469, 1
        %v1520 = vsel %vm1150, %v1517, %v1519
        %v1521 = vrot.slane %v1470, 1
        %v1522 = vsel %vm1150, %v1519, %v1521
        %v1523 = vrot.slane %v1471, 1
        %v1524 = vsel %vm1150, %v1521, %v1523
        %v1525 = vrot.slane %v1472, 1
        %v1526 = vsel %vm1150, %v1523, %v1525
        %v1527 = vrot.slane %v1473, 1
        %v1528 = vsel %vm1150, %v1525, %v1527
        %v1529 = vrot.slane %v1474, 1
        %v1530 = vsel %vm1150, %v1527, %v1529
        %v1531 = vrot.slane %v1475, 1
        %v1532 = vsel %vm1150, %v1529, %v1531
        %v1533 = vrot.slane %v1476, 1
        %v1534 = vsel %vm1150, %v1531, %v1533
        %v1536 = vsel %vm460, %v1500, 0
        %v1539 = vsel %vm460, %v1502, 0
        %v1542 = vsel %vm460, %v1504, 0
        %v1545 = vsel %vm460, %v1506, 0
        %v1548 = vsel %vm460, %v1508, 0
        %v1551 = vsel %vm460, %v1510, 0
        %v1554 = vsel %vm460, %v1512, 0
        %v1557 = vsel %vm460, %v1514, 0
        %v1560 = vsel %vm460, %v1516, 0
        %v1563 = vsel %vm460, %v1518, 0
        %v1566 = vsel %vm460, %v1520, 0
        %v1569 = vsel %vm460, %v1522, 0
        %v1572 = vsel %vm460, %v1524, 0
        %v1575 = vsel %vm460, %v1526, 0
        %v1578 = vsel %vm460, %v1528, 0
        %v1581 = vsel %vm460, %v1530, 0
        %v1584 = vsel %vm460, %v1532, 0
        %v1587 = vsel %vm460, %v1534, 0
        %v1590 = vsel %vm731, %v1478, 0
        %1592 = vmatprep.subr.bf16.mxu0 0
        %1593 = vmatpush1.bf16.msra.mxu0 %v1590
        %1594 = vmatprep.subr.bf16.mxu0 0
        %1595 = vmatpush1.bf16.msra.mxu0 0
        %1596 = vmatprep.subr.bf16.mxu0 0
        %1597 = vmatpush1.bf16.msra.mxu0 0
        %1598 = vmatprep.subr.bf16.mxu0 0
        %1599 = vmatpush1.bf16.msra.mxu0 0
        %1600 = vmatprep.subr.bf16.mxu0 0
        %1601 = vmatpush1.bf16.msra.mxu0 0
        %1602 = vmatprep.subr.bf16.mxu0 0
        %1603 = vmatpush1.bf16.msra.mxu0 0
        %1604 = vmatprep.subr.bf16.mxu0 0
        %1605 = vmatpush1.bf16.msra.mxu0 0
        %1606 = vmatprep.subr.bf16.mxu0 0
        %1607 = vmatpush1.bf16.msra.mxu0 0
        %1608 = vmatprep.subr.bf16.mxu0 0
        %1609 = vmatpush1.bf16.msra.mxu0 0
        %1610 = vmatprep.subr.bf16.mxu0 0
        %1611 = vmatpush1.bf16.msra.mxu0 0
        %1612 = vmatprep.subr.bf16.mxu0 0
        %1613 = vmatpush1.bf16.msra.mxu0 0
        %1614 = vmatprep.subr.bf16.mxu0 0
        %1615 = vmatpush1.bf16.msra.mxu0 0
        %1616 = vmatprep.subr.bf16.mxu0 0
        %1617 = vmatpush1.bf16.msra.mxu0 0
        %1618 = vmatprep.subr.bf16.mxu0 0
        %1619 = vmatpush1.bf16.msra.mxu0 0
        %1620 = vmatprep.subr.bf16.mxu0 0
        %1621 = vmatpush1.bf16.msra.mxu0 0
        %1622 = vmatprep.subr.bf16.mxu0 0
        %1623 = vmatpush1.bf16.msra.mxu0 0
        %1624 = vmatprep.mubr.bf16.mxu0 0
        %1625 = vmatmul.mubr.bf16.gmra.mrb[0].mxu0 %v1536
        %v1626 = vpop.f32.mrb[0].mxu0
        %v1627 = vadd.f32 0.0, %v1626
        %v1628 = vpop.f32.mrb[0].mxu0
        %v1629 = vpop.f32.mrb[0].mxu0
        %v1630 = vadd.f32 0.0, %v1629
        %v1631 = vpop.f32.mrb[0].mxu0
        %1632 = vmatprep.mubr.bf16.mxu0 0
        %1633 = vmatmul.mubr.bf16.gmra.mrb[0].mxu0 %v1539
        %v1634 = vpop.f32.mrb[0].mxu0
        %v1635 = vadd.f32 0.0, %v1634
        %v1636 = vpop.f32.mrb[0].mxu0
        %v1637 = vpop.f32.mrb[0].mxu0
        %v1638 = vadd.f32 0.0, %v1637
        %v1639 = vpop.f32.mrb[0].mxu0
        %1640 = vmatprep.mubr.bf16.mxu0 0
        %1641 = vmatmul.mubr.bf16.gmra.mrb[0].mxu0 %v1542
        %v1642 = vpop.f32.mrb[0].mxu0
        %v1643 = vadd.f32 0.0, %v1642
        %v1644 = vpop.f32.mrb[0].mxu0
        %v1645 = vpop.f32.mrb[0].mxu0
        %v1646 = vadd.f32 0.0, %v1645
        %v1647 = vpop.f32.mrb[0].mxu0
        %1648 = vmatprep.mubr.bf16.mxu0 0
        %1649 = vmatmul.mubr.bf16.gmra.mrb[0].mxu0 %v1545
        %v1650 = vpop.f32.mrb[0].mxu0
        %v1651 = vadd.f32 0.0, %v1650
        %v1652 = vpop.f32.mrb[0].mxu0
        %v1653 = vpop.f32.mrb[0].mxu0
        %v1654 = vadd.f32 0.0, %v1653
        %v1655 = vpop.f32.mrb[0].mxu0
        %1656 = vmatprep.mubr.bf16.mxu0 0
        %1657 = vmatmul.mubr.bf16.gmra.mrb[0].mxu0 %v1548
        %v1658 = vpop.f32.mrb[0].mxu0
        %v1659 = vadd.f32 0.0, %v1658
        %v1660 = vpop.f32.mrb[0].mxu0
        %v1661 = vpop.f32.mrb[0].mxu0
        %v1662 = vadd.f32 0.0, %v1661
        %v1663 = vpop.f32.mrb[0].mxu0
        %1664 = vmatprep.mubr.bf16.mxu0 0
        %1665 = vmatmul.mubr.bf16.gmra.mrb[0].mxu0 %v1551
        %v1666 = vpop.f32.mrb[0].mxu0
        %v1667 = vadd.f32 0.0, %v1666
        %v1668 = vpop.f32.mrb[0].mxu0
        %v1669 = vpop.f32.mrb[0].mxu0
        %v1670 = vadd.f32 0.0, %v1669
        %v1671 = vpop.f32.mrb[0].mxu0
        %1672 = vmatprep.mubr.bf16.mxu0 0
        %1673 = vmatmul.mubr.bf16.gmra.mrb[0].mxu0 %v1554
        %v1674 = vpop.f32.mrb[0].mxu0
        %v1675 = vadd.f32 0.0, %v1674
        %v1676 = vpop.f32.mrb[0].mxu0
        %v1677 = vpop.f32.mrb[0].mxu0
        %v1678 = vadd.f32 0.0, %v1677
        %v1679 = vpop.f32.mrb[0].mxu0
        %1680 = vmatprep.mubr.bf16.mxu0 0
        %1681 = vmatmul.mubr.bf16.gmra.mrb[0].mxu0 %v1557
        %v1682 = vpop.f32.mrb[0].mxu0
        %v1683 = vadd.f32 0.0, %v1682
        %v1684 = vpop.f32.mrb[0].mxu0
        %v1685 = vpop.f32.mrb[0].mxu0
        %v1686 = vadd.f32 0.0, %v1685
        %v1687 = vpop.f32.mrb[0].mxu0
        %1688 = vmatprep.mubr.bf16.mxu0 0
        %1689 = vmatmul.mubr.bf16.gmra.mrb[0].mxu0 %v1560
        %v1690 = vpop.f32.mrb[0].mxu0
        %v1691 = vadd.f32 0.0, %v1690
        %v1692 = vpop.f32.mrb[0].mxu0
        %v1693 = vpop.f32.mrb[0].mxu0
        %v1694 = vadd.f32 0.0, %v1693
        %v1695 = vpop.f32.mrb[0].mxu0
        %1696 = vmatprep.mubr.bf16.mxu0 0
        %1697 = vmatmul.mubr.bf16.gmra.mrb[0].mxu0 %v1563
        %v1698 = vpop.f32.mrb[0].mxu0
        %v1699 = vadd.f32 0.0, %v1698
        %v1700 = vpop.f32.mrb[0].mxu0
        %v1701 = vpop.f32.mrb[0].mxu0
        %v1702 = vadd.f32 0.0, %v1701
        %v1703 = vpop.f32.mrb[0].mxu0
        %1704 = vmatprep.mubr.bf16.mxu0 0
        %1705 = vmatmul.mubr.bf16.gmra.mrb[0].mxu0 %v1566
        %v1706 = vpop.f32.mrb[0].mxu0
        %v1707 = vadd.f32 0.0, %v1706
        %v1708 = vpop.f32.mrb[0].mxu0
        %v1709 = vpop.f32.mrb[0].mxu0
        %v1710 = vadd.f32 0.0, %v1709
        %v1711 = vpop.f32.mrb[0].mxu0
        %1712 = vmatprep.mubr.bf16.mxu0 0
        %1713 = vmatmul.mubr.bf16.gmra.mrb[0].mxu0 %v1569
        %v1714 = vpop.f32.mrb[0].mxu0
        %v1715 = vadd.f32 0.0, %v1714
        %v1716 = vpop.f32.mrb[0].mxu0
        %v1717 = vpop.f32.mrb[0].mxu0
        %v1718 = vadd.f32 0.0, %v1717
        %v1719 = vpop.f32.mrb[0].mxu0
        %1720 = vmatprep.mubr.bf16.mxu0 0
        %1721 = vmatmul.mubr.bf16.gmra.mrb[0].mxu0 %v1572
        %v1722 = vpop.f32.mrb[0].mxu0
        %v1723 = vadd.f32 0.0, %v1722
        %v1724 = vpop.f32.mrb[0].mxu0
        %v1725 = vpop.f32.mrb[0].mxu0
        %v1726 = vadd.f32 0.0, %v1725
        %v1727 = vpop.f32.mrb[0].mxu0
        %1728 = vmatprep.mubr.bf16.mxu0 0
        %1729 = vmatmul.mubr.bf16.gmra.mrb[0].mxu0 %v1575
        %v1730 = vpop.f32.mrb[0].mxu0
        %v1731 = vadd.f32 0.0, %v1730
        %v1732 = vpop.f32.mrb[0].mxu0
        %v1733 = vpop.f32.mrb[0].mxu0
        %v1734 = vadd.f32 0.0, %v1733
        %v1735 = vpop.f32.mrb[0].mxu0
        %1736 = vmatprep.mubr.bf16.mxu0 0
        %1737 = vmatmul.mubr.bf16.gmra.mrb[0].mxu0 %v1578
        %v1738 = vpop.f32.mrb[0].mxu0
        %v1739 = vadd.f32 0.0, %v1738
        %v1740 = vpop.f32.mrb[0].mxu0
        %v1741 = vpop.f32.mrb[0].mxu0
        %v1742 = vadd.f32 0.0, %v1741
        %v1743 = vpop.f32.mrb[0].mxu0
        %1744 = vmatprep.mubr.bf16.mxu0 0
        %1745 = vmatmul.mubr.bf16.gmra.mrb[0].mxu0 %v1581
        %v1746 = vpop.f32.mrb[0].mxu0
        %v1747 = vadd.f32 0.0, %v1746
        %v1748 = vpop.f32.mrb[0].mxu0
        %v1749 = vpop.f32.mrb[0].mxu0
        %v1750 = vadd.f32 0.0, %v1749
        %v1751 = vpop.f32.mrb[0].mxu0
        %1752 = vmatprep.mubr.bf16.mxu0 0
        %1753 = vmatmul.mubr.bf16.gmra.mrb[0].mxu0 %v1584
        %v1754 = vpop.f32.mrb[0].mxu0
        %v1755 = vadd.f32 0.0, %v1754
        %v1756 = vpop.f32.mrb[0].mxu0
        %v1757 = vpop.f32.mrb[0].mxu0
        %v1758 = vadd.f32 0.0, %v1757
        %v1759 = vpop.f32.mrb[0].mxu0
        %1760 = vmatprep.mubr.bf16.mxu0 0
        %1761 = vmatmul.mubr.bf16.gmra.mrb[0].mxu0 %v1587
        %v1762 = vpop.f32.mrb[0].mxu0
        %v1763 = vadd.f32 0.0, %v1762
        %v1764 = vpop.f32.mrb[0].mxu0
        %v1765 = vpop.f32.mrb[0].mxu0
        %v1766 = vadd.f32 0.0, %v1765
        %v1767 = vpop.f32.mrb[0].mxu0
        %1768 = vdwg.mxu0
        %v1769 = vadd.f32 %v1422, %v1627
        %v1770 = vadd.f32 %v1423, %v1630
        %v1771 = vadd.f32 %v1424, %v1635
        %v1772 = vadd.f32 %v1425, %v1638
        %v1773 = vadd.f32 %v1426, %v1643
        %v1774 = vadd.f32 %v1427, %v1646
        %v1775 = vadd.f32 %v1428, %v1651
        %v1776 = vadd.f32 %v1429, %v1654
        %v1777 = vadd.f32 %v1430, %v1659
        %v1778 = vadd.f32 %v1431, %v1662
        %v1779 = vadd.f32 %v1432, %v1667
        %v1780 = vadd.f32 %v1433, %v1670
        %v1781 = vadd.f32 %v1434, %v1675
        %v1782 = vadd.f32 %v1435, %v1678
        %v1783 = vadd.f32 %v1436, %v1683
        %v1784 = vadd.f32 %v1437, %v1686
        %v1785 = vadd.f32 %v1438, %v1691
        %v1786 = vadd.f32 %v1439, %v1694
        %v1787 = vadd.f32 %v1440, %v1699
        %v1788 = vadd.f32 %v1441, %v1702
        %v1789 = vadd.f32 %v1442, %v1707
        %v1790 = vadd.f32 %v1443, %v1710
        %v1791 = vadd.f32 %v1444, %v1715
        %v1792 = vadd.f32 %v1445, %v1718
        %v1793 = vadd.f32 %v1446, %v1723
        %v1794 = vadd.f32 %v1447, %v1726
        %v1795 = vadd.f32 %v1448, %v1731
        %v1796 = vadd.f32 %v1449, %v1734
        %v1797 = vadd.f32 %v1450, %v1739
        %v1798 = vadd.f32 %v1451, %v1742
        %v1799 = vadd.f32 %v1452, %v1747
        %v1800 = vadd.f32 %v1453, %v1750
        %v1801 = vadd.f32 %v1454, %v1755
        %v1802 = vadd.f32 %v1455, %v1758
        %v1803 = vadd.f32 %v1456, %v1763
        %v1804 = vadd.f32 %v1457, %v1766
        %v1805 = vld [vmem:[#allocation2 + $0x98] sm:$0x3]
        %s1806 = scalar_lea.vmem %s2, 8
        %v1807 = vld [vmem:[%s1806] sm:$0x3]
        %vm1808 = vsmask.f32 6400
        %v1810 = vshrl.u32 %v1458, 16
        %v1812 = vrot.slane %v1810, 1
        %v1813 = vshll.u32 %v1458, 16
        %v1815 = vrot.slane %v1813, 2
        %v1816 = vor.u32 %v1812, %v1815
        %v1818 = vshrl.u32 %v1459, 16
        %v1820 = vrot.slane %v1818, 1
        %v1821 = vshll.u32 %v1459, 16
        %v1823 = vrot.slane %v1821, 2
        %v1824 = vor.u32 %v1820, %v1823
        %v1825 = vsel %vm1808, %v1816, %v1824
        %v1827 = vshrl.u32 %v1460, 16
        %v1829 = vrot.slane %v1827, 1
        %v1830 = vshll.u32 %v1460, 16
        %v1832 = vrot.slane %v1830, 2
        %v1833 = vor.u32 %v1829, %v1832
        %v1834 = vsel %vm1808, %v1824, %v1833
        %v1836 = vshrl.u32 %v1461, 16
        %v1838 = vrot.slane %v1836, 1
        %v1839 = vshll.u32 %v1461, 16
        %v1841 = vrot.slane %v1839, 2
        %v1842 = vor.u32 %v1838, %v1841
        %v1843 = vsel %vm1808, %v1833, %v1842
        %v1845 = vshrl.u32 %v1462, 16
        %v1847 = vrot.slane %v1845, 1
        %v1848 = vshll.u32 %v1462, 16
        %v1850 = vrot.slane %v1848, 2
        %v1851 = vor.u32 %v1847, %v1850
        %v1852 = vsel %vm1808, %v1842, %v1851
        %v1854 = vshrl.u32 %v1463, 16
        %v1856 = vrot.slane %v1854, 1
        %v1857 = vshll.u32 %v1463, 16
        %v1859 = vrot.slane %v1857, 2
        %v1860 = vor.u32 %v1856, %v1859
        %v1861 = vsel %vm1808, %v1851, %v1860
        %v1863 = vshrl.u32 %v1464, 16
        %v1865 = vrot.slane %v1863, 1
        %v1866 = vshll.u32 %v1464, 16
        %v1868 = vrot.slane %v1866, 2
        %v1869 = vor.u32 %v1865, %v1868
        %v1870 = vsel %vm1808, %v1860, %v1869
        %v1872 = vshrl.u32 %v1465, 16
        %v1874 = vrot.slane %v1872, 1
        %v1875 = vshll.u32 %v1465, 16
        %v1877 = vrot.slane %v1875, 2
        %v1878 = vor.u32 %v1874, %v1877
        %v1879 = vsel %vm1808, %v1869, %v1878
        %v1881 = vshrl.u32 %v1466, 16
        %v1883 = vrot.slane %v1881, 1
        %v1884 = vshll.u32 %v1466, 16
        %v1886 = vrot.slane %v1884, 2
        %v1887 = vor.u32 %v1883, %v1886
        %v1888 = vsel %vm1808, %v1878, %v1887
        %v1890 = vshrl.u32 %v1467, 16
        %v1892 = vrot.slane %v1890, 1
        %v1893 = vshll.u32 %v1467, 16
        %v1895 = vrot.slane %v1893, 2
        %v1896 = vor.u32 %v1892, %v1895
        %v1897 = vsel %vm1808, %v1887, %v1896
        %v1899 = vshrl.u32 %v1468, 16
        %v1901 = vrot.slane %v1899, 1
        %v1902 = vshll.u32 %v1468, 16
        %v1904 = vrot.slane %v1902, 2
        %v1905 = vor.u32 %v1901, %v1904
        %v1906 = vsel %vm1808, %v1896, %v1905
        %v1908 = vshrl.u32 %v1469, 16
        %v1910 = vrot.slane %v1908, 1
        %v1911 = vshll.u32 %v1469, 16
        %v1913 = vrot.slane %v1911, 2
        %v1914 = vor.u32 %v1910, %v1913
        %v1915 = vsel %vm1808, %v1905, %v1914
        %v1917 = vshrl.u32 %v1470, 16
        %v1919 = vrot.slane %v1917, 1
        %v1920 = vshll.u32 %v1470, 16
        %v1922 = vrot.slane %v1920, 2
        %v1923 = vor.u32 %v1919, %v1922
        %v1924 = vsel %vm1808, %v1914, %v1923
        %v1926 = vshrl.u32 %v1471, 16
        %v1928 = vrot.slane %v1926, 1
        %v1929 = vshll.u32 %v1471, 16
        %v1931 = vrot.slane %v1929, 2
        %v1932 = vor.u32 %v1928, %v1931
        %v1933 = vsel %vm1808, %v1923, %v1932
        %v1935 = vshrl.u32 %v1472, 16
        %v1937 = vrot.slane %v1935, 1
        %v1938 = vshll.u32 %v1472, 16
        %v1940 = vrot.slane %v1938, 2
        %v1941 = vor.u32 %v1937, %v1940
        %v1942 = vsel %vm1808, %v1932, %v1941
        %v1944 = vshrl.u32 %v1473, 16
        %v1946 = vrot.slane %v1944, 1
        %v1947 = vshll.u32 %v1473, 16
        %v1949 = vrot.slane %v1947, 2
        %v1950 = vor.u32 %v1946, %v1949
        %v1951 = vsel %vm1808, %v1941, %v1950
        %v1953 = vshrl.u32 %v1474, 16
        %v1955 = vrot.slane %v1953, 1
        %v1956 = vshll.u32 %v1474, 16
        %v1958 = vrot.slane %v1956, 2
        %v1959 = vor.u32 %v1955, %v1958
        %v1960 = vsel %vm1808, %v1950, %v1959
        %v1962 = vshrl.u32 %v1475, 16
        %v1964 = vrot.slane %v1962, 1
        %v1965 = vshll.u32 %v1475, 16
        %v1967 = vrot.slane %v1965, 2
        %v1968 = vor.u32 %v1964, %v1967
        %v1969 = vsel %vm1808, %v1959, %v1968
        %v1971 = vshrl.u32 %v1805, 16
        %v1973 = vrot.slane %v1971, 1
        %v1974 = vshll.u32 %v1805, 16
        %v1976 = vrot.slane %v1974, 2
        %v1977 = vor.u32 %v1973, %v1976
        %v1978 = vsel %vm1808, %v1968, %v1977
        %v1980 = vsel %vm460, %v1825, 0
        %v1983 = vsel %vm460, %v1834, 0
        %v1986 = vsel %vm460, %v1843, 0
        %v1989 = vsel %vm460, %v1852, 0
        %v1992 = vsel %vm460, %v1861, 0
        %v1995 = vsel %vm460, %v1870, 0
        %v1998 = vsel %vm460, %v1879, 0
        %v2001 = vsel %vm460, %v1888, 0
        %v2004 = vsel %vm460, %v1897, 0
        %v2007 = vsel %vm460, %v1906, 0
        %v2010 = vsel %vm460, %v1915, 0
        %v2013 = vsel %vm460, %v1924, 0
        %v2016 = vsel %vm460, %v1933, 0
        %v2019 = vsel %vm460, %v1942, 0
        %v2022 = vsel %vm460, %v1951, 0
        %v2025 = vsel %vm460, %v1960, 0
        %v2028 = vsel %vm460, %v1969, 0
        %v2031 = vsel %vm460, %v1978, 0
        %v2034 = vsel %vm731, %v1807, 0
        %2036 = vmatprep.subr.bf16.mxu0 0
        %2037 = vmatpush1.bf16.msra.mxu0 %v2034
        %2038 = vmatprep.subr.bf16.mxu0 0
        %2039 = vmatpush1.bf16.msra.mxu0 0
        %2040 = vmatprep.subr.bf16.mxu0 0
        %2041 = vmatpush1.bf16.msra.mxu0 0
        %2042 = vmatprep.subr.bf16.mxu0 0
        %2043 = vmatpush1.bf16.msra.mxu0 0
        %2044 = vmatprep.subr.bf16.mxu0 0
        %2045 = vmatpush1.bf16.msra.mxu0 0
        %2046 = vmatprep.subr.bf16.mxu0 0
        %2047 = vmatpush1.bf16.msra.mxu0 0
        %2048 = vmatprep.subr.bf16.mxu0 0
        %2049 = vmatpush1.bf16.msra.mxu0 0
        %2050 = vmatprep.subr.bf16.mxu0 0
        %2051 = vmatpush1.bf16.msra.mxu0 0
        %2052 = vmatprep.subr.bf16.mxu0 0
        %2053 = vmatpush1.bf16.msra.mxu0 0
        %2054 = vmatprep.subr.bf16.mxu0 0
        %2055 = vmatpush1.bf16.msra.mxu0 0
        %2056 = vmatprep.subr.bf16.mxu0 0
        %2057 = vmatpush1.bf16.msra.mxu0 0
        %2058 = vmatprep.subr.bf16.mxu0 0
        %2059 = vmatpush1.bf16.msra.mxu0 0
        %2060 = vmatprep.subr.bf16.mxu0 0
        %2061 = vmatpush1.bf16.msra.mxu0 0
        %2062 = vmatprep.subr.bf16.mxu0 0
        %2063 = vmatpush1.bf16.msra.mxu0 0
        %2064 = vmatprep.subr.bf16.mxu0 0
        %2065 = vmatpush1.bf16.msra.mxu0 0
        %2066 = vmatprep.subr.bf16.mxu0 0
        %2067 = vmatpush1.bf16.msra.mxu0 0
        %2068 = vmatprep.mubr.bf16.mxu0 0
        %2069 = vmatmul.mubr.bf16.gmra.mrb[0].mxu0 %v1980
        %v2070 = vpop.f32.mrb[0].mxu0
        %v2071 = vadd.f32 0.0, %v2070
        %v2072 = vpop.f32.mrb[0].mxu0
        %v2073 = vpop.f32.mrb[0].mxu0
        %v2074 = vadd.f32 0.0, %v2073
        %v2075 = vpop.f32.mrb[0].mxu0
        %2076 = vmatprep.mubr.bf16.mxu0 0
        %2077 = vmatmul.mubr.bf16.gmra.mrb[0].mxu0 %v1983
        %v2078 = vpop.f32.mrb[0].mxu0
        %v2079 = vadd.f32 0.0, %v2078
        %v2080 = vpop.f32.mrb[0].mxu0
        %v2081 = vpop.f32.mrb[0].mxu0
        %v2082 = vadd.f32 0.0, %v2081
        %v2083 = vpop.f32.mrb[0].mxu0
        %2084 = vmatprep.mubr.bf16.mxu0 0
        %2085 = vmatmul.mubr.bf16.gmra.mrb[0].mxu0 %v1986
        %v2086 = vpop.f32.mrb[0].mxu0
        %v2087 = vadd.f32 0.0, %v2086
        %v2088 = vpop.f32.mrb[0].mxu0
        %v2089 = vpop.f32.mrb[0].mxu0
        %v2090 = vadd.f32 0.0, %v2089
        %v2091 = vpop.f32.mrb[0].mxu0
        %2092 = vmatprep.mubr.bf16.mxu0 0
        %2093 = vmatmul.mubr.bf16.gmra.mrb[0].mxu0 %v1989
        %v2094 = vpop.f32.mrb[0].mxu0
        %v2095 = vadd.f32 0.0, %v2094
        %v2096 = vpop.f32.mrb[0].mxu0
        %v2097 = vpop.f32.mrb[0].mxu0
        %v2098 = vadd.f32 0.0, %v2097
        %v2099 = vpop.f32.mrb[0].mxu0
        %2100 = vmatprep.mubr.bf16.mxu0 0
        %2101 = vmatmul.mubr.bf16.gmra.mrb[0].mxu0 %v1992
        %v2102 = vpop.f32.mrb[0].mxu0
        %v2103 = vadd.f32 0.0, %v2102
        %v2104 = vpop.f32.mrb[0].mxu0
        %v2105 = vpop.f32.mrb[0].mxu0
        %v2106 = vadd.f32 0.0, %v2105
        %v2107 = vpop.f32.mrb[0].mxu0
        %2108 = vmatprep.mubr.bf16.mxu0 0
        %2109 = vmatmul.mubr.bf16.gmra.mrb[0].mxu0 %v1995
        %v2110 = vpop.f32.mrb[0].mxu0
        %v2111 = vadd.f32 0.0, %v2110
        %v2112 = vpop.f32.mrb[0].mxu0
        %v2113 = vpop.f32.mrb[0].mxu0
        %v2114 = vadd.f32 0.0, %v2113
        %v2115 = vpop.f32.mrb[0].mxu0
        %2116 = vmatprep.mubr.bf16.mxu0 0
        %2117 = vmatmul.mubr.bf16.gmra.mrb[0].mxu0 %v1998
        %v2118 = vpop.f32.mrb[0].mxu0
        %v2119 = vadd.f32 0.0, %v2118
        %v2120 = vpop.f32.mrb[0].mxu0
        %v2121 = vpop.f32.mrb[0].mxu0
        %v2122 = vadd.f32 0.0, %v2121
        %v2123 = vpop.f32.mrb[0].mxu0
        %2124 = vmatprep.mubr.bf16.mxu0 0
        %2125 = vmatmul.mubr.bf16.gmra.mrb[0].mxu0 %v2001
        %v2126 = vpop.f32.mrb[0].mxu0
        %v2127 = vadd.f32 0.0, %v2126
        %v2128 = vpop.f32.mrb[0].mxu0
        %v2129 = vpop.f32.mrb[0].mxu0
        %v2130 = vadd.f32 0.0, %v2129
        %v2131 = vpop.f32.mrb[0].mxu0
        %2132 = vmatprep.mubr.bf16.mxu0 0
        %2133 = vmatmul.mubr.bf16.gmra.mrb[0].mxu0 %v2004
        %v2134 = vpop.f32.mrb[0].mxu0
        %v2135 = vadd.f32 0.0, %v2134
        %v2136 = vpop.f32.mrb[0].mxu0
        %v2137 = vpop.f32.mrb[0].mxu0
        %v2138 = vadd.f32 0.0, %v2137
        %v2139 = vpop.f32.mrb[0].mxu0
        %2140 = vmatprep.mubr.bf16.mxu0 0
        %2141 = vmatmul.mubr.bf16.gmra.mrb[0].mxu0 %v2007
        %v2142 = vpop.f32.mrb[0].mxu0
        %v2143 = vadd.f32 0.0, %v2142
        %v2144 = vpop.f32.mrb[0].mxu0
        %v2145 = vpop.f32.mrb[0].mxu0
        %v2146 = vadd.f32 0.0, %v2145
        %v2147 = vpop.f32.mrb[0].mxu0
        %2148 = vmatprep.mubr.bf16.mxu0 0
        %2149 = vmatmul.mubr.bf16.gmra.mrb[0].mxu0 %v2010
        %v2150 = vpop.f32.mrb[0].mxu0
        %v2151 = vadd.f32 0.0, %v2150
        %v2152 = vpop.f32.mrb[0].mxu0
        %v2153 = vpop.f32.mrb[0].mxu0
        %v2154 = vadd.f32 0.0, %v2153
        %v2155 = vpop.f32.mrb[0].mxu0
        %2156 = vmatprep.mubr.bf16.mxu0 0
        %2157 = vmatmul.mubr.bf16.gmra.mrb[0].mxu0 %v2013
        %v2158 = vpop.f32.mrb[0].mxu0
        %v2159 = vadd.f32 0.0, %v2158
        %v2160 = vpop.f32.mrb[0].mxu0
        %v2161 = vpop.f32.mrb[0].mxu0
        %v2162 = vadd.f32 0.0, %v2161
        %v2163 = vpop.f32.mrb[0].mxu0
        %2164 = vmatprep.mubr.bf16.mxu0 0
        %2165 = vmatmul.mubr.bf16.gmra.mrb[0].mxu0 %v2016
        %v2166 = vpop.f32.mrb[0].mxu0
        %v2167 = vadd.f32 0.0, %v2166
        %v2168 = vpop.f32.mrb[0].mxu0
        %v2169 = vpop.f32.mrb[0].mxu0
        %v2170 = vadd.f32 0.0, %v2169
        %v2171 = vpop.f32.mrb[0].mxu0
        %2172 = vmatprep.mubr.bf16.mxu0 0
        %2173 = vmatmul.mubr.bf16.gmra.mrb[0].mxu0 %v2019
        %v2174 = vpop.f32.mrb[0].mxu0
        %v2175 = vadd.f32 0.0, %v2174
        %v2176 = vpop.f32.mrb[0].mxu0
        %v2177 = vpop.f32.mrb[0].mxu0
        %v2178 = vadd.f32 0.0, %v2177
        %v2179 = vpop.f32.mrb[0].mxu0
        %2180 = vmatprep.mubr.bf16.mxu0 0
        %2181 = vmatmul.mubr.bf16.gmra.mrb[0].mxu0 %v2022
        %v2182 = vpop.f32.mrb[0].mxu0
        %v2183 = vadd.f32 0.0, %v2182
        %v2184 = vpop.f32.mrb[0].mxu0
        %v2185 = vpop.f32.mrb[0].mxu0
        %v2186 = vadd.f32 0.0, %v2185
        %v2187 = vpop.f32.mrb[0].mxu0
        %2188 = vmatprep.mubr.bf16.mxu0 0
        %2189 = vmatmul.mubr.bf16.gmra.mrb[0].mxu0 %v2025
        %v2190 = vpop.f32.mrb[0].mxu0
        %v2191 = vadd.f32 0.0, %v2190
        %v2192 = vpop.f32.mrb[0].mxu0
        %v2193 = vpop.f32.mrb[0].mxu0
        %v2194 = vadd.f32 0.0, %v2193
        %v2195 = vpop.f32.mrb[0].mxu0
        %2196 = vmatprep.mubr.bf16.mxu0 0
        %2197 = vmatmul.mubr.bf16.gmra.mrb[0].mxu0 %v2028
        %v2198 = vpop.f32.mrb[0].mxu0
        %v2199 = vadd.f32 0.0, %v2198
        %v2200 = vpop.f32.mrb[0].mxu0
        %v2201 = vpop.f32.mrb[0].mxu0
        %v2202 = vadd.f32 0.0, %v2201
        %v2203 = vpop.f32.mrb[0].mxu0
        %2204 = vmatprep.mubr.bf16.mxu0 0
        %2205 = vmatmul.mubr.bf16.gmra.mrb[0].mxu0 %v2031
        %v2206 = vpop.f32.mrb[0].mxu0
        %v2207 = vadd.f32 0.0, %v2206
        %v2208 = vpop.f32.mrb[0].mxu0
        %v2209 = vpop.f32.mrb[0].mxu0
        %v2210 = vadd.f32 0.0, %v2209
        %v2211 = vpop.f32.mrb[0].mxu0
        %2212 = vdwg.mxu0
        %v2213 = vadd.f32 %v1769, %v2071
        %v2214 = vadd.f32 %v1770, %v2074
        %v2215 = vadd.f32 %v1771, %v2079
        %v2216 = vadd.f32 %v1772, %v2082
        %v2217 = vadd.f32 %v1773, %v2087
        %v2218 = vadd.f32 %v1774, %v2090
        %v2219 = vadd.f32 %v1775, %v2095
        %v2220 = vadd.f32 %v1776, %v2098
        %v2221 = vadd.f32 %v1777, %v2103
        %v2222 = vadd.f32 %v1778, %v2106
        %v2223 = vadd.f32 %v1779, %v2111
        %v2224 = vadd.f32 %v1780, %v2114
        %v2225 = vadd.f32 %v1781, %v2119
        %v2226 = vadd.f32 %v1782, %v2122
        %v2227 = vadd.f32 %v1783, %v2127
        %v2228 = vadd.f32 %v1784, %v2130
        %v2229 = vadd.f32 %v1785, %v2135
        %v2230 = vadd.f32 %v1786, %v2138
        %v2231 = vadd.f32 %v1787, %v2143
        %v2232 = vadd.f32 %v1788, %v2146
        %v2233 = vadd.f32 %v1789, %v2151
        %v2234 = vadd.f32 %v1790, %v2154
        %v2235 = vadd.f32 %v1791, %v2159
        %v2236 = vadd.f32 %v1792, %v2162
        %v2237 = vadd.f32 %v1793, %v2167
        %v2238 = vadd.f32 %v1794, %v2170
        %v2239 = vadd.f32 %v1795, %v2175
        %v2240 = vadd.f32 %v1796, %v2178
        %v2241 = vadd.f32 %v1797, %v2183
        %v2242 = vadd.f32 %v1798, %v2186
        %v2243 = vadd.f32 %v1799, %v2191
        %v2244 = vadd.f32 %v1800, %v2194
        %v2245 = vadd.f32 %v1801, %v2199
        %v2246 = vadd.f32 %v1802, %v2202
        %v2247 = vadd.f32 %v1803, %v2207
        %v2248 = vadd.f32 %v1804, %v2210
        %v2249 = vld [vmem:[#allocation2 + $0x8] sm:$0xfc]
        %s2250 = scalar_lea.vmem %s2, 10
        %v2251 = vld [vmem:[%s2250] sm:$0x3]
        %vm2254 = vcmask 1045504
        %v2255 = vrot.slane %v2249, 2
        %v2256 = vrot.slane %v1459, 2
        %v2257 = vsel %vm2254, %v2255, %v2256
        %v2258 = vrot.slane %v1460, 2
        %v2259 = vsel %vm2254, %v2256, %v2258
        %v2260 = vrot.slane %v1461, 2
        %v2261 = vsel %vm2254, %v2258, %v2260
        %v2262 = vrot.slane %v1462, 2
        %v2263 = vsel %vm2254, %v2260, %v2262
        %v2264 = vrot.slane %v1463, 2
        %v2265 = vsel %vm2254, %v2262, %v2264
        %v2266 = vrot.slane %v1464, 2
        %v2267 = vsel %vm2254, %v2264, %v2266
        %v2268 = vrot.slane %v1465, 2
        %v2269 = vsel %vm2254, %v2266, %v2268
        %v2270 = vrot.slane %v1466, 2
        %v2271 = vsel %vm2254, %v2268, %v2270
        %v2272 = vrot.slane %v1467, 2
        %v2273 = vsel %vm2254, %v2270, %v2272
        %v2274 = vrot.slane %v1468, 2
        %v2275 = vsel %vm2254, %v2272, %v2274
        %v2276 = vrot.slane %v1469, 2
        %v2277 = vsel %vm2254, %v2274, %v2276
        %v2278 = vrot.slane %v1470, 2
        %v2279 = vsel %vm2254, %v2276, %v2278
        %v2280 = vrot.slane %v1471, 2
        %v2281 = vsel %vm2254, %v2278, %v2280
        %v2282 = vrot.slane %v1472, 2
        %v2283 = vsel %vm2254, %v2280, %v2282
        %v2284 = vrot.slane %v1473, 2
        %v2285 = vsel %vm2254, %v2282, %v2284
        %v2286 = vrot.slane %v1474, 2
        %v2287 = vsel %vm2254, %v2284, %v2286
        %v2288 = vrot.slane %v1475, 2
        %v2289 = vsel %vm2254, %v2286, %v2288
        %v2290 = vrot.slane %v1805, 2
        %v2291 = vsel %vm2254, %v2288, %v2290
        %v2293 = vsel %vm460, %v2257, 0
        %v2296 = vsel %vm460, %v2259, 0
        %v2299 = vsel %vm460, %v2261, 0
        %v2302 = vsel %vm460, %v2263, 0
        %v2305 = vsel %vm460, %v2265, 0
        %v2308 = vsel %vm460, %v2267, 0
        %v2311 = vsel %vm460, %v2269, 0
        %v2314 = vsel %vm460, %v2271, 0
        %v2317 = vsel %vm460, %v2273, 0
        %v2320 = vsel %vm460, %v2275, 0
        %v2323 = vsel %vm460, %v2277, 0
        %v2326 = vsel %vm460, %v2279, 0
        %v2329 = vsel %vm460, %v2281, 0
        %v2332 = vsel %vm460, %v2283, 0
        %v2335 = vsel %vm460, %v2285, 0
        %v2338 = vsel %vm460, %v2287, 0
        %v2341 = vsel %vm460, %v2289, 0
        %v2344 = vsel %vm460, %v2291, 0
        %v2347 = vsel %vm731, %v2251, 0
        %2349 = vmatprep.subr.bf16.mxu0 0
        %2350 = vmatpush1.bf16.msra.mxu0 %v2347
        %2351 = vmatprep.subr.bf16.mxu0 0
        %2352 = vmatpush1.bf16.msra.mxu0 0
        %2353 = vmatprep.subr.bf16.mxu0 0
        %2354 = vmatpush1.bf16.msra.mxu0 0
        %2355 = vmatprep.subr.bf16.mxu0 0
        %2356 = vmatpush1.bf16.msra.mxu0 0
        %2357 = vmatprep.subr.bf16.mxu0 0
        %2358 = vmatpush1.bf16.msra.mxu0 0
        %2359 = vmatprep.subr.bf16.mxu0 0
        %2360 = vmatpush1.bf16.msra.mxu0 0
        %2361 = vmatprep.subr.bf16.mxu0 0
        %2362 = vmatpush1.bf16.msra.mxu0 0
        %2363 = vmatprep.subr.bf16.mxu0 0
        %2364 = vmatpush1.bf16.msra.mxu0 0
        %2365 = vmatprep.subr.bf16.mxu0 0
        %2366 = vmatpush1.bf16.msra.mxu0 0
        %2367 = vmatprep.subr.bf16.mxu0 0
        %2368 = vmatpush1.bf16.msra.mxu0 0
        %2369 = vmatprep.subr.bf16.mxu0 0
        %2370 = vmatpush1.bf16.msra.mxu0 0
        %2371 = vmatprep.subr.bf16.mxu0 0
        %2372 = vmatpush1.bf16.msra.mxu0 0
        %2373 = vmatprep.subr.bf16.mxu0 0
        %2374 = vmatpush1.bf16.msra.mxu0 0
        %2375 = vmatprep.subr.bf16.mxu0 0
        %2376 = vmatpush1.bf16.msra.mxu0 0
        %2377 = vmatprep.subr.bf16.mxu0 0
        %2378 = vmatpush1.bf16.msra.mxu0 0
        %2379 = vmatprep.subr.bf16.mxu0 0
        %2380 = vmatpush1.bf16.msra.mxu0 0
        %2381 = vmatprep.mubr.bf16.mxu0 0
        %2382 = vmatmul.mubr.bf16.gmra.mrb[0].mxu0 %v2293
        %v2383 = vpop.f32.mrb[0].mxu0
        %v2384 = vadd.f32 0.0, %v2383
        %v2385 = vpop.f32.mrb[0].mxu0
        %v2386 = vpop.f32.mrb[0].mxu0
        %v2387 = vadd.f32 0.0, %v2386
        %v2388 = vpop.f32.mrb[0].mxu0
        %2389 = vmatprep.mubr.bf16.mxu0 0
        %2390 = vmatmul.mubr.bf16.gmra.mrb[0].mxu0 %v2296
        %v2391 = vpop.f32.mrb[0].mxu0
        %v2392 = vadd.f32 0.0, %v2391
        %v2393 = vpop.f32.mrb[0].mxu0
        %v2394 = vpop.f32.mrb[0].mxu0
        %v2395 = vadd.f32 0.0, %v2394
        %v2396 = vpop.f32.mrb[0].mxu0
        %2397 = vmatprep.mubr.bf16.mxu0 0
        %2398 = vmatmul.mubr.bf16.gmra.mrb[0].mxu0 %v2299
        %v2399 = vpop.f32.mrb[0].mxu0
        %v2400 = vadd.f32 0.0, %v2399
        %v2401 = vpop.f32.mrb[0].mxu0
        %v2402 = vpop.f32.mrb[0].mxu0
        %v2403 = vadd.f32 0.0, %v2402
        %v2404 = vpop.f32.mrb[0].mxu0
        %2405 = vmatprep.mubr.bf16.mxu0 0
        %2406 = vmatmul.mubr.bf16.gmra.mrb[0].mxu0 %v2302
        %v2407 = vpop.f32.mrb[0].mxu0
        %v2408 = vadd.f32 0.0, %v2407
        %v2409 = vpop.f32.mrb[0].mxu0
        %v2410 = vpop.f32.mrb[0].mxu0
        %v2411 = vadd.f32 0.0, %v2410
        %v2412 = vpop.f32.mrb[0].mxu0
        %2413 = vmatprep.mubr.bf16.mxu0 0
        %2414 = vmatmul.mubr.bf16.gmra.mrb[0].mxu0 %v2305
        %v2415 = vpop.f32.mrb[0].mxu0
        %v2416 = vadd.f32 0.0, %v2415
        %v2417 = vpop.f32.mrb[0].mxu0
        %v2418 = vpop.f32.mrb[0].mxu0
        %v2419 = vadd.f32 0.0, %v2418
        %v2420 = vpop.f32.mrb[0].mxu0
        %2421 = vmatprep.mubr.bf16.mxu0 0
        %2422 = vmatmul.mubr.bf16.gmra.mrb[0].mxu0 %v2308
        %v2423 = vpop.f32.mrb[0].mxu0
        %v2424 = vadd.f32 0.0, %v2423
        %v2425 = vpop.f32.mrb[0].mxu0
        %v2426 = vpop.f32.mrb[0].mxu0
        %v2427 = vadd.f32 0.0, %v2426
        %v2428 = vpop.f32.mrb[0].mxu0
        %2429 = vmatprep.mubr.bf16.mxu0 0
        %2430 = vmatmul.mubr.bf16.gmra.mrb[0].mxu0 %v2311
        %v2431 = vpop.f32.mrb[0].mxu0
        %v2432 = vadd.f32 0.0, %v2431
        %v2433 = vpop.f32.mrb[0].mxu0
        %v2434 = vpop.f32.mrb[0].mxu0
        %v2435 = vadd.f32 0.0, %v2434
        %v2436 = vpop.f32.mrb[0].mxu0
        %2437 = vmatprep.mubr.bf16.mxu0 0
        %2438 = vmatmul.mubr.bf16.gmra.mrb[0].mxu0 %v2314
        %v2439 = vpop.f32.mrb[0].mxu0
        %v2440 = vadd.f32 0.0, %v2439
        %v2441 = vpop.f32.mrb[0].mxu0
        %v2442 = vpop.f32.mrb[0].mxu0
        %v2443 = vadd.f32 0.0, %v2442
        %v2444 = vpop.f32.mrb[0].mxu0
        %2445 = vmatprep.mubr.bf16.mxu0 0
        %2446 = vmatmul.mubr.bf16.gmra.mrb[0].mxu0 %v2317
        %v2447 = vpop.f32.mrb[0].mxu0
        %v2448 = vadd.f32 0.0, %v2447
        %v2449 = vpop.f32.mrb[0].mxu0
        %v2450 = vpop.f32.mrb[0].mxu0
        %v2451 = vadd.f32 0.0, %v2450
        %v2452 = vpop.f32.mrb[0].mxu0
        %2453 = vmatprep.mubr.bf16.mxu0 0
        %2454 = vmatmul.mubr.bf16.gmra.mrb[0].mxu0 %v2320
        %v2455 = vpop.f32.mrb[0].mxu0
        %v2456 = vadd.f32 0.0, %v2455
        %v2457 = vpop.f32.mrb[0].mxu0
        %v2458 = vpop.f32.mrb[0].mxu0
        %v2459 = vadd.f32 0.0, %v2458
        %v2460 = vpop.f32.mrb[0].mxu0
        %2461 = vmatprep.mubr.bf16.mxu0 0
        %2462 = vmatmul.mubr.bf16.gmra.mrb[0].mxu0 %v2323
        %v2463 = vpop.f32.mrb[0].mxu0
        %v2464 = vadd.f32 0.0, %v2463
        %v2465 = vpop.f32.mrb[0].mxu0
        %v2466 = vpop.f32.mrb[0].mxu0
        %v2467 = vadd.f32 0.0, %v2466
        %v2468 = vpop.f32.mrb[0].mxu0
        %2469 = vmatprep.mubr.bf16.mxu0 0
        %2470 = vmatmul.mubr.bf16.gmra.mrb[0].mxu0 %v2326
        %v2471 = vpop.f32.mrb[0].mxu0
        %v2472 = vadd.f32 0.0, %v2471
        %v2473 = vpop.f32.mrb[0].mxu0
        %v2474 = vpop.f32.mrb[0].mxu0
        %v2475 = vadd.f32 0.0, %v2474
        %v2476 = vpop.f32.mrb[0].mxu0
        %2477 = vmatprep.mubr.bf16.mxu0 0
        %2478 = vmatmul.mubr.bf16.gmra.mrb[0].mxu0 %v2329
        %v2479 = vpop.f32.mrb[0].mxu0
        %v2480 = vadd.f32 0.0, %v2479
        %v2481 = vpop.f32.mrb[0].mxu0
        %v2482 = vpop.f32.mrb[0].mxu0
        %v2483 = vadd.f32 0.0, %v2482
        %v2484 = vpop.f32.mrb[0].mxu0
        %2485 = vmatprep.mubr.bf16.mxu0 0
        %2486 = vmatmul.mubr.bf16.gmra.mrb[0].mxu0 %v2332
        %v2487 = vpop.f32.mrb[0].mxu0
        %v2488 = vadd.f32 0.0, %v2487
        %v2489 = vpop.f32.mrb[0].mxu0
        %v2490 = vpop.f32.mrb[0].mxu0
        %v2491 = vadd.f32 0.0, %v2490
        %v2492 = vpop.f32.mrb[0].mxu0
        %2493 = vmatprep.mubr.bf16.mxu0 0
        %2494 = vmatmul.mubr.bf16.gmra.mrb[0].mxu0 %v2335
        %v2495 = vpop.f32.mrb[0].mxu0
        %v2496 = vadd.f32 0.0, %v2495
        %v2497 = vpop.f32.mrb[0].mxu0
        %v2498 = vpop.f32.mrb[0].mxu0
        %v2499 = vadd.f32 0.0, %v2498
        %v2500 = vpop.f32.mrb[0].mxu0
        %2501 = vmatprep.mubr.bf16.mxu0 0
        %2502 = vmatmul.mubr.bf16.gmra.mrb[0].mxu0 %v2338
        %v2503 = vpop.f32.mrb[0].mxu0
        %v2504 = vadd.f32 0.0, %v2503
        %v2505 = vpop.f32.mrb[0].mxu0
        %v2506 = vpop.f32.mrb[0].mxu0
        %v2507 = vadd.f32 0.0, %v2506
        %v2508 = vpop.f32.mrb[0].mxu0
        %2509 = vmatprep.mubr.bf16.mxu0 0
        %2510 = vmatmul.mubr.bf16.gmra.mrb[0].mxu0 %v2341
        %v2511 = vpop.f32.mrb[0].mxu0
        %v2512 = vadd.f32 0.0, %v2511
        %v2513 = vpop.f32.mrb[0].mxu0
        %v2514 = vpop.f32.mrb[0].mxu0
        %v2515 = vadd.f32 0.0, %v2514
        %v2516 = vpop.f32.mrb[0].mxu0
        %2517 = vmatprep.mubr.bf16.mxu0 0
        %2518 = vmatmul.mubr.bf16.gmra.mrb[0].mxu0 %v2344
        %v2519 = vpop.f32.mrb[0].mxu0
        %v2520 = vadd.f32 0.0, %v2519
        %v2521 = vpop.f32.mrb[0].mxu0
        %v2522 = vpop.f32.mrb[0].mxu0
        %v2523 = vadd.f32 0.0, %v2522
        %v2524 = vpop.f32.mrb[0].mxu0
        %2525 = vdwg.mxu0
        %v2526 = vadd.f32 %v2213, %v2384
        %v2527 = vadd.f32 %v2214, %v2387
        %v2528 = vadd.f32 %v2215, %v2392
        %v2529 = vadd.f32 %v2216, %v2395
        %v2530 = vadd.f32 %v2217, %v2400
        %v2531 = vadd.f32 %v2218, %v2403
        %v2532 = vadd.f32 %v2219, %v2408
        %v2533 = vadd.f32 %v2220, %v2411
        %v2534 = vadd.f32 %v2221, %v2416
        %v2535 = vadd.f32 %v2222, %v2419
        %v2536 = vadd.f32 %v2223, %v2424
        %v2537 = vadd.f32 %v2224, %v2427
        %v2538 = vadd.f32 %v2225, %v2432
        %v2539 = vadd.f32 %v2226, %v2435
        %v2540 = vadd.f32 %v2227, %v2440
        %v2541 = vadd.f32 %v2228, %v2443
        %v2542 = vadd.f32 %v2229, %v2448
        %v2543 = vadd.f32 %v2230, %v2451
        %v2544 = vadd.f32 %v2231, %v2456
        %v2545 = vadd.f32 %v2232, %v2459
        %v2546 = vadd.f32 %v2233, %v2464
        %v2547 = vadd.f32 %v2234, %v2467
        %v2548 = vadd.f32 %v2235, %v2472
        %v2549 = vadd.f32 %v2236, %v2475
        %v2550 = vadd.f32 %v2237, %v2480
        %v2551 = vadd.f32 %v2238, %v2483
        %v2552 = vadd.f32 %v2239, %v2488
        %v2553 = vadd.f32 %v2240, %v2491
        %v2554 = vadd.f32 %v2241, %v2496
        %v2555 = vadd.f32 %v2242, %v2499
        %v2556 = vadd.f32 %v2243, %v2504
        %v2557 = vadd.f32 %v2244, %v2507
        %v2558 = vadd.f32 %v2245, %v2512
        %v2559 = vadd.f32 %v2246, %v2515
        %v2560 = vadd.f32 %v2247, %v2520
        %v2561 = vadd.f32 %v2248, %v2523
        %v2562 = vld [vmem:[#allocation2 + $0x10] sm:$0xfc]
        %v2563 = vld [vmem:[#allocation2 + $0x18] sm:$0xff]
        %v2564 = vld [vmem:[#allocation2 + $0x20] sm:$0xff]
        %v2565 = vld [vmem:[#allocation2 + $0x28] sm:$0xff]
        %v2566 = vld [vmem:[#allocation2 + $0x30] sm:$0xff]
        %v2567 = vld [vmem:[#allocation2 + $0x38] sm:$0xff]
        %v2568 = vld [vmem:[#allocation2 + $0x40] sm:$0xff]
        %v2569 = vld [vmem:[#allocation2 + $0x48] sm:$0xff]
        %v2570 = vld [vmem:[#allocation2 + $0x50] sm:$0xff]
        %v2571 = vld [vmem:[#allocation2 + $0x58] sm:$0xff]
        %v2572 = vld [vmem:[#allocation2 + $0x60] sm:$0xff]
        %v2573 = vld [vmem:[#allocation2 + $0x68] sm:$0xff]
        %v2574 = vld [vmem:[#allocation2 + $0x70] sm:$0xff]
        %v2575 = vld [vmem:[#allocation2 + $0x78] sm:$0xff]
        %v2576 = vld [vmem:[#allocation2 + $0x80] sm:$0xff]
        %v2577 = vld [vmem:[#allocation2 + $0x88] sm:$0xff]
        %v2578 = vld [vmem:[#allocation2 + $0x90] sm:$0xff]
        %v2579 = vld [vmem:[#allocation2 + $0x98] sm:$0xff]
        %v2580 = vld [vmem:[#allocation2 + $0xa0] sm:$0x3]
        %s2581 = scalar_lea.vmem %s2, 12
        %v2582 = vld [vmem:[%s2581] sm:$0x3]
        %v2602 = vrot.slane %v2562, 2
        %v2603 = vrot.slane %v2563, 2
        %v2604 = vsel %vm2254, %v2602, %v2603
        %v2605 = vrot.slane %v2564, 2
        %v2606 = vsel %vm2254, %v2603, %v2605
        %v2607 = vrot.slane %v2565, 2
        %v2608 = vsel %vm2254, %v2605, %v2607
        %v2609 = vrot.slane %v2566, 2
        %v2610 = vsel %vm2254, %v2607, %v2609
        %v2611 = vrot.slane %v2567, 2
        %v2612 = vsel %vm2254, %v2609, %v2611
        %v2613 = vrot.slane %v2568, 2
        %v2614 = vsel %vm2254, %v2611, %v2613
        %v2615 = vrot.slane %v2569, 2
        %v2616 = vsel %vm2254, %v2613, %v2615
        %v2617 = vrot.slane %v2570, 2
        %v2618 = vsel %vm2254, %v2615, %v2617
        %v2619 = vrot.slane %v2571, 2
        %v2620 = vsel %vm2254, %v2617, %v2619
        %v2621 = vrot.slane %v2572, 2
        %v2622 = vsel %vm2254, %v2619, %v2621
        %v2623 = vrot.slane %v2573, 2
        %v2624 = vsel %vm2254, %v2621, %v2623
        %v2625 = vrot.slane %v2574, 2
        %v2626 = vsel %vm2254, %v2623, %v2625
        %v2627 = vrot.slane %v2575, 2
        %v2628 = vsel %vm2254, %v2625, %v2627
        %v2629 = vrot.slane %v2576, 2
        %v2630 = vsel %vm2254, %v2627, %v2629
        %v2631 = vrot.slane %v2577, 2
        %v2632 = vsel %vm2254, %v2629, %v2631
        %v2633 = vrot.slane %v2578, 2
        %v2634 = vsel %vm2254, %v2631, %v2633
        %v2635 = vrot.slane %v2579, 2
        %v2636 = vsel %vm2254, %v2633, %v2635
        %v2637 = vrot.slane %v2580, 2
        %v2638 = vsel %vm2254, %v2635, %v2637
        %v2640 = vsel %vm460, %v2604, 0
        %v2643 = vsel %vm460, %v2606, 0
        %v2646 = vsel %vm460, %v2608, 0
        %v2649 = vsel %vm460, %v2610, 0
        %v2652 = vsel %vm460, %v2612, 0
        %v2655 = vsel %vm460, %v2614, 0
        %v2658 = vsel %vm460, %v2616, 0
        %v2661 = vsel %vm460, %v2618, 0
        %v2664 = vsel %vm460, %v2620, 0
        %v2667 = vsel %vm460, %v2622, 0
        %v2670 = vsel %vm460, %v2624, 0
        %v2673 = vsel %vm460, %v2626, 0
        %v2676 = vsel %vm460, %v2628, 0
        %v2679 = vsel %vm460, %v2630, 0
        %v2682 = vsel %vm460, %v2632, 0
        %v2685 = vsel %vm460, %v2634, 0
        %v2688 = vsel %vm460, %v2636, 0
        %v2691 = vsel %vm460, %v2638, 0
        %v2694 = vsel %vm731, %v2582, 0
        %2696 = vmatprep.subr.bf16.mxu0 0
        %2697 = vmatpush1.bf16.msra.mxu0 %v2694
        %2698 = vmatprep.subr.bf16.mxu0 0
        %2699 = vmatpush1.bf16.msra.mxu0 0
        %2700 = vmatprep.subr.bf16.mxu0 0
        %2701 = vmatpush1.bf16.msra.mxu0 0
        %2702 = vmatprep.subr.bf16.mxu0 0
        %2703 = vmatpush1.bf16.msra.mxu0 0
        %2704 = vmatprep.subr.bf16.mxu0 0
        %2705 = vmatpush1.bf16.msra.mxu0 0
        %2706 = vmatprep.subr.bf16.mxu0 0
        %2707 = vmatpush1.bf16.msra.mxu0 0
        %2708 = vmatprep.subr.bf16.mxu0 0
        %2709 = vmatpush1.bf16.msra.mxu0 0
        %2710 = vmatprep.subr.bf16.mxu0 0
        %2711 = vmatpush1.bf16.msra.mxu0 0
        %2712 = vmatprep.subr.bf16.mxu0 0
        %2713 = vmatpush1.bf16.msra.mxu0 0
        %2714 = vmatprep.subr.bf16.mxu0 0
        %2715 = vmatpush1.bf16.msra.mxu0 0
        %2716 = vmatprep.subr.bf16.mxu0 0
        %2717 = vmatpush1.bf16.msra.mxu0 0
        %2718 = vmatprep.subr.bf16.mxu0 0
        %2719 = vmatpush1.bf16.msra.mxu0 0
        %2720 = vmatprep.subr.bf16.mxu0 0
        %2721 = vmatpush1.bf16.msra.mxu0 0
        %2722 = vmatprep.subr.bf16.mxu0 0
        %2723 = vmatpush1.bf16.msra.mxu0 0
        %2724 = vmatprep.subr.bf16.mxu0 0
        %2725 = vmatpush1.bf16.msra.mxu0 0
        %2726 = vmatprep.subr.bf16.mxu0 0
        %2727 = vmatpush1.bf16.msra.mxu0 0
        %2728 = vmatprep.mubr.bf16.mxu0 0
        %2729 = vmatmul.mubr.bf16.gmra.mrb[0].mxu0 %v2640
        %v2730 = vpop.f32.mrb[0].mxu0
        %v2731 = vadd.f32 0.0, %v2730
        %v2732 = vpop.f32.mrb[0].mxu0
        %v2733 = vpop.f32.mrb[0].mxu0
        %v2734 = vadd.f32 0.0, %v2733
        %v2735 = vpop.f32.mrb[0].mxu0
        %2736 = vmatprep.mubr.bf16.mxu0 0
        %2737 = vmatmul.mubr.bf16.gmra.mrb[0].mxu0 %v2643
        %v2738 = vpop.f32.mrb[0].mxu0
        %v2739 = vadd.f32 0.0, %v2738
        %v2740 = vpop.f32.mrb[0].mxu0
        %v2741 = vpop.f32.mrb[0].mxu0
        %v2742 = vadd.f32 0.0, %v2741
        %v2743 = vpop.f32.mrb[0].mxu0
        %2744 = vmatprep.mubr.bf16.mxu0 0
        %2745 = vmatmul.mubr.bf16.gmra.mrb[0].mxu0 %v2646
        %v2746 = vpop.f32.mrb[0].mxu0
        %v2747 = vadd.f32 0.0, %v2746
        %v2748 = vpop.f32.mrb[0].mxu0
        %v2749 = vpop.f32.mrb[0].mxu0
        %v2750 = vadd.f32 0.0, %v2749
        %v2751 = vpop.f32.mrb[0].mxu0
        %2752 = vmatprep.mubr.bf16.mxu0 0
        %2753 = vmatmul.mubr.bf16.gmra.mrb[0].mxu0 %v2649
        %v2754 = vpop.f32.mrb[0].mxu0
        %v2755 = vadd.f32 0.0, %v2754
        %v2756 = vpop.f32.mrb[0].mxu0
        %v2757 = vpop.f32.mrb[0].mxu0
        %v2758 = vadd.f32 0.0, %v2757
        %v2759 = vpop.f32.mrb[0].mxu0
        %2760 = vmatprep.mubr.bf16.mxu0 0
        %2761 = vmatmul.mubr.bf16.gmra.mrb[0].mxu0 %v2652
        %v2762 = vpop.f32.mrb[0].mxu0
        %v2763 = vadd.f32 0.0, %v2762
        %v2764 = vpop.f32.mrb[0].mxu0
        %v2765 = vpop.f32.mrb[0].mxu0
        %v2766 = vadd.f32 0.0, %v2765
        %v2767 = vpop.f32.mrb[0].mxu0
        %2768 = vmatprep.mubr.bf16.mxu0 0
        %2769 = vmatmul.mubr.bf16.gmra.mrb[0].mxu0 %v2655
        %v2770 = vpop.f32.mrb[0].mxu0
        %v2771 = vadd.f32 0.0, %v2770
        %v2772 = vpop.f32.mrb[0].mxu0
        %v2773 = vpop.f32.mrb[0].mxu0
        %v2774 = vadd.f32 0.0, %v2773
        %v2775 = vpop.f32.mrb[0].mxu0
        %2776 = vmatprep.mubr.bf16.mxu0 0
        %2777 = vmatmul.mubr.bf16.gmra.mrb[0].mxu0 %v2658
        %v2778 = vpop.f32.mrb[0].mxu0
        %v2779 = vadd.f32 0.0, %v2778
        %v2780 = vpop.f32.mrb[0].mxu0
        %v2781 = vpop.f32.mrb[0].mxu0
        %v2782 = vadd.f32 0.0, %v2781
        %v2783 = vpop.f32.mrb[0].mxu0
        %2784 = vmatprep.mubr.bf16.mxu0 0
        %2785 = vmatmul.mubr.bf16.gmra.mrb[0].mxu0 %v2661
        %v2786 = vpop.f32.mrb[0].mxu0
        %v2787 = vadd.f32 0.0, %v2786
        %v2788 = vpop.f32.mrb[0].mxu0
        %v2789 = vpop.f32.mrb[0].mxu0
        %v2790 = vadd.f32 0.0, %v2789
        %v2791 = vpop.f32.mrb[0].mxu0
        %2792 = vmatprep.mubr.bf16.mxu0 0
        %2793 = vmatmul.mubr.bf16.gmra.mrb[0].mxu0 %v2664
        %v2794 = vpop.f32.mrb[0].mxu0
        %v2795 = vadd.f32 0.0, %v2794
        %v2796 = vpop.f32.mrb[0].mxu0
        %v2797 = vpop.f32.mrb[0].mxu0
        %v2798 = vadd.f32 0.0, %v2797
        %v2799 = vpop.f32.mrb[0].mxu0
        %2800 = vmatprep.mubr.bf16.mxu0 0
        %2801 = vmatmul.mubr.bf16.gmra.mrb[0].mxu0 %v2667
        %v2802 = vpop.f32.mrb[0].mxu0
        %v2803 = vadd.f32 0.0, %v2802
        %v2804 = vpop.f32.mrb[0].mxu0
        %v2805 = vpop.f32.mrb[0].mxu0
        %v2806 = vadd.f32 0.0, %v2805
        %v2807 = vpop.f32.mrb[0].mxu0
        %2808 = vmatprep.mubr.bf16.mxu0 0
        %2809 = vmatmul.mubr.bf16.gmra.mrb[0].mxu0 %v2670
        %v2810 = vpop.f32.mrb[0].mxu0
        %v2811 = vadd.f32 0.0, %v2810
        %v2812 = vpop.f32.mrb[0].mxu0
        %v2813 = vpop.f32.mrb[0].mxu0
        %v2814 = vadd.f32 0.0, %v2813
        %v2815 = vpop.f32.mrb[0].mxu0
        %2816 = vmatprep.mubr.bf16.mxu0 0
        %2817 = vmatmul.mubr.bf16.gmra.mrb[0].mxu0 %v2673
        %v2818 = vpop.f32.mrb[0].mxu0
        %v2819 = vadd.f32 0.0, %v2818
        %v2820 = vpop.f32.mrb[0].mxu0
        %v2821 = vpop.f32.mrb[0].mxu0
        %v2822 = vadd.f32 0.0, %v2821
        %v2823 = vpop.f32.mrb[0].mxu0
        %2824 = vmatprep.mubr.bf16.mxu0 0
        %2825 = vmatmul.mubr.bf16.gmra.mrb[0].mxu0 %v2676
        %v2826 = vpop.f32.mrb[0].mxu0
        %v2827 = vadd.f32 0.0, %v2826
        %v2828 = vpop.f32.mrb[0].mxu0
        %v2829 = vpop.f32.mrb[0].mxu0
        %v2830 = vadd.f32 0.0, %v2829
        %v2831 = vpop.f32.mrb[0].mxu0
        %2832 = vmatprep.mubr.bf16.mxu0 0
        %2833 = vmatmul.mubr.bf16.gmra.mrb[0].mxu0 %v2679
        %v2834 = vpop.f32.mrb[0].mxu0
        %v2835 = vadd.f32 0.0, %v2834
        %v2836 = vpop.f32.mrb[0].mxu0
        %v2837 = vpop.f32.mrb[0].mxu0
        %v2838 = vadd.f32 0.0, %v2837
        %v2839 = vpop.f32.mrb[0].mxu0
        %2840 = vmatprep.mubr.bf16.mxu0 0
        %2841 = vmatmul.mubr.bf16.gmra.mrb[0].mxu0 %v2682
        %v2842 = vpop.f32.mrb[0].mxu0
        %v2843 = vadd.f32 0.0, %v2842
        %v2844 = vpop.f32.mrb[0].mxu0
        %v2845 = vpop.f32.mrb[0].mxu0
        %v2846 = vadd.f32 0.0, %v2845
        %v2847 = vpop.f32.mrb[0].mxu0
        %2848 = vmatprep.mubr.bf16.mxu0 0
        %2849 = vmatmul.mubr.bf16.gmra.mrb[0].mxu0 %v2685
        %v2850 = vpop.f32.mrb[0].mxu0
        %v2851 = vadd.f32 0.0, %v2850
        %v2852 = vpop.f32.mrb[0].mxu0
        %v2853 = vpop.f32.mrb[0].mxu0
        %v2854 = vadd.f32 0.0, %v2853
        %v2855 = vpop.f32.mrb[0].mxu0
        %2856 = vmatprep.mubr.bf16.mxu0 0
        %2857 = vmatmul.mubr.bf16.gmra.mrb[0].mxu0 %v2688
        %v2858 = vpop.f32.mrb[0].mxu0
        %v2859 = vadd.f32 0.0, %v2858
        %v2860 = vpop.f32.mrb[0].mxu0
        %v2861 = vpop.f32.mrb[0].mxu0
        %v2862 = vadd.f32 0.0, %v2861
        %v2863 = vpop.f32.mrb[0].mxu0
        %2864 = vmatprep.mubr.bf16.mxu0 0
        %2865 = vmatmul.mubr.bf16.gmra.mrb[0].mxu0 %v2691
        %v2866 = vpop.f32.mrb[0].mxu0
        %v2867 = vadd.f32 0.0, %v2866
        %v2868 = vpop.f32.mrb[0].mxu0
        %v2869 = vpop.f32.mrb[0].mxu0
        %v2870 = vadd.f32 0.0, %v2869
        %v2871 = vpop.f32.mrb[0].mxu0
        %2872 = vdwg.mxu0
        %v2873 = vadd.f32 %v2526, %v2731
        %v2874 = vadd.f32 %v2527, %v2734
        %v2875 = vadd.f32 %v2528, %v2739
        %v2876 = vadd.f32 %v2529, %v2742
        %v2877 = vadd.f32 %v2530, %v2747
        %v2878 = vadd.f32 %v2531, %v2750
        %v2879 = vadd.f32 %v2532, %v2755
        %v2880 = vadd.f32 %v2533, %v2758
        %v2881 = vadd.f32 %v2534, %v2763
        %v2882 = vadd.f32 %v2535, %v2766
        %v2883 = vadd.f32 %v2536, %v2771
        %v2884 = vadd.f32 %v2537, %v2774
        %v2885 = vadd.f32 %v2538, %v2779
        %v2886 = vadd.f32 %v2539, %v2782
        %v2887 = vadd.f32 %v2540, %v2787
        %v2888 = vadd.f32 %v2541, %v2790
        %v2889 = vadd.f32 %v2542, %v2795
        %v2890 = vadd.f32 %v2543, %v2798
        %v2891 = vadd.f32 %v2544, %v2803
        %v2892 = vadd.f32 %v2545, %v2806
        %v2893 = vadd.f32 %v2546, %v2811
        %v2894 = vadd.f32 %v2547, %v2814
        %v2895 = vadd.f32 %v2548, %v2819
        %v2896 = vadd.f32 %v2549, %v2822
        %v2897 = vadd.f32 %v2550, %v2827
        %v2898 = vadd.f32 %v2551, %v2830
        %v2899 = vadd.f32 %v2552, %v2835
        %v2900 = vadd.f32 %v2553, %v2838
        %v2901 = vadd.f32 %v2554, %v2843
        %v2902 = vadd.f32 %v2555, %v2846
        %v2903 = vadd.f32 %v2556, %v2851
        %v2904 = vadd.f32 %v2557, %v2854
        %v2905 = vadd.f32 %v2558, %v2859
        %v2906 = vadd.f32 %v2559, %v2862
        %v2907 = vadd.f32 %v2560, %v2867
        %v2908 = vadd.f32 %v2561, %v2870
        %v2909 = vld [vmem:[#allocation2 + $0xa0] sm:$0x7]
        %s2910 = scalar_lea.vmem %s2, 14
        %v2911 = vld [vmem:[%s2910] sm:$0x3]
        %vm2912 = vsmask.f32 5376
        %v2914 = vshrl.u32 %v2562, 16
        %v2916 = vrot.slane %v2914, 2
        %v2917 = vshll.u32 %v2562, 16
        %v2919 = vrot.slane %v2917, 3
        %v2920 = vor.u32 %v2916, %v2919
        %v2922 = vshrl.u32 %v2563, 16
        %v2924 = vrot.slane %v2922, 2
        %v2925 = vshll.u32 %v2563, 16
        %v2927 = vrot.slane %v2925, 3
        %v2928 = vor.u32 %v2924, %v2927
        %v2929 = vsel %vm2912, %v2920, %v2928
        %v2931 = vshrl.u32 %v2564, 16
        %v2933 = vrot.slane %v2931, 2
        %v2934 = vshll.u32 %v2564, 16
        %v2936 = vrot.slane %v2934, 3
        %v2937 = vor.u32 %v2933, %v2936
        %v2938 = vsel %vm2912, %v2928, %v2937
        %v2940 = vshrl.u32 %v2565, 16
        %v2942 = vrot.slane %v2940, 2
        %v2943 = vshll.u32 %v2565, 16
        %v2945 = vrot.slane %v2943, 3
        %v2946 = vor.u32 %v2942, %v2945
        %v2947 = vsel %vm2912, %v2937, %v2946
        %v2949 = vshrl.u32 %v2566, 16
        %v2951 = vrot.slane %v2949, 2
        %v2952 = vshll.u32 %v2566, 16
        %v2954 = vrot.slane %v2952, 3
        %v2955 = vor.u32 %v2951, %v2954
        %v2956 = vsel %vm2912, %v2946, %v2955
        %v2958 = vshrl.u32 %v2567, 16
        %v2960 = vrot.slane %v2958, 2
        %v2961 = vshll.u32 %v2567, 16
        %v2963 = vrot.slane %v2961, 3
        %v2964 = vor.u32 %v2960, %v2963
        %v2965 = vsel %vm2912, %v2955, %v2964
        %v2967 = vshrl.u32 %v2568, 16
        %v2969 = vrot.slane %v2967, 2
        %v2970 = vshll.u32 %v2568, 16
        %v2972 = vrot.slane %v2970, 3
        %v2973 = vor.u32 %v2969, %v2972
        %v2974 = vsel %vm2912, %v2964, %v2973
        %v2976 = vshrl.u32 %v2569, 16
        %v2978 = vrot.slane %v2976, 2
        %v2979 = vshll.u32 %v2569, 16
        %v2981 = vrot.slane %v2979, 3
        %v2982 = vor.u32 %v2978, %v2981
        %v2983 = vsel %vm2912, %v2973, %v2982
        %v2985 = vshrl.u32 %v2570, 16
        %v2987 = vrot.slane %v2985, 2
        %v2988 = vshll.u32 %v2570, 16
        %v2990 = vrot.slane %v2988, 3
        %v2991 = vor.u32 %v2987, %v2990
        %v2992 = vsel %vm2912, %v2982, %v2991
        %v2994 = vshrl.u32 %v2571, 16
        %v2996 = vrot.slane %v2994, 2
        %v2997 = vshll.u32 %v2571, 16
        %v2999 = vrot.slane %v2997, 3
        %v3000 = vor.u32 %v2996, %v2999
        %v3001 = vsel %vm2912, %v2991, %v3000
        %v3003 = vshrl.u32 %v2572, 16
        %v3005 = vrot.slane %v3003, 2
        %v3006 = vshll.u32 %v2572, 16
        %v3008 = vrot.slane %v3006, 3
        %v3009 = vor.u32 %v3005, %v3008
        %v3010 = vsel %vm2912, %v3000, %v3009
        %v3012 = vshrl.u32 %v2573, 16
        %v3014 = vrot.slane %v3012, 2
        %v3015 = vshll.u32 %v2573, 16
        %v3017 = vrot.slane %v3015, 3
        %v3018 = vor.u32 %v3014, %v3017
        %v3019 = vsel %vm2912, %v3009, %v3018
        %v3021 = vshrl.u32 %v2574, 16
        %v3023 = vrot.slane %v3021, 2
        %v3024 = vshll.u32 %v2574, 16
        %v3026 = vrot.slane %v3024, 3
        %v3027 = vor.u32 %v3023, %v3026
        %v3028 = vsel %vm2912, %v3018, %v3027
        %v3030 = vshrl.u32 %v2575, 16
        %v3032 = vrot.slane %v3030, 2
        %v3033 = vshll.u32 %v2575, 16
        %v3035 = vrot.slane %v3033, 3
        %v3036 = vor.u32 %v3032, %v3035
        %v3037 = vsel %vm2912, %v3027, %v3036
        %v3039 = vshrl.u32 %v2576, 16
        %v3041 = vrot.slane %v3039, 2
        %v3042 = vshll.u32 %v2576, 16
        %v3044 = vrot.slane %v3042, 3
        %v3045 = vor.u32 %v3041, %v3044
        %v3046 = vsel %vm2912, %v3036, %v3045
        %v3048 = vshrl.u32 %v2577, 16
        %v3050 = vrot.slane %v3048, 2
        %v3051 = vshll.u32 %v2577, 16
        %v3053 = vrot.slane %v3051, 3
        %v3054 = vor.u32 %v3050, %v3053
        %v3055 = vsel %vm2912, %v3045, %v3054
        %v3057 = vshrl.u32 %v2578, 16
        %v3059 = vrot.slane %v3057, 2
        %v3060 = vshll.u32 %v2578, 16
        %v3062 = vrot.slane %v3060, 3
        %v3063 = vor.u32 %v3059, %v3062
        %v3064 = vsel %vm2912, %v3054, %v3063
        %v3066 = vshrl.u32 %v2579, 16
        %v3068 = vrot.slane %v3066, 2
        %v3069 = vshll.u32 %v2579, 16
        %v3071 = vrot.slane %v3069, 3
        %v3072 = vor.u32 %v3068, %v3071
        %v3073 = vsel %vm2912, %v3063, %v3072
        %v3075 = vshrl.u32 %v2909, 16
        %v3077 = vrot.slane %v3075, 2
        %v3078 = vshll.u32 %v2909, 16
        %v3080 = vrot.slane %v3078, 3
        %v3081 = vor.u32 %v3077, %v3080
        %v3082 = vsel %vm2912, %v3072, %v3081
        %v3084 = vsel %vm460, %v2929, 0
        %v3087 = vsel %vm460, %v2938, 0
        %v3090 = vsel %vm460, %v2947, 0
        %v3093 = vsel %vm460, %v2956, 0
        %v3096 = vsel %vm460, %v2965, 0
        %v3099 = vsel %vm460, %v2974, 0
        %v3102 = vsel %vm460, %v2983, 0
        %v3105 = vsel %vm460, %v2992, 0
        %v3108 = vsel %vm460, %v3001, 0
        %v3111 = vsel %vm460, %v3010, 0
        %v3114 = vsel %vm460, %v3019, 0
        %v3117 = vsel %vm460, %v3028, 0
        %v3120 = vsel %vm460, %v3037, 0
        %v3123 = vsel %vm460, %v3046, 0
        %v3126 = vsel %vm460, %v3055, 0
        %v3129 = vsel %vm460, %v3064, 0
        %v3132 = vsel %vm460, %v3073, 0
        %v3135 = vsel %vm460, %v3082, 0
        %v3138 = vsel %vm731, %v2911, 0
        %3140 = vmatprep.subr.bf16.mxu0 0
        %3141 = vmatpush1.bf16.msra.mxu0 %v3138
        %3142 = vmatprep.subr.bf16.mxu0 0
        %3143 = vmatpush1.bf16.msra.mxu0 0
        %3144 = vmatprep.subr.bf16.mxu0 0
        %3145 = vmatpush1.bf16.msra.mxu0 0
        %3146 = vmatprep.subr.bf16.mxu0 0
        %3147 = vmatpush1.bf16.msra.mxu0 0
        %3148 = vmatprep.subr.bf16.mxu0 0
        %3149 = vmatpush1.bf16.msra.mxu0 0
        %3150 = vmatprep.subr.bf16.mxu0 0
        %3151 = vmatpush1.bf16.msra.mxu0 0
        %3152 = vmatprep.subr.bf16.mxu0 0
        %3153 = vmatpush1.bf16.msra.mxu0 0
        %3154 = vmatprep.subr.bf16.mxu0 0
        %3155 = vmatpush1.bf16.msra.mxu0 0
        %3156 = vmatprep.subr.bf16.mxu0 0
        %3157 = vmatpush1.bf16.msra.mxu0 0
        %3158 = vmatprep.subr.bf16.mxu0 0
        %3159 = vmatpush1.bf16.msra.mxu0 0
        %3160 = vmatprep.subr.bf16.mxu0 0
        %3161 = vmatpush1.bf16.msra.mxu0 0
        %3162 = vmatprep.subr.bf16.mxu0 0
        %3163 = vmatpush1.bf16.msra.mxu0 0
        %3164 = vmatprep.subr.bf16.mxu0 0
        %3165 = vmatpush1.bf16.msra.mxu0 0
        %3166 = vmatprep.subr.bf16.mxu0 0
        %3167 = vmatpush1.bf16.msra.mxu0 0
        %3168 = vmatprep.subr.bf16.mxu0 0
        %3169 = vmatpush1.bf16.msra.mxu0 0
        %3170 = vmatprep.subr.bf16.mxu0 0
        %3171 = vmatpush1.bf16.msra.mxu0 0
        %3172 = vmatprep.mubr.bf16.mxu0 0
        %3173 = vmatmul.mubr.bf16.gmra.mrb[0].mxu0 %v3084
        %v3174 = vpop.f32.mrb[0].mxu0
        %v3175 = vadd.f32 0.0, %v3174
        %v3176 = vpop.f32.mrb[0].mxu0
        %v3177 = vpop.f32.mrb[0].mxu0
        %v3178 = vadd.f32 0.0, %v3177
        %v3179 = vpop.f32.mrb[0].mxu0
        %3180 = vmatprep.mubr.bf16.mxu0 0
        %3181 = vmatmul.mubr.bf16.gmra.mrb[0].mxu0 %v3087
        %v3182 = vpop.f32.mrb[0].mxu0
        %v3183 = vadd.f32 0.0, %v3182
        %v3184 = vpop.f32.mrb[0].mxu0
        %v3185 = vpop.f32.mrb[0].mxu0
        %v3186 = vadd.f32 0.0, %v3185
        %v3187 = vpop.f32.mrb[0].mxu0
        %3188 = vmatprep.mubr.bf16.mxu0 0
        %3189 = vmatmul.mubr.bf16.gmra.mrb[0].mxu0 %v3090
        %v3190 = vpop.f32.mrb[0].mxu0
        %v3191 = vadd.f32 0.0, %v3190
        %v3192 = vpop.f32.mrb[0].mxu0
        %v3193 = vpop.f32.mrb[0].mxu0
        %v3194 = vadd.f32 0.0, %v3193
        %v3195 = vpop.f32.mrb[0].mxu0
        %3196 = vmatprep.mubr.bf16.mxu0 0
        %3197 = vmatmul.mubr.bf16.gmra.mrb[0].mxu0 %v3093
        %v3198 = vpop.f32.mrb[0].mxu0
        %v3199 = vadd.f32 0.0, %v3198
        %v3200 = vpop.f32.mrb[0].mxu0
        %v3201 = vpop.f32.mrb[0].mxu0
        %v3202 = vadd.f32 0.0, %v3201
        %v3203 = vpop.f32.mrb[0].mxu0
        %3204 = vmatprep.mubr.bf16.mxu0 0
        %3205 = vmatmul.mubr.bf16.gmra.mrb[0].mxu0 %v3096
        %v3206 = vpop.f32.mrb[0].mxu0
        %v3207 = vadd.f32 0.0, %v3206
        %v3208 = vpop.f32.mrb[0].mxu0
        %v3209 = vpop.f32.mrb[0].mxu0
        %v3210 = vadd.f32 0.0, %v3209
        %v3211 = vpop.f32.mrb[0].mxu0
        %3212 = vmatprep.mubr.bf16.mxu0 0
        %3213 = vmatmul.mubr.bf16.gmra.mrb[0].mxu0 %v3099
        %v3214 = vpop.f32.mrb[0].mxu0
        %v3215 = vadd.f32 0.0, %v3214
        %v3216 = vpop.f32.mrb[0].mxu0
        %v3217 = vpop.f32.mrb[0].mxu0
        %v3218 = vadd.f32 0.0, %v3217
        %v3219 = vpop.f32.mrb[0].mxu0
        %3220 = vmatprep.mubr.bf16.mxu0 0
        %3221 = vmatmul.mubr.bf16.gmra.mrb[0].mxu0 %v3102
        %v3222 = vpop.f32.mrb[0].mxu0
        %v3223 = vadd.f32 0.0, %v3222
        %v3224 = vpop.f32.mrb[0].mxu0
        %v3225 = vpop.f32.mrb[0].mxu0
        %v3226 = vadd.f32 0.0, %v3225
        %v3227 = vpop.f32.mrb[0].mxu0
        %3228 = vmatprep.mubr.bf16.mxu0 0
        %3229 = vmatmul.mubr.bf16.gmra.mrb[0].mxu0 %v3105
        %v3230 = vpop.f32.mrb[0].mxu0
        %v3231 = vadd.f32 0.0, %v3230
        %v3232 = vpop.f32.mrb[0].mxu0
        %v3233 = vpop.f32.mrb[0].mxu0
        %v3234 = vadd.f32 0.0, %v3233
        %v3235 = vpop.f32.mrb[0].mxu0
        %3236 = vmatprep.mubr.bf16.mxu0 0
        %3237 = vmatmul.mubr.bf16.gmra.mrb[0].mxu0 %v3108
        %v3238 = vpop.f32.mrb[0].mxu0
        %v3239 = vadd.f32 0.0, %v3238
        %v3240 = vpop.f32.mrb[0].mxu0
        %v3241 = vpop.f32.mrb[0].mxu0
        %v3242 = vadd.f32 0.0, %v3241
        %v3243 = vpop.f32.mrb[0].mxu0
        %3244 = vmatprep.mubr.bf16.mxu0 0
        %3245 = vmatmul.mubr.bf16.gmra.mrb[0].mxu0 %v3111
        %v3246 = vpop.f32.mrb[0].mxu0
        %v3247 = vadd.f32 0.0, %v3246
        %v3248 = vpop.f32.mrb[0].mxu0
        %v3249 = vpop.f32.mrb[0].mxu0
        %v3250 = vadd.f32 0.0, %v3249
        %v3251 = vpop.f32.mrb[0].mxu0
        %3252 = vmatprep.mubr.bf16.mxu0 0
        %3253 = vmatmul.mubr.bf16.gmra.mrb[0].mxu0 %v3114
        %v3254 = vpop.f32.mrb[0].mxu0
        %v3255 = vadd.f32 0.0, %v3254
        %v3256 = vpop.f32.mrb[0].mxu0
        %v3257 = vpop.f32.mrb[0].mxu0
        %v3258 = vadd.f32 0.0, %v3257
        %v3259 = vpop.f32.mrb[0].mxu0
        %3260 = vmatprep.mubr.bf16.mxu0 0
        %3261 = vmatmul.mubr.bf16.gmra.mrb[0].mxu0 %v3117
        %v3262 = vpop.f32.mrb[0].mxu0
        %v3263 = vadd.f32 0.0, %v3262
        %v3264 = vpop.f32.mrb[0].mxu0
        %v3265 = vpop.f32.mrb[0].mxu0
        %v3266 = vadd.f32 0.0, %v3265
        %v3267 = vpop.f32.mrb[0].mxu0
        %3268 = vmatprep.mubr.bf16.mxu0 0
        %3269 = vmatmul.mubr.bf16.gmra.mrb[0].mxu0 %v3120
        %v3270 = vpop.f32.mrb[0].mxu0
        %v3271 = vadd.f32 0.0, %v3270
        %v3272 = vpop.f32.mrb[0].mxu0
        %v3273 = vpop.f32.mrb[0].mxu0
        %v3274 = vadd.f32 0.0, %v3273
        %v3275 = vpop.f32.mrb[0].mxu0
        %3276 = vmatprep.mubr.bf16.mxu0 0
        %3277 = vmatmul.mubr.bf16.gmra.mrb[0].mxu0 %v3123
        %v3278 = vpop.f32.mrb[0].mxu0
        %v3279 = vadd.f32 0.0, %v3278
        %v3280 = vpop.f32.mrb[0].mxu0
        %v3281 = vpop.f32.mrb[0].mxu0
        %v3282 = vadd.f32 0.0, %v3281
        %v3283 = vpop.f32.mrb[0].mxu0
        %3284 = vmatprep.mubr.bf16.mxu0 0
        %3285 = vmatmul.mubr.bf16.gmra.mrb[0].mxu0 %v3126
        %v3286 = vpop.f32.mrb[0].mxu0
        %v3287 = vadd.f32 0.0, %v3286
        %v3288 = vpop.f32.mrb[0].mxu0
        %v3289 = vpop.f32.mrb[0].mxu0
        %v3290 = vadd.f32 0.0, %v3289
        %v3291 = vpop.f32.mrb[0].mxu0
        %3292 = vmatprep.mubr.bf16.mxu0 0
        %3293 = vmatmul.mubr.bf16.gmra.mrb[0].mxu0 %v3129
        %v3294 = vpop.f32.mrb[0].mxu0
        %v3295 = vadd.f32 0.0, %v3294
        %v3296 = vpop.f32.mrb[0].mxu0
        %v3297 = vpop.f32.mrb[0].mxu0
        %v3298 = vadd.f32 0.0, %v3297
        %v3299 = vpop.f32.mrb[0].mxu0
        %3300 = vmatprep.mubr.bf16.mxu0 0
        %3301 = vmatmul.mubr.bf16.gmra.mrb[0].mxu0 %v3132
        %v3302 = vpop.f32.mrb[0].mxu0
        %v3303 = vadd.f32 0.0, %v3302
        %v3304 = vpop.f32.mrb[0].mxu0
        %v3305 = vpop.f32.mrb[0].mxu0
        %v3306 = vadd.f32 0.0, %v3305
        %v3307 = vpop.f32.mrb[0].mxu0
        %3308 = vmatprep.mubr.bf16.mxu0 0
        %3309 = vmatmul.mubr.bf16.gmra.mrb[0].mxu0 %v3135
        %v3310 = vpop.f32.mrb[0].mxu0
        %v3311 = vadd.f32 0.0, %v3310
        %v3312 = vpop.f32.mrb[0].mxu0
        %v3313 = vpop.f32.mrb[0].mxu0
        %v3314 = vadd.f32 0.0, %v3313
        %v3315 = vpop.f32.mrb[0].mxu0
        %3316 = vdwg.mxu0
        %v3317 = vadd.f32 %v2873, %v3175
        %v3318 = vadd.f32 %v2874, %v3178
        %v3319 = vadd.f32 %v2875, %v3183
        %v3320 = vadd.f32 %v2876, %v3186
        %v3321 = vadd.f32 %v2877, %v3191
        %v3322 = vadd.f32 %v2878, %v3194
        %v3323 = vadd.f32 %v2879, %v3199
        %v3324 = vadd.f32 %v2880, %v3202
        %v3325 = vadd.f32 %v2881, %v3207
        %v3326 = vadd.f32 %v2882, %v3210
        %v3327 = vadd.f32 %v2883, %v3215
        %v3328 = vadd.f32 %v2884, %v3218
        %v3329 = vadd.f32 %v2885, %v3223
        %v3330 = vadd.f32 %v2886, %v3226
        %v3331 = vadd.f32 %v2887, %v3231
        %v3332 = vadd.f32 %v2888, %v3234
        %v3333 = vadd.f32 %v2889, %v3239
        %v3334 = vadd.f32 %v2890, %v3242
        %v3335 = vadd.f32 %v2891, %v3247
        %v3336 = vadd.f32 %v2892, %v3250
        %v3337 = vadd.f32 %v2893, %v3255
        %v3338 = vadd.f32 %v2894, %v3258
        %v3339 = vadd.f32 %v2895, %v3263
        %v3340 = vadd.f32 %v2896, %v3266
        %v3341 = vadd.f32 %v2897, %v3271
        %v3342 = vadd.f32 %v2898, %v3274
        %v3343 = vadd.f32 %v2899, %v3279
        %v3344 = vadd.f32 %v2900, %v3282
        %v3345 = vadd.f32 %v2901, %v3287
        %v3346 = vadd.f32 %v2902, %v3290
        %v3347 = vadd.f32 %v2903, %v3295
        %v3348 = vadd.f32 %v2904, %v3298
        %v3349 = vadd.f32 %v2905, %v3303
        %v3350 = vadd.f32 %v2906, %v3306
        %v3351 = vadd.f32 %v2907, %v3311
        %v3352 = vadd.f32 %v2908, %v3314
        %v3353 = vld [vmem:[#allocation2 + $0x10] sm:$0xf8]
        %s3354 = scalar_lea.vmem %s2, 16
        %v3355 = vld [vmem:[%s3354] sm:$0x3]
        %vm3358 = vcmask 1044480
        %v3359 = vrot.slane %v3353, 3
        %v3360 = vrot.slane %v2563, 3
        %v3361 = vsel %vm3358, %v3359, %v3360
        %v3362 = vrot.slane %v2564, 3
        %v3363 = vsel %vm3358, %v3360, %v3362
        %v3364 = vrot.slane %v2565, 3
        %v3365 = vsel %vm3358, %v3362, %v3364
        %v3366 = vrot.slane %v2566, 3
        %v3367 = vsel %vm3358, %v3364, %v3366
        %v3368 = vrot.slane %v2567, 3
        %v3369 = vsel %vm3358, %v3366, %v3368
        %v3370 = vrot.slane %v2568, 3
        %v3371 = vsel %vm3358, %v3368, %v3370
        %v3372 = vrot.slane %v2569, 3
        %v3373 = vsel %vm3358, %v3370, %v3372
        %v3374 = vrot.slane %v2570, 3
        %v3375 = vsel %vm3358, %v3372, %v3374
        %v3376 = vrot.slane %v2571, 3
        %v3377 = vsel %vm3358, %v3374, %v3376
        %v3378 = vrot.slane %v2572, 3
        %v3379 = vsel %vm3358, %v3376, %v3378
        %v3380 = vrot.slane %v2573, 3
        %v3381 = vsel %vm3358, %v3378, %v3380
        %v3382 = vrot.slane %v2574, 3
        %v3383 = vsel %vm3358, %v3380, %v3382
        %v3384 = vrot.slane %v2575, 3
        %v3385 = vsel %vm3358, %v3382, %v3384
        %v3386 = vrot.slane %v2576, 3
        %v3387 = vsel %vm3358, %v3384, %v3386
        %v3388 = vrot.slane %v2577, 3
        %v3389 = vsel %vm3358, %v3386, %v3388
        %v3390 = vrot.slane %v2578, 3
        %v3391 = vsel %vm3358, %v3388, %v3390
        %v3392 = vrot.slane %v2579, 3
        %v3393 = vsel %vm3358, %v3390, %v3392
        %v3394 = vrot.slane %v2909, 3
        %v3395 = vsel %vm3358, %v3392, %v3394
        %v3397 = vsel %vm460, %v3361, 0
        %v3400 = vsel %vm460, %v3363, 0
        %v3403 = vsel %vm460, %v3365, 0
        %v3406 = vsel %vm460, %v3367, 0
        %v3409 = vsel %vm460, %v3369, 0
        %v3412 = vsel %vm460, %v3371, 0
        %v3415 = vsel %vm460, %v3373, 0
        %v3418 = vsel %vm460, %v3375, 0
        %v3421 = vsel %vm460, %v3377, 0
        %v3424 = vsel %vm460, %v3379, 0
        %v3427 = vsel %vm460, %v3381, 0
        %v3430 = vsel %vm460, %v3383, 0
        %v3433 = vsel %vm460, %v3385, 0
        %v3436 = vsel %vm460, %v3387, 0
        %v3439 = vsel %vm460, %v3389, 0
        %v3442 = vsel %vm460, %v3391, 0
        %v3445 = vsel %vm460, %v3393, 0
        %v3448 = vsel %vm460, %v3395, 0
        %v3451 = vsel %vm731, %v3355, 0
        %3453 = vmatprep.subr.bf16.mxu0 0
        %3454 = vmatpush1.bf16.msra.mxu0 %v3451
        %3455 = vmatprep.subr.bf16.mxu0 0
        %3456 = vmatpush1.bf16.msra.mxu0 0
        %3457 = vmatprep.subr.bf16.mxu0 0
        %3458 = vmatpush1.bf16.msra.mxu0 0
        %3459 = vmatprep.subr.bf16.mxu0 0
        %3460 = vmatpush1.bf16.msra.mxu0 0
        %3461 = vmatprep.subr.bf16.mxu0 0
        %3462 = vmatpush1.bf16.msra.mxu0 0
        %3463 = vmatprep.subr.bf16.mxu0 0
        %3464 = vmatpush1.bf16.msra.mxu0 0
        %3465 = vmatprep.subr.bf16.mxu0 0
        %3466 = vmatpush1.bf16.msra.mxu0 0
        %3467 = vmatprep.subr.bf16.mxu0 0
        %3468 = vmatpush1.bf16.msra.mxu0 0
        %3469 = vmatprep.subr.bf16.mxu0 0
        %3470 = vmatpush1.bf16.msra.mxu0 0
        %3471 = vmatprep.subr.bf16.mxu0 0
        %3472 = vmatpush1.bf16.msra.mxu0 0
        %3473 = vmatprep.subr.bf16.mxu0 0
        %3474 = vmatpush1.bf16.msra.mxu0 0
        %3475 = vmatprep.subr.bf16.mxu0 0
        %3476 = vmatpush1.bf16.msra.mxu0 0
        %3477 = vmatprep.subr.bf16.mxu0 0
        %3478 = vmatpush1.bf16.msra.mxu0 0
        %3479 = vmatprep.subr.bf16.mxu0 0
        %3480 = vmatpush1.bf16.msra.mxu0 0
        %3481 = vmatprep.subr.bf16.mxu0 0
        %3482 = vmatpush1.bf16.msra.mxu0 0
        %3483 = vmatprep.subr.bf16.mxu0 0
        %3484 = vmatpush1.bf16.msra.mxu0 0
        %3485 = vmatprep.mubr.bf16.mxu0 0
        %3486 = vmatmul.mubr.bf16.gmra.mrb[0].mxu0 %v3397
        %v3487 = vpop.f32.mrb[0].mxu0
        %v3488 = vadd.f32 0.0, %v3487
        %v3489 = vpop.f32.mrb[0].mxu0
        %v3490 = vpop.f32.mrb[0].mxu0
        %v3491 = vadd.f32 0.0, %v3490
        %v3492 = vpop.f32.mrb[0].mxu0
        %3493 = vmatprep.mubr.bf16.mxu0 0
        %3494 = vmatmul.mubr.bf16.gmra.mrb[0].mxu0 %v3400
        %v3495 = vpop.f32.mrb[0].mxu0
        %v3496 = vadd.f32 0.0, %v3495
        %v3497 = vpop.f32.mrb[0].mxu0
        %v3498 = vpop.f32.mrb[0].mxu0
        %v3499 = vadd.f32 0.0, %v3498
        %v3500 = vpop.f32.mrb[0].mxu0
        %3501 = vmatprep.mubr.bf16.mxu0 0
        %3502 = vmatmul.mubr.bf16.gmra.mrb[0].mxu0 %v3403
        %v3503 = vpop.f32.mrb[0].mxu0
        %v3504 = vadd.f32 0.0, %v3503
        %v3505 = vpop.f32.mrb[0].mxu0
        %v3506 = vpop.f32.mrb[0].mxu0
        %v3507 = vadd.f32 0.0, %v3506
        %v3508 = vpop.f32.mrb[0].mxu0
        %3509 = vmatprep.mubr.bf16.mxu0 0
        %3510 = vmatmul.mubr.bf16.gmra.mrb[0].mxu0 %v3406
        %v3511 = vpop.f32.mrb[0].mxu0
        %v3512 = vadd.f32 0.0, %v3511
        %v3513 = vpop.f32.mrb[0].mxu0
        %v3514 = vpop.f32.mrb[0].mxu0
        %v3515 = vadd.f32 0.0, %v3514
        %v3516 = vpop.f32.mrb[0].mxu0
        %3517 = vmatprep.mubr.bf16.mxu0 0
        %3518 = vmatmul.mubr.bf16.gmra.mrb[0].mxu0 %v3409
        %v3519 = vpop.f32.mrb[0].mxu0
        %v3520 = vadd.f32 0.0, %v3519
        %v3521 = vpop.f32.mrb[0].mxu0
        %v3522 = vpop.f32.mrb[0].mxu0
        %v3523 = vadd.f32 0.0, %v3522
        %v3524 = vpop.f32.mrb[0].mxu0
        %3525 = vmatprep.mubr.bf16.mxu0 0
        %3526 = vmatmul.mubr.bf16.gmra.mrb[0].mxu0 %v3412
        %v3527 = vpop.f32.mrb[0].mxu0
        %v3528 = vadd.f32 0.0, %v3527
        %v3529 = vpop.f32.mrb[0].mxu0
        %v3530 = vpop.f32.mrb[0].mxu0
        %v3531 = vadd.f32 0.0, %v3530
        %v3532 = vpop.f32.mrb[0].mxu0
        %3533 = vmatprep.mubr.bf16.mxu0 0
        %3534 = vmatmul.mubr.bf16.gmra.mrb[0].mxu0 %v3415
        %v3535 = vpop.f32.mrb[0].mxu0
        %v3536 = vadd.f32 0.0, %v3535
        %v3537 = vpop.f32.mrb[0].mxu0
        %v3538 = vpop.f32.mrb[0].mxu0
        %v3539 = vadd.f32 0.0, %v3538
        %v3540 = vpop.f32.mrb[0].mxu0
        %3541 = vmatprep.mubr.bf16.mxu0 0
        %3542 = vmatmul.mubr.bf16.gmra.mrb[0].mxu0 %v3418
        %v3543 = vpop.f32.mrb[0].mxu0
        %v3544 = vadd.f32 0.0, %v3543
        %v3545 = vpop.f32.mrb[0].mxu0
        %v3546 = vpop.f32.mrb[0].mxu0
        %v3547 = vadd.f32 0.0, %v3546
        %v3548 = vpop.f32.mrb[0].mxu0
        %3549 = vmatprep.mubr.bf16.mxu0 0
        %3550 = vmatmul.mubr.bf16.gmra.mrb[0].mxu0 %v3421
        %v3551 = vpop.f32.mrb[0].mxu0
        %v3552 = vadd.f32 0.0, %v3551
        %v3553 = vpop.f32.mrb[0].mxu0
        %v3554 = vpop.f32.mrb[0].mxu0
        %v3555 = vadd.f32 0.0, %v3554
        %v3556 = vpop.f32.mrb[0].mxu0
        %3557 = vmatprep.mubr.bf16.mxu0 0
        %3558 = vmatmul.mubr.bf16.gmra.mrb[0].mxu0 %v3424
        %v3559 = vpop.f32.mrb[0].mxu0
        %v3560 = vadd.f32 0.0, %v3559
        %v3561 = vpop.f32.mrb[0].mxu0
        %v3562 = vpop.f32.mrb[0].mxu0
        %v3563 = vadd.f32 0.0, %v3562
        %v3564 = vpop.f32.mrb[0].mxu0
        %3565 = vmatprep.mubr.bf16.mxu0 0
        %3566 = vmatmul.mubr.bf16.gmra.mrb[0].mxu0 %v3427
        %v3567 = vpop.f32.mrb[0].mxu0
        %v3568 = vadd.f32 0.0, %v3567
        %v3569 = vpop.f32.mrb[0].mxu0
        %v3570 = vpop.f32.mrb[0].mxu0
        %v3571 = vadd.f32 0.0, %v3570
        %v3572 = vpop.f32.mrb[0].mxu0
        %3573 = vmatprep.mubr.bf16.mxu0 0
        %3574 = vmatmul.mubr.bf16.gmra.mrb[0].mxu0 %v3430
        %v3575 = vpop.f32.mrb[0].mxu0
        %v3576 = vadd.f32 0.0, %v3575
        %v3577 = vpop.f32.mrb[0].mxu0
        %v3578 = vpop.f32.mrb[0].mxu0
        %v3579 = vadd.f32 0.0, %v3578
        %v3580 = vpop.f32.mrb[0].mxu0
        %3581 = vmatprep.mubr.bf16.mxu0 0
        %3582 = vmatmul.mubr.bf16.gmra.mrb[0].mxu0 %v3433
        %v3583 = vpop.f32.mrb[0].mxu0
        %v3584 = vadd.f32 0.0, %v3583
        %v3585 = vpop.f32.mrb[0].mxu0
        %v3586 = vpop.f32.mrb[0].mxu0
        %v3587 = vadd.f32 0.0, %v3586
        %v3588 = vpop.f32.mrb[0].mxu0
        %3589 = vmatprep.mubr.bf16.mxu0 0
        %3590 = vmatmul.mubr.bf16.gmra.mrb[0].mxu0 %v3436
        %v3591 = vpop.f32.mrb[0].mxu0
        %v3592 = vadd.f32 0.0, %v3591
        %v3593 = vpop.f32.mrb[0].mxu0
        %v3594 = vpop.f32.mrb[0].mxu0
        %v3595 = vadd.f32 0.0, %v3594
        %v3596 = vpop.f32.mrb[0].mxu0
        %3597 = vmatprep.mubr.bf16.mxu0 0
        %3598 = vmatmul.mubr.bf16.gmra.mrb[0].mxu0 %v3439
        %v3599 = vpop.f32.mrb[0].mxu0
        %v3600 = vadd.f32 0.0, %v3599
        %v3601 = vpop.f32.mrb[0].mxu0
        %v3602 = vpop.f32.mrb[0].mxu0
        %v3603 = vadd.f32 0.0, %v3602
        %v3604 = vpop.f32.mrb[0].mxu0
        %3605 = vmatprep.mubr.bf16.mxu0 0
        %3606 = vmatmul.mubr.bf16.gmra.mrb[0].mxu0 %v3442
        %v3607 = vpop.f32.mrb[0].mxu0
        %v3608 = vadd.f32 0.0, %v3607
        %v3609 = vpop.f32.mrb[0].mxu0
        %v3610 = vpop.f32.mrb[0].mxu0
        %v3611 = vadd.f32 0.0, %v3610
        %v3612 = vpop.f32.mrb[0].mxu0
        %3613 = vmatprep.mubr.bf16.mxu0 0
        %3614 = vmatmul.mubr.bf16.gmra.mrb[0].mxu0 %v3445
        %v3615 = vpop.f32.mrb[0].mxu0
        %v3616 = vadd.f32 0.0, %v3615
        %v3617 = vpop.f32.mrb[0].mxu0
        %v3618 = vpop.f32.mrb[0].mxu0
        %v3619 = vadd.f32 0.0, %v3618
        %v3620 = vpop.f32.mrb[0].mxu0
        %3621 = vmatprep.mubr.bf16.mxu0 0
        %3622 = vmatmul.mubr.bf16.gmra.mrb[0].mxu0 %v3448
        %v3623 = vpop.f32.mrb[0].mxu0
        %v3624 = vadd.f32 0.0, %v3623
        %v3625 = vpop.f32.mrb[0].mxu0
        %v3626 = vpop.f32.mrb[0].mxu0
        %v3627 = vadd.f32 0.0, %v3626
        %v3628 = vpop.f32.mrb[0].mxu0
        %3629 = vdwg.mxu0
        %v3630 = vadd.f32 %v3317, %v3488
        %v3631 = vadd.f32 %v3318, %v3491
        %v3632 = vadd.f32 %v3319, %v3496
        %v3633 = vadd.f32 %v3320, %v3499
        %v3634 = vadd.f32 %v3321, %v3504
        %v3635 = vadd.f32 %v3322, %v3507
        %v3636 = vadd.f32 %v3323, %v3512
        %v3637 = vadd.f32 %v3324, %v3515
        %v3638 = vadd.f32 %v3325, %v3520
        %v3639 = vadd.f32 %v3326, %v3523
        %v3640 = vadd.f32 %v3327, %v3528
        %v3641 = vadd.f32 %v3328, %v3531
        %v3642 = vadd.f32 %v3329, %v3536
        %v3643 = vadd.f32 %v3330, %v3539
        %v3644 = vadd.f32 %v3331, %v3544
        %v3645 = vadd.f32 %v3332, %v3547
        %v3646 = vadd.f32 %v3333, %v3552
        %v3647 = vadd.f32 %v3334, %v3555
        %v3648 = vadd.f32 %v3335, %v3560
        %v3649 = vadd.f32 %v3336, %v3563
        %v3650 = vadd.f32 %v3337, %v3568
        %v3651 = vadd.f32 %v3338, %v3571
        %v3652 = vadd.f32 %v3339, %v3576
        %v3653 = vadd.f32 %v3340, %v3579
        %v3654 = vadd.f32 %v3341, %v3584
        %v3655 = vadd.f32 %v3342, %v3587
        %v3656 = vadd.f32 %v3343, %v3592
        %v3657 = vadd.f32 %v3344, %v3595
        %v3658 = vadd.f32 %v3345, %v3600
        %v3659 = vadd.f32 %v3346, %v3603
        %v3660 = vadd.f32 %v3347, %v3608
        %v3661 = vadd.f32 %v3348, %v3611
        %v3662 = vadd.f32 %v3349, %v3616
        %v3663 = vadd.f32 %v3350, %v3619
        %v3664 = vadd.f32 %v3351, %v3624
        %v3665 = vadd.f32 %v3352, %v3627
        %v3666 = vpack.c.bf16 %v3631, %v3630
        %v3667 = vpack.c.bf16 %v3633, %v3632
        %v3668 = vpack.c.bf16 %v3635, %v3634
        %v3669 = vpack.c.bf16 %v3637, %v3636
        %v3670 = vpack.c.bf16 %v3639, %v3638
        %v3671 = vpack.c.bf16 %v3641, %v3640
        %v3672 = vpack.c.bf16 %v3643, %v3642
        %v3673 = vpack.c.bf16 %v3645, %v3644
        %v3674 = vpack.c.bf16 %v3647, %v3646
        %v3675 = vpack.c.bf16 %v3649, %v3648
        %v3676 = vpack.c.bf16 %v3651, %v3650
        %v3677 = vpack.c.bf16 %v3653, %v3652
        %v3678 = vpack.c.bf16 %v3655, %v3654
        %v3679 = vpack.c.bf16 %v3657, %v3656
        %v3680 = vpack.c.bf16 %v3659, %v3658
        %v3681 = vpack.c.bf16 %v3661, %v3660
        %v3682 = vpack.c.bf16 %v3663, %v3662
        %v3683 = vpack.c.bf16 %v3665, %v3664
        %v3702 = vunpack.c.l.b16 %v3666
        %v3703 = vunpack.c.h.b16 %v3666
        %v3704 = vunpack.c.l.b16 %v3667
        %v3705 = vunpack.c.h.b16 %v3667
        %v3706 = vunpack.c.l.b16 %v3668
        %v3707 = vunpack.c.h.b16 %v3668
        %v3708 = vunpack.c.l.b16 %v3669
        %v3709 = vunpack.c.h.b16 %v3669
        %v3710 = vunpack.c.l.b16 %v3670
        %v3711 = vunpack.c.h.b16 %v3670
        %v3712 = vunpack.c.l.b16 %v3671
        %v3713 = vunpack.c.h.b16 %v3671
        %v3714 = vunpack.c.l.b16 %v3672
        %v3715 = vunpack.c.h.b16 %v3672
        %v3716 = vunpack.c.l.b16 %v3673
        %v3717 = vunpack.c.h.b16 %v3673
        %v3718 = vunpack.c.l.b16 %v3674
        %v3719 = vunpack.c.h.b16 %v3674
        %v3720 = vunpack.c.l.b16 %v3675
        %v3721 = vunpack.c.h.b16 %v3675
        %v3722 = vunpack.c.l.b16 %v3676
        %v3723 = vunpack.c.h.b16 %v3676
        %v3724 = vunpack.c.l.b16 %v3677
        %v3725 = vunpack.c.h.b16 %v3677
        %v3726 = vunpack.c.l.b16 %v3678
        %v3727 = vunpack.c.h.b16 %v3678
        %v3728 = vunpack.c.l.b16 %v3679
        %v3729 = vunpack.c.h.b16 %v3679
        %v3730 = vunpack.c.l.b16 %v3680
        %v3731 = vunpack.c.h.b16 %v3680
        %v3732 = vunpack.c.l.b16 %v3681
        %v3733 = vunpack.c.h.b16 %v3681
        %v3734 = vunpack.c.l.b16 %v3682
        %v3735 = vunpack.c.h.b16 %v3682
        %v3736 = vunpack.c.l.b16 %v3683
        %v3737 = vunpack.c.h.b16 %v3683
        %v3738 = vpack.c.b16 %v3702, %v3702
        %v3739 = vpack.c.b16 %v3703, %v3703
        %v3740 = vpack.c.b16 %v3704, %v3704
        %v3741 = vpack.c.b16 %v3705, %v3705
        %v3742 = vpack.c.b16 %v3706, %v3706
        %v3743 = vpack.c.b16 %v3707, %v3707
        %v3744 = vpack.c.b16 %v3708, %v3708
        %v3745 = vpack.c.b16 %v3709, %v3709
        %v3746 = vpack.c.b16 %v3710, %v3710
        %v3747 = vpack.c.b16 %v3711, %v3711
        %v3748 = vpack.c.b16 %v3712, %v3712
        %v3749 = vpack.c.b16 %v3713, %v3713
        %v3750 = vpack.c.b16 %v3714, %v3714
        %v3751 = vpack.c.b16 %v3715, %v3715
        %v3752 = vpack.c.b16 %v3716, %v3716
        %v3753 = vpack.c.b16 %v3717, %v3717
        %v3754 = vpack.c.b16 %v3718, %v3718
        %v3755 = vpack.c.b16 %v3719, %v3719
        %v3756 = vpack.c.b16 %v3720, %v3720
        %v3757 = vpack.c.b16 %v3721, %v3721
        %v3758 = vpack.c.b16 %v3722, %v3722
        %v3759 = vpack.c.b16 %v3723, %v3723
        %v3760 = vpack.c.b16 %v3724, %v3724
        %v3761 = vpack.c.b16 %v3725, %v3725
        %v3762 = vpack.c.b16 %v3726, %v3726
        %v3763 = vpack.c.b16 %v3727, %v3727
        %v3764 = vpack.c.b16 %v3728, %v3728
        %v3765 = vpack.c.b16 %v3729, %v3729
        %v3766 = vpack.c.b16 %v3730, %v3730
        %v3767 = vpack.c.b16 %v3731, %v3731
        %v3768 = vpack.c.b16 %v3732, %v3732
        %v3769 = vpack.c.b16 %v3733, %v3733
        %v3770 = vpack.c.b16 %v3734, %v3734
        %v3771 = vpack.c.b16 %v3735, %v3735
        %v3772 = vpack.c.b16 %v3736, %v3736
        %v3773 = vpack.c.b16 %v3737, %v3737
        %3810 = vst [vmem:[%s276] sm:$0xf] %v3738
        %3811 = vst [vmem:[%s276 + $0x4] sm:$0xf] %v3739
        %3812 = vst [vmem:[%s276 + $0x8] sm:$0xf] %v3740
        %3813 = vst [vmem:[%s276 + $0xc] sm:$0xf] %v3741
        %3814 = vst [vmem:[%s276 + $0x10] sm:$0xf] %v3742
        %3815 = vst [vmem:[%s276 + $0x14] sm:$0xf] %v3743
        %3816 = vst [vmem:[%s276 + $0x18] sm:$0xf] %v3744
        %3817 = vst [vmem:[%s276 + $0x1c] sm:$0xf] %v3745
        %3818 = vst [vmem:[%s276 + $0x20] sm:$0xf] %v3746
        %3819 = vst [vmem:[%s276 + $0x24] sm:$0xf] %v3747
        %3820 = vst [vmem:[%s276 + $0x28] sm:$0xf] %v3748
        %3821 = vst [vmem:[%s276 + $0x2c] sm:$0xf] %v3749
        %3822 = vst [vmem:[%s276 + $0x30] sm:$0xf] %v3750
        %3823 = vst [vmem:[%s276 + $0x34] sm:$0xf] %v3751
        %3824 = vst [vmem:[%s276 + $0x38] sm:$0xf] %v3752
        %3825 = vst [vmem:[%s276 + $0x3c] sm:$0xf] %v3753
        %3826 = vst [vmem:[%s276 + $0x40] sm:$0xf] %v3754
        %3827 = vst [vmem:[%s276 + $0x44] sm:$0xf] %v3755
        %3828 = vst [vmem:[%s276 + $0x48] sm:$0xf] %v3756
        %3829 = vst [vmem:[%s276 + $0x4c] sm:$0xf] %v3757
        %3830 = vst [vmem:[%s276 + $0x50] sm:$0xf] %v3758
        %3831 = vst [vmem:[%s276 + $0x54] sm:$0xf] %v3759
        %3832 = vst [vmem:[%s276 + $0x58] sm:$0xf] %v3760
        %3833 = vst [vmem:[%s276 + $0x5c] sm:$0xf] %v3761
        %3834 = vst [vmem:[%s276 + $0x60] sm:$0xf] %v3762
        %3835 = vst [vmem:[%s276 + $0x64] sm:$0xf] %v3763
        %3836 = vst [vmem:[%s276 + $0x68] sm:$0xf] %v3764
        %3837 = vst [vmem:[%s276 + $0x6c] sm:$0xf] %v3765
        %3838 = vst [vmem:[%s276 + $0x70] sm:$0xf] %v3766
        %3839 = vst [vmem:[%s276 + $0x74] sm:$0xf] %v3767
        %3840 = vst [vmem:[%s276 + $0x78] sm:$0xf] %v3768
        %3841 = vst [vmem:[%s276 + $0x7c] sm:$0xf] %v3769
        %3842 = vst [vmem:[%s276 + $0x80] sm:$0xf] %v3770
        %3843 = vst [vmem:[%s276 + $0x84] sm:$0xf] %v3771
        %3844 = vst [vmem:[%s276 + $0x88] sm:$0xf] %v3772
        %3845 = vst [vmem:[%s276 + $0x8c] sm:$0xf] %v3773
        %v3846 = vld [vmem:[%s312] sm:$0xff]
        %v3847 = vld [vmem:[%s312 + $0x8] sm:$0xff]
        %v3848 = vld [vmem:[%s312 + $0x10] sm:$0xff]
        %v3849 = vld [vmem:[%s312 + $0x18] sm:$0xff]
        %v3850 = vld [vmem:[%s312 + $0x20] sm:$0xff]
        %v3851 = vld [vmem:[%s312 + $0x28] sm:$0xff]
        %v3852 = vld [vmem:[%s312 + $0x30] sm:$0xff]
        %v3853 = vld [vmem:[%s312 + $0x38] sm:$0xff]
        %v3854 = vld [vmem:[%s312 + $0x40] sm:$0xff]
        %v3855 = vld [vmem:[%s312 + $0x48] sm:$0xff]
        %v3856 = vld [vmem:[%s312 + $0x50] sm:$0xff]
        %v3857 = vld [vmem:[%s312 + $0x58] sm:$0xff]
        %v3858 = vld [vmem:[%s312 + $0x60] sm:$0xff]
        %v3859 = vld [vmem:[%s312 + $0x68] sm:$0xff]
        %v3860 = vld [vmem:[%s312 + $0x70] sm:$0xff]
        %v3861 = vld [vmem:[%s312 + $0x78] sm:$0xff]
        %v3862 = vld [vmem:[%s312 + $0x80] sm:$0xff]
        %v3863 = vld [vmem:[%s312 + $0x88] sm:$0xff]
        %v3864 = vld [vmem:[%s312 + $0x90] sm:$0xff]
        %v3865 = vld [vmem:[%s312 + $0x98] sm:$0xff]
        %v3866 = vld [vmem:[%s312 + $0xa0] sm:$0xff]
        %v3867 = vld [vmem:[%s312 + $0xa8] sm:$0xff]
        %v3868 = vld [vmem:[%s312 + $0xb0] sm:$0xff]
        %v3869 = vld [vmem:[%s312 + $0xb8] sm:$0xff]
        %v3870 = vld [vmem:[%s312 + $0xc0] sm:$0xff]
        %v3871 = vld [vmem:[%s312 + $0xc8] sm:$0xff]
        %v3872 = vld [vmem:[%s312 + $0xd0] sm:$0xff]
        %v3873 = vld [vmem:[%s312 + $0xd8] sm:$0xff]
        %v3874 = vld [vmem:[%s312 + $0xe0] sm:$0xff]
        %v3875 = vld [vmem:[%s312 + $0xe8] sm:$0xff]
        %v3876 = vld [vmem:[%s312 + $0xf0] sm:$0xff]
        %v3877 = vld [vmem:[%s312 + $0xf8] sm:$0xff]
        %v3878 = vld [vmem:[%s312 + $0x100] sm:$0xff]
        %v3879 = vld [vmem:[%s312 + $0x108] sm:$0xff]
        %v3880 = vld [vmem:[%s312 + $0x110] sm:$0xff]
        %v3881 = vld [vmem:[%s312 + $0x118] sm:$0xff]
        %3883 = vset.pattern.permute.xlu0 0
        %3884 = vperm.xlu0 %3883, %v3846
        %v3885 = vpop.permute.xlu0 %3884
        %3888 = vset.pattern.permute.xlu0 0
        %3889 = vperm.xlu0 %3888, %v3847
        %v3890 = vpop.permute.xlu0 %3889
        %3893 = vset.pattern.permute.xlu0 0
        %3894 = vperm.xlu0 %3893, %v3848
        %v3895 = vpop.permute.xlu0 %3894
        %3898 = vset.pattern.permute.xlu0 0
        %3899 = vperm.xlu0 %3898, %v3849
        %v3900 = vpop.permute.xlu0 %3899
        %3903 = vset.pattern.permute.xlu0 0
        %3904 = vperm.xlu0 %3903, %v3850
        %v3905 = vpop.permute.xlu0 %3904
        %3908 = vset.pattern.permute.xlu0 0
        %3909 = vperm.xlu0 %3908, %v3851
        %v3910 = vpop.permute.xlu0 %3909
        %3913 = vset.pattern.permute.xlu0 0
        %3914 = vperm.xlu0 %3913, %v3852
        %v3915 = vpop.permute.xlu0 %3914
        %3918 = vset.pattern.permute.xlu0 0
        %3919 = vperm.xlu0 %3918, %v3853
        %v3920 = vpop.permute.xlu0 %3919
        %3923 = vset.pattern.permute.xlu0 0
        %3924 = vperm.xlu0 %3923, %v3854
        %v3925 = vpop.permute.xlu0 %3924
        %3928 = vset.pattern.permute.xlu0 0
        %3929 = vperm.xlu0 %3928, %v3855
        %v3930 = vpop.permute.xlu0 %3929
        %3933 = vset.pattern.permute.xlu0 0
        %3934 = vperm.xlu0 %3933, %v3856
        %v3935 = vpop.permute.xlu0 %3934
        %3938 = vset.pattern.permute.xlu0 0
        %3939 = vperm.xlu0 %3938, %v3857
        %v3940 = vpop.permute.xlu0 %3939
        %3943 = vset.pattern.permute.xlu0 0
        %3944 = vperm.xlu0 %3943, %v3858
        %v3945 = vpop.permute.xlu0 %3944
        %3948 = vset.pattern.permute.xlu0 0
        %3949 = vperm.xlu0 %3948, %v3859
        %v3950 = vpop.permute.xlu0 %3949
        %3953 = vset.pattern.permute.xlu0 0
        %3954 = vperm.xlu0 %3953, %v3860
        %v3955 = vpop.permute.xlu0 %3954
        %3958 = vset.pattern.permute.xlu0 0
        %3959 = vperm.xlu0 %3958, %v3861
        %v3960 = vpop.permute.xlu0 %3959
        %3963 = vset.pattern.permute.xlu0 0
        %3964 = vperm.xlu0 %3963, %v3862
        %v3965 = vpop.permute.xlu0 %3964
        %3968 = vset.pattern.permute.xlu0 0
        %3969 = vperm.xlu0 %3968, %v3863
        %v3970 = vpop.permute.xlu0 %3969
        %3973 = vset.pattern.permute.xlu0 0
        %3974 = vperm.xlu0 %3973, %v3864
        %v3975 = vpop.permute.xlu0 %3974
        %3978 = vset.pattern.permute.xlu0 0
        %3979 = vperm.xlu0 %3978, %v3865
        %v3980 = vpop.permute.xlu0 %3979
        %3983 = vset.pattern.permute.xlu0 0
        %3984 = vperm.xlu0 %3983, %v3866
        %v3985 = vpop.permute.xlu0 %3984
        %3988 = vset.pattern.permute.xlu0 0
        %3989 = vperm.xlu0 %3988, %v3867
        %v3990 = vpop.permute.xlu0 %3989
        %3993 = vset.pattern.permute.xlu0 0
        %3994 = vperm.xlu0 %3993, %v3868
        %v3995 = vpop.permute.xlu0 %3994
        %3998 = vset.pattern.permute.xlu0 0
        %3999 = vperm.xlu0 %3998, %v3869
        %v4000 = vpop.permute.xlu0 %3999
        %4003 = vset.pattern.permute.xlu0 0
        %4004 = vperm.xlu0 %4003, %v3870
        %v4005 = vpop.permute.xlu0 %4004
        %4008 = vset.pattern.permute.xlu0 0
        %4009 = vperm.xlu0 %4008, %v3871
        %v4010 = vpop.permute.xlu0 %4009
        %4013 = vset.pattern.permute.xlu0 0
        %4014 = vperm.xlu0 %4013, %v3872
        %v4015 = vpop.permute.xlu0 %4014
        %4018 = vset.pattern.permute.xlu0 0
        %4019 = vperm.xlu0 %4018, %v3873
        %v4020 = vpop.permute.xlu0 %4019
        %4023 = vset.pattern.permute.xlu0 0
        %4024 = vperm.xlu0 %4023, %v3874
        %v4025 = vpop.permute.xlu0 %4024
        %4028 = vset.pattern.permute.xlu0 0
        %4029 = vperm.xlu0 %4028, %v3875
        %v4030 = vpop.permute.xlu0 %4029
        %4033 = vset.pattern.permute.xlu0 0
        %4034 = vperm.xlu0 %4033, %v3876
        %v4035 = vpop.permute.xlu0 %4034
        %4038 = vset.pattern.permute.xlu0 0
        %4039 = vperm.xlu0 %4038, %v3877
        %v4040 = vpop.permute.xlu0 %4039
        %4043 = vset.pattern.permute.xlu0 0
        %4044 = vperm.xlu0 %4043, %v3878
        %v4045 = vpop.permute.xlu0 %4044
        %4048 = vset.pattern.permute.xlu0 0
        %4049 = vperm.xlu0 %4048, %v3879
        %v4050 = vpop.permute.xlu0 %4049
        %4053 = vset.pattern.permute.xlu0 0
        %4054 = vperm.xlu0 %4053, %v3880
        %v4055 = vpop.permute.xlu0 %4054
        %4058 = vset.pattern.permute.xlu0 0
        %4059 = vperm.xlu0 %4058, %v3881
        %v4060 = vpop.permute.xlu0 %4059
        %v4062 = vmul.f32 %v3630, %v3885
        %v4063 = vmul.f32 %v3631, %v3890
        %v4064 = vmul.f32 %v3632, %v3895
        %v4065 = vmul.f32 %v3633, %v3900
        %v4066 = vmul.f32 %v3634, %v3905
        %v4067 = vmul.f32 %v3635, %v3910
        %v4068 = vmul.f32 %v3636, %v3915
        %v4069 = vmul.f32 %v3637, %v3920
        %v4070 = vmul.f32 %v3638, %v3925
        %v4071 = vmul.f32 %v3639, %v3930
        %v4072 = vmul.f32 %v3640, %v3935
        %v4073 = vmul.f32 %v3641, %v3940
        %v4074 = vmul.f32 %v3642, %v3945
        %v4075 = vmul.f32 %v3643, %v3950
        %v4076 = vmul.f32 %v3644, %v3955
        %v4077 = vmul.f32 %v3645, %v3960
        %v4078 = vmul.f32 %v3646, %v3965
        %v4079 = vmul.f32 %v3647, %v3970
        %v4080 = vmul.f32 %v3648, %v3975
        %v4081 = vmul.f32 %v3649, %v3980
        %v4082 = vmul.f32 %v3650, %v3985
        %v4083 = vmul.f32 %v3651, %v3990
        %v4084 = vmul.f32 %v3652, %v3995
        %v4085 = vmul.f32 %v3653, %v4000
        %v4086 = vmul.f32 %v3654, %v4005
        %v4087 = vmul.f32 %v3655, %v4010
        %v4088 = vmul.f32 %v3656, %v4015
        %v4089 = vmul.f32 %v3657, %v4020
        %v4090 = vmul.f32 %v3658, %v4025
        %v4091 = vmul.f32 %v3659, %v4030
        %v4092 = vmul.f32 %v3660, %v4035
        %v4093 = vmul.f32 %v3661, %v4040
        %v4094 = vmul.f32 %v3662, %v4045
        %v4095 = vmul.f32 %v3663, %v4050
        %v4096 = vmul.f32 %v3664, %v4055
        %v4097 = vmul.f32 %v3665, %v4060
        %v4098 = vadd.f32 %v4062, %v4063
        %v4099 = vadd.f32 %v4098, %v4064
        %v4100 = vadd.f32 %v4099, %v4065
        %v4101 = vadd.f32 %v4100, %v4066
        %v4102 = vadd.f32 %v4101, %v4067
        %v4103 = vadd.f32 %v4102, %v4068
        %v4104 = vadd.f32 %v4103, %v4069
        %v4105 = vadd.f32 %v4104, %v4070
        %v4106 = vadd.f32 %v4105, %v4071
        %v4107 = vadd.f32 %v4106, %v4072
        %v4108 = vadd.f32 %v4107, %v4073
        %v4109 = vadd.f32 %v4108, %v4074
        %v4110 = vadd.f32 %v4109, %v4075
        %v4111 = vadd.f32 %v4110, %v4076
        %v4112 = vadd.f32 %v4111, %v4077
        %v4113 = vadd.f32 %v4112, %v4078
        %v4114 = vadd.f32 %v4113, %v4079
        %v4115 = vadd.f32 %v4114, %v4080
        %v4116 = vadd.f32 %v4115, %v4081
        %v4117 = vadd.f32 %v4116, %v4082
        %v4118 = vadd.f32 %v4117, %v4083
        %v4119 = vadd.f32 %v4118, %v4084
        %v4120 = vadd.f32 %v4119, %v4085
        %v4121 = vadd.f32 %v4120, %v4086
        %v4122 = vadd.f32 %v4121, %v4087
        %v4123 = vadd.f32 %v4122, %v4088
        %v4124 = vadd.f32 %v4123, %v4089
        %v4125 = vadd.f32 %v4124, %v4090
        %v4126 = vadd.f32 %v4125, %v4091
        %v4127 = vadd.f32 %v4126, %v4092
        %v4128 = vadd.f32 %v4127, %v4093
        %v4129 = vadd.f32 %v4128, %v4094
        %v4130 = vadd.f32 %v4129, %v4095
        %v4131 = vadd.f32 %v4130, %v4096
        %v4132 = vadd.f32 %v4131, %v4097
        %v4133 = vrot.slane %v4132, 4
        %v4134 = vadd.f32 %v4132, %v4133
        %v4135 = vrot.slane %v4134, 2
        %v4136 = vadd.f32 %v4134, %v4135
        %v4137 = vrot.slane %v4136, 1
        %v4138 = vadd.f32 %v4136, %v4137
        %v4139 = vmul.f32 %v4062, %v4062
        %v4140 = vmul.f32 %v4063, %v4063
        %v4141 = vmul.f32 %v4064, %v4064
        %v4142 = vmul.f32 %v4065, %v4065
        %v4143 = vmul.f32 %v4066, %v4066
        %v4144 = vmul.f32 %v4067, %v4067
        %v4145 = vmul.f32 %v4068, %v4068
        %v4146 = vmul.f32 %v4069, %v4069
        %v4147 = vmul.f32 %v4070, %v4070
        %v4148 = vmul.f32 %v4071, %v4071
        %v4149 = vmul.f32 %v4072, %v4072
        %v4150 = vmul.f32 %v4073, %v4073
        %v4151 = vmul.f32 %v4074, %v4074
        %v4152 = vmul.f32 %v4075, %v4075
        %v4153 = vmul.f32 %v4076, %v4076
        %v4154 = vmul.f32 %v4077, %v4077
        %v4155 = vmul.f32 %v4078, %v4078
        %v4156 = vmul.f32 %v4079, %v4079
        %v4157 = vmul.f32 %v4080, %v4080
        %v4158 = vmul.f32 %v4081, %v4081
        %v4159 = vmul.f32 %v4082, %v4082
        %v4160 = vmul.f32 %v4083, %v4083
        %v4161 = vmul.f32 %v4084, %v4084
        %v4162 = vmul.f32 %v4085, %v4085
        %v4163 = vmul.f32 %v4086, %v4086
        %v4164 = vmul.f32 %v4087, %v4087
        %v4165 = vmul.f32 %v4088, %v4088
        %v4166 = vmul.f32 %v4089, %v4089
        %v4167 = vmul.f32 %v4090, %v4090
        %v4168 = vmul.f32 %v4091, %v4091
        %v4169 = vmul.f32 %v4092, %v4092
        %v4170 = vmul.f32 %v4093, %v4093
        %v4171 = vmul.f32 %v4094, %v4094
        %v4172 = vmul.f32 %v4095, %v4095
        %v4173 = vmul.f32 %v4096, %v4096
        %v4174 = vmul.f32 %v4097, %v4097
        %v4175 = vadd.f32 %v4139, %v4140
        %v4176 = vadd.f32 %v4175, %v4141
        %v4177 = vadd.f32 %v4176, %v4142
        %v4178 = vadd.f32 %v4177, %v4143
        %v4179 = vadd.f32 %v4178, %v4144
        %v4180 = vadd.f32 %v4179, %v4145
        %v4181 = vadd.f32 %v4180, %v4146
        %v4182 = vadd.f32 %v4181, %v4147
        %v4183 = vadd.f32 %v4182, %v4148
        %v4184 = vadd.f32 %v4183, %v4149
        %v4185 = vadd.f32 %v4184, %v4150
        %v4186 = vadd.f32 %v4185, %v4151
        %v4187 = vadd.f32 %v4186, %v4152
        %v4188 = vadd.f32 %v4187, %v4153
        %v4189 = vadd.f32 %v4188, %v4154
        %v4190 = vadd.f32 %v4189, %v4155
        %v4191 = vadd.f32 %v4190, %v4156
        %v4192 = vadd.f32 %v4191, %v4157
        %v4193 = vadd.f32 %v4192, %v4158
        %v4194 = vadd.f32 %v4193, %v4159
        %v4195 = vadd.f32 %v4194, %v4160
        %v4196 = vadd.f32 %v4195, %v4161
        %v4197 = vadd.f32 %v4196, %v4162
        %v4198 = vadd.f32 %v4197, %v4163
        %v4199 = vadd.f32 %v4198, %v4164
        %v4200 = vadd.f32 %v4199, %v4165
        %v4201 = vadd.f32 %v4200, %v4166
        %v4202 = vadd.f32 %v4201, %v4167
        %v4203 = vadd.f32 %v4202, %v4168
        %v4204 = vadd.f32 %v4203, %v4169
        %v4205 = vadd.f32 %v4204, %v4170
        %v4206 = vadd.f32 %v4205, %v4171
        %v4207 = vadd.f32 %v4206, %v4172
        %v4208 = vadd.f32 %v4207, %v4173
        %v4209 = vadd.f32 %v4208, %v4174
        %v4210 = vrot.slane %v4209, 4
        %v4211 = vadd.f32 %v4209, %v4210
        %v4212 = vrot.slane %v4211, 2
        %v4213 = vadd.f32 %v4211, %v4212
        %v4214 = vrot.slane %v4213, 1
        %v4215 = vadd.f32 %v4213, %v4214
        %v4216 = vlaneseq
        %v4217 = vshrl.u32 %v4216, 7
        %vm4218 = vcmp.eq.s32.totalorder %v4217, 0
        %vm4219 = vcmp.eq.s32.totalorder %v4217, 1
        %v4220 = vsel %vm4219, %v4215, 0.0
        %v4221 = vsel %vm4218, %v4138, %v4220
        %4222 = vst [vmem:[%s283] sm:$0xff] %v4221
        %s4223 = sand.u32 %s134, 1
        %s4224 = scalar_lea.sflag [#allocation4], %s4223
        %s4225 = sand.u32 %s134, 1
        %s4226 = smul.addr %s4225, 144
        %s4227 = scalar_lea.vmem [#allocation3], %s4226
        %s4228 = sand.u32 %s160, 1
        %s4229 = scalar_lea.sflag [#allocation6], %s4228
        %s4230 = sand.u32 %s160, 1
        %s4231 = smul.addr %s4230, 8
        %s4232 = scalar_lea.vmem [#allocation5], %s4231
        // Predicated region
        $region37: #{tpu_custom_call.1} parent=35 // pred_check
          %p4233 = pneg %p144
        $region38: #{tpu_custom_call.1} parent=35 // pred_check_branch
          %4235 = sbr.rel (%p4233) target = $region40
        $region39: #{tpu_custom_call.1} parent=35 // pred_region
          %s4236 = smul.u32 36, %s23
          %s4238 = ssub.s32 2304, 2304
          %4239 = vsyncadd %s4224, %s4238
          %s4240 = smul.addr %s4236, 64
          %s4241 = scalar_lea.hbm %s4, %s4240
          %s4242 = sshll.u32 %s4227, 4
          %s4243 = int_to_ptr.vmem [resolvable:$true] %s4242
          %4248 = dma.vmem_to_hbm [thread:$0]  %s4243, 2304, %s4241, %s4224, 64, 64, 4
        $region40: #{tpu_custom_call.1} parent=35 // pred_fallthru
          _
        // Predicated region
        $region41: #{tpu_custom_call.1} parent=35 // pred_check
          %p4249 = pneg %p170
        $region42: #{tpu_custom_call.1} parent=35 // pred_check_branch
          %4251 = sbr.rel (%p4249) target = $region44
        $region43: #{tpu_custom_call.1} parent=35 // pred_region
          %s4253 = ssub.s32 128, 128
          %4254 = vsyncadd %s4229, %s4253
          %s4255 = smul.addr %s23, 128
          %s4256 = scalar_lea.hbm %s5, %s4255
          %s4258 = sshll.u32 %s4232, 4
          %s4259 = int_to_ptr.vmem [resolvable:$true] %s4258
          %4261 = dma.vmem_to_hbm [thread:$0]  %s4259, 128, %s4256, %s4229
        $region44: #{tpu_custom_call.1} parent=35 // pred_fallthru
          _
      $region36: #{tpu_custom_call.1} parent=5 // pred_fallthru
        _
      %p4262 = scmp.le.s32.totalorder 2, %s18
      // Predicated region
      $region45: #{tpu_custom_call.1} parent=5 // pred_check
        %p4263 = pneg %p4262
      $region46: #{tpu_custom_call.1} parent=5 // pred_check_branch
        %4265 = sbr.rel (%p4263) target = $region48
      $region47: #{tpu_custom_call.1} parent=5 // pred_region
        %s4266 = ssub.s32 %s18, 2
        // Predicated region
        $region49: #{tpu_custom_call.1} parent=47 // pred_check
          %p4267 = pneg %p150
        $region50: #{tpu_custom_call.1} parent=47 // pred_check_branch
          %4269 = sbr.rel (%p4267) target = $region52
        $region51: #{tpu_custom_call.1} parent=47 // pred_region
          %s4270 = sand.u32 %s135, 1
          %s4271 = scalar_lea.sflag [#allocation4], %s4270
          %s4272 = sand.u32 %s135, 1
          %s4273 = smul.addr %s4272, 144
          %s4274 = scalar_lea.vmem [#allocation3], %s4273
          %4275 = dma.done %s4271, 2304
        $region52: #{tpu_custom_call.1} parent=47 // pred_fallthru
          _
        // Predicated region
        $region53: #{tpu_custom_call.1} parent=47 // pred_check
          %p4276 = pneg %p176
        $region54: #{tpu_custom_call.1} parent=47 // pred_check_branch
          %4278 = sbr.rel (%p4276) target = $region56
        $region55: #{tpu_custom_call.1} parent=47 // pred_region
          %s4279 = sand.u32 %s161, 1
          %s4280 = scalar_lea.sflag [#allocation6], %s4279
          %s4281 = sand.u32 %s161, 1
          %s4282 = smul.addr %s4281, 8
          %s4283 = scalar_lea.vmem [#allocation5], %s4282
          %4284 = dma.done %s4280, 128
        $region56: #{tpu_custom_call.1} parent=47 // pred_fallthru
          _
      $region48: #{tpu_custom_call.1} parent=5 // pred_fallthru
        _
    $region6: #{tpu_custom_call.1} parent=1 // loop_footer
      %s22 = sadd.s32 1, %s18
    $region7: #{tpu_custom_call.1} parent=1 // loop_footer_branch
      %17 = sbr.rel target = $region3
    $region8: #{tpu_custom_call.1} parent=1 // loop_exit
      _
    %4285 = vsyncpa [#allocation4], 1
    %s4286 = scalar_lea.sflag [#allocation4], 1
    %4287 = vsyncpa %s4286, 1
    %4288 = vsyncpa [#allocation6], 1
    %s4289 = scalar_lea.sflag [#allocation6], 1
    %4290 = vsyncpa %s4289, 1

</llo_original>
